<compile_context>
chip_gen: v6e
topology: v6e:2x2x1
jax: 0.10.0
libtpu: 0.0.40
codegen_flags: <defaults>
</compile_context>

<pallas_src>
import jax
import jax.numpy as jnp
from jax import lax
from jax.experimental import pallas as pl
from jax.experimental.pallas import tpu as pltpu


def _round_up(x, m):
    return (x + m - 1) // m * m


# ---------------------------------------------------------------------------
# Kernels
# ---------------------------------------------------------------------------
def _conv_trunk_kernel(x_ref, w1e_ref, w1o_ref, b1_ref, w2e_ref, w2o_ref,
                       b2_ref, out_ref, cm1_ref, p1_ref, cm2_ref):
    """Per-image fused conv1+ReLU+pool -> conv2+ReLU+pool.

    x_ref:    [32, 96]   image rows, lanes = (w, c) with c fastest (NHWC).
    w1{e,o}:  [5, 96, 84] banded conv1 weights (even/odd output columns);
              output lanes = o*14 + x//2.
    w2{e,o}:  [5, 84, 80] banded conv2 weights; input lanes = c*14 + w,
              output lanes = o*5 + x//2.
    out_ref:  [5, 80]    pooled conv2 activation, lanes = c*5 + w.
    """
    # ---- conv1 (3->6, k=5) + bias + ReLU + 2x2 max-pool ----
    acc_e = jnp.zeros((28, 84), jnp.float32)
    acc_o = jnp.zeros((28, 84), jnp.float32)
    for i in range(5):
        rows = x_ref[i:i + 28, :]                                   # [28, 96]
        acc_e = acc_e + jnp.dot(rows, w1e_ref[i],
                                preferred_element_type=jnp.float32)
        acc_o = acc_o + jnp.dot(rows, w1o_ref[i],
                                preferred_element_type=jnp.float32)
    b1 = b1_ref[...]
    # width pooling (even vs. odd output columns), ReLU folded in
    cm1_ref[...] = jnp.maximum(jnp.maximum(acc_e + b1, acc_o + b1), 0.0)
    # height pooling via stride-2 sublane reads
    p1_ref[...] = jnp.maximum(cm1_ref[pl.ds(0, 14, stride=2), :],
                              cm1_ref[pl.ds(1, 14, stride=2), :])   # [14, 84]

    # ---- conv2 (6->16, k=5) + bias + ReLU + 2x2 max-pool ----
    acc_e = jnp.zeros((10, 80), jnp.float32)
    acc_o = jnp.zeros((10, 80), jnp.float32)
    for i in range(5):
        rows = p1_ref[i:i + 10, :]                                  # [10, 84]
        acc_e = acc_e + jnp.dot(rows, w2e_ref[i],
                                preferred_element_type=jnp.float32)
        acc_o = acc_o + jnp.dot(rows, w2o_ref[i],
                                preferred_element_type=jnp.float32)
    b2 = b2_ref[...]
    cm2_ref[...] = jnp.maximum(jnp.maximum(acc_e + b2, acc_o + b2), 0.0)
    out_ref[...] = jnp.maximum(cm2_ref[pl.ds(0, 5, stride=2), :],
                               cm2_ref[pl.ds(1, 5, stride=2), :])   # [5, 80]


def _fc_head_kernel(x_ref, w1_ref, b1_ref, w2_ref, b2_ref, w3_ref, b3_ref,
                    out_ref):
    """Fused fc1+ReLU -> fc2+ReLU -> fc3 on one tile of batch rows."""
    h = jnp.dot(x_ref[...], w1_ref[...], preferred_element_type=jnp.float32)
    h = jnp.maximum(h + b1_ref[...], 0.0)
    h = jnp.dot(h, w2_ref[...], preferred_element_type=jnp.float32)
    h = jnp.maximum(h + b2_ref[...], 0.0)
    o = jnp.dot(h, w3_ref[...], preferred_element_type=jnp.float32)
    out_ref[...] = o + b3_ref[...]


# ---------------------------------------------------------------------------
# pallas_call wrappers
# ---------------------------------------------------------------------------
def conv_trunk(x_rows, pp):
    """x_rows: [B, 32, 96] f32 -> [B, 5, 80] pooled conv2 activation."""
    B = x_rows.shape[0]
    return pl.pallas_call(
        _conv_trunk_kernel,
        grid=(B,),
        out_shape=jax.ShapeDtypeStruct((B, 5, 80), jnp.float32),
        in_specs=[
            pl.BlockSpec((None, 32, 96), lambda b: (b, 0, 0)),
            pl.BlockSpec((5, 96, 84), lambda b: (0, 0, 0)),
            pl.BlockSpec((5, 96, 84), lambda b: (0, 0, 0)),
            pl.BlockSpec((1, 84), lambda b: (0, 0)),
            pl.BlockSpec((5, 84, 80), lambda b: (0, 0, 0)),
            pl.BlockSpec((5, 84, 80), lambda b: (0, 0, 0)),
            pl.BlockSpec((1, 80), lambda b: (0, 0)),
        ],
        out_specs=pl.BlockSpec((None, 5, 80), lambda b: (b, 0, 0)),
        scratch_shapes=[
            pltpu.VMEM((28, 84), jnp.float32),   # width-pooled conv1 rows
            pltpu.VMEM((14, 84), jnp.float32),   # pooled conv1 activation
            pltpu.VMEM((10, 80), jnp.float32),   # width-pooled conv2 rows
        ],
        compiler_params=pltpu.CompilerParams(
            dimension_semantics=("parallel",),
            vmem_limit_bytes=32 * 1024 * 1024,
        ),
    )(x_rows, pp["conv1_we"], pp["conv1_wo"], pp["conv1_brow"],
      pp["conv2_we"], pp["conv2_wo"], pp["conv2_brow"])


def fc_head(feats, pp):
    """feats: [B, 400] f32 -> logits [B, 10]."""
    B = feats.shape[0]
    tm = min(256, _round_up(B, 8))
    mp = _round_up(B, tm)
    xp = feats if mp == B else jnp.pad(feats, ((0, mp - B), (0, 0)))
    out = pl.pallas_call(
        _fc_head_kernel,
        grid=(mp // tm,),
        out_shape=jax.ShapeDtypeStruct((mp, 10), jnp.float32),
        in_specs=[
            pl.BlockSpec((tm, 400), lambda m: (m, 0)),
            pl.BlockSpec((400, 120), lambda m: (0, 0)),
            pl.BlockSpec((1, 120), lambda m: (0, 0)),
            pl.BlockSpec((120, 84), lambda m: (0, 0)),
            pl.BlockSpec((1, 84), lambda m: (0, 0)),
            pl.BlockSpec((84, 10), lambda m: (0, 0)),
            pl.BlockSpec((1, 10), lambda m: (0, 0)),
        ],
        out_specs=pl.BlockSpec((tm, 10), lambda m: (m, 0)),
        compiler_params=pltpu.CompilerParams(
            dimension_semantics=("parallel",),
            vmem_limit_bytes=32 * 1024 * 1024,
        ),
    )(xp, pp["fc1_w"], pp["fc1_b"], pp["fc2_w"], pp["fc2_b"],
      pp["fc3_w"], pp["fc3_b"])
    return out[:B]


# ---------------------------------------------------------------------------
# One-time parameter preparation (hoisted out of the forward pass)
# ---------------------------------------------------------------------------
def _conv_banded_weights(w, in_w, lane_order):
    """Banded per-kernel-row matmul weights for a 'valid' 5x5 conv whose output
    columns are split by parity (so the 2x2 width-pool fuses into the matmul).

    w: [O, C, KH, KW] torch-layout conv weight.
    Input rows use lane index  k = w_pos*C + c  ("wc", NHWC-flattened) or
    k = c*in_w + w_pos ("cw", channel-major).
    Returns (wb_even, wb_odd): [KH, in_w*C, O*(out_w//2)], output lane =
    o*(out_w//2) + x//2, computing the output columns x of that parity.
    """
    O, C, KH, KW = w.shape
    out_w = in_w - KW + 1
    half = out_w // 2
    j_idx = jnp.arange(KW)[:, None, None]
    w_idx = jnp.arange(in_w)[None, :, None]
    x_idx = jnp.arange(out_w)[None, None, :]
    sel = (w_idx == x_idx + j_idx).astype(w.dtype)        # [KW, in_w, out_w]
    if lane_order == "wc":
        tmp = jnp.einsum("ocij,jwx->iwcox", w, sel)       # [KH, in_w, C, O, out_w]
    else:
        tmp = jnp.einsum("ocij,jwx->icwox", w, sel)       # [KH, C, in_w, O, out_w]
    tmp = tmp.reshape(KH, in_w * C, O, half, 2)           # x -> (x//2, x%2)
    wb_even = tmp[..., 0].reshape(KH, in_w * C, O * half)
    wb_odd = tmp[..., 1].reshape(KH, in_w * C, O * half)
    return wb_even, wb_odd


def init_params():
    key = jax.random.PRNGKey(0)
    ks = jax.random.split(key, 10)
    s = 0.1
    return {
        "conv1_w": s * jax.random.normal(ks[0], (6, 3, 5, 5), jnp.float32),
        "conv1_b": s * jax.random.normal(ks[1], (6,), jnp.float32),
        "conv2_w": s * jax.random.normal(ks[2], (16, 6, 5, 5), jnp.float32),
        "conv2_b": s * jax.random.normal(ks[3], (16,), jnp.float32),
        "fc1_w": s * jax.random.normal(ks[4], (120, 400), jnp.float32),
        "fc1_b": s * jax.random.normal(ks[5], (120,), jnp.float32),
        "fc2_w": s * jax.random.normal(ks[6], (84, 120), jnp.float32),
        "fc2_b": s * jax.random.normal(ks[7], (84,), jnp.float32),
        "fc3_w": s * jax.random.normal(ks[8], (10, 84), jnp.float32),
        "fc3_b": s * jax.random.normal(ks[9], (10,), jnp.float32),
    }


def prepare_params(params):
    """Repack torch-layout params into kernel-ready layouts (done once)."""
    w1e, w1o = _conv_banded_weights(params["conv1_w"], in_w=32, lane_order="wc")
    w2e, w2o = _conv_banded_weights(params["conv2_w"], in_w=14, lane_order="cw")
    # fc1 columns permuted from torch flatten order (c,h,w) to the kernel's
    # flatten order (h,c,w), so the activation path needs no transpose.
    fc1 = (params["fc1_w"].reshape(120, 16, 5, 5)
           .transpose(0, 2, 1, 3).reshape(120, 400).T)
    return {
        "conv1_we": w1e, "conv1_wo": w1o,
        "conv1_brow": jnp.repeat(params["conv1_b"], 14)[None, :],   # [1, 84]
        "conv2_we": w2e, "conv2_wo": w2o,
        "conv2_brow": jnp.repeat(params["conv2_b"], 5)[None, :],    # [1, 80]
        "fc1_w": fc1, "fc1_b": params["fc1_b"][None, :],
        "fc2_w": params["fc2_w"].T, "fc2_b": params["fc2_b"][None, :],
        "fc3_w": params["fc3_w"].T, "fc3_b": params["fc3_b"][None, :],
    }


# ---------------------------------------------------------------------------
# Forward pass
# ---------------------------------------------------------------------------
def net_forward(x_nchw, pp):
    B, C, H, W = x_nchw.shape
    assert (C, H, W) == (3, 32, 32), "Net expects 3x32x32 inputs (stride-1 valid convs)"
    # NCHW -> per-image rows [32, 96] with lanes (w, c), c fastest.
    x_rows = jnp.transpose(x_nchw, (0, 2, 3, 1)).reshape(B, 32, 96)
    p2 = conv_trunk(x_rows, pp)          # [B, 5, 80], lanes = c*5 + w
    feats = p2.reshape(B, 400)           # flatten order (h, c, w); fc1 permuted to match
    return fc_head(feats, pp)            # [B, 10]


# Pure-XLA reference of the PyTorch module (for a correctness check only).
def _reference_forward(x, p):
    dn = ("NCHW", "OIHW", "NCHW")
    hp = lax.Precision.HIGHEST
    y = lax.conv_general_dilated(x, p["conv1_w"], (1, 1), "VALID",
                                 dimension_numbers=dn, precision=hp)
    y = jnp.maximum(y + p["conv1_b"][None, :, None, None], 0.0)
    b, c, h, w = y.shape
    y = y.reshape(b, c, h // 2, 2, w // 2, 2).max(axis=(3, 5))
    y = lax.conv_general_dilated(y, p["conv2_w"], (1, 1), "VALID",
                                 dimension_numbers=dn, precision=hp)
    y = jnp.maximum(y + p["conv2_b"][None, :, None, None], 0.0)
    b, c, h, w = y.shape
    y = y.reshape(b, c, h // 2, 2, w // 2, 2).max(axis=(3, 5))
    y = y.reshape(b, -1)
    y = jnp.maximum(jnp.dot(y, p["fc1_w"].T, precision=hp) + p["fc1_b"], 0.0)
    y = jnp.maximum(jnp.dot(y, p["fc2_w"].T, precision=hp) + p["fc2_b"], 0.0)
    return jnp.dot(y, p["fc3_w"].T, precision=hp) + p["fc3_b"]


if __name__ == "__main__":
    params = init_params()
    prepared = prepare_params(params)
    x = jax.random.normal(jax.random.PRNGKey(0), (2, 3, 32, 32), jnp.float32)

    out = jax.jit(net_forward)(x, prepared)
    out = jax.block_until_ready(out)
    assert out.shape == (2, 10) and out.dtype == jnp.float32

    ref = _reference_forward(x, params)
    rel = jnp.sqrt(jnp.mean((out - ref) ** 2) / (jnp.mean(ref ** 2) + 1e-12))
    assert float(rel) < 3e-2, f"mismatch vs reference: rel RMS err {float(rel)}"
    print("KERNEL_OK")
</pallas_src>

<mosaic_0001>
module attributes {stable_mosaic.version = 11 : i64} {
  func.func @_conv_trunk_kernel(%arg0: i32, %arg1: memref<1x32x96xf32, #tpu.memory_space<vmem>>, %arg2: memref<5x96x84xf32, #tpu.memory_space<vmem>>, %arg3: memref<5x96x84xf32, #tpu.memory_space<vmem>>, %arg4: memref<1x84xf32, #tpu.memory_space<vmem>>, %arg5: memref<5x84x80xf32, #tpu.memory_space<vmem>>, %arg6: memref<5x84x80xf32, #tpu.memory_space<vmem>>, %arg7: memref<1x80xf32, #tpu.memory_space<vmem>>, %arg8: memref<1x5x80xf32, #tpu.memory_space<vmem>>, %arg9: memref<28x84xf32, #tpu.memory_space<vmem>>, %arg10: memref<14x84xf32, #tpu.memory_space<vmem>>, %arg11: memref<10x80xf32, #tpu.memory_space<vmem>>) attributes {dimension_semantics = [#tpu.dimension_semantics<parallel>], iteration_bounds = array<i64: 2>, scalar_prefetch = 0 : i64, scratch_operands = 3 : i64, tpu.core_type = #tpu.core_type<tc>, window_params = [{transform_indices = @transform_0, window_bounds = array<i64: 1, 32, 96>}, {pipeline_mode = #tpu.pipeline_mode<synchronous>, transform_indices = @transform_1, window_bounds = array<i64: 5, 96, 84>}, {pipeline_mode = #tpu.pipeline_mode<synchronous>, transform_indices = @transform_2, window_bounds = array<i64: 5, 96, 84>}, {pipeline_mode = #tpu.pipeline_mode<synchronous>, transform_indices = @transform_3, window_bounds = array<i64: 1, 84>}, {pipeline_mode = #tpu.pipeline_mode<synchronous>, transform_indices = @transform_4, window_bounds = array<i64: 5, 84, 80>}, {pipeline_mode = #tpu.pipeline_mode<synchronous>, transform_indices = @transform_5, window_bounds = array<i64: 5, 84, 80>}, {pipeline_mode = #tpu.pipeline_mode<synchronous>, transform_indices = @transform_6, window_bounds = array<i64: 1, 80>}, {transform_indices = @transform_7, window_bounds = array<i64: 1, 5, 80>}]} {
    %cst = arith.constant 0.000000e+00 : f32
    %0 = vector.broadcast %cst : f32 to vector<28x84xf32>
    %cst_0 = arith.constant 0.000000e+00 : f32
    %1 = vector.broadcast %cst_0 : f32 to vector<28x84xf32>
    %c0 = arith.constant 0 : index
    %c0_1 = arith.constant 0 : index
    %c0_2 = arith.constant 0 : index
    %2 = vector.load %arg1[%c0, %c0_1, %c0_2] : memref<1x32x96xf32, #tpu.memory_space<vmem>>, vector<1x28x96xf32>
    %3 = vector.shape_cast %2 : vector<1x28x96xf32> to vector<28x96xf32>
    %c0_3 = arith.constant 0 : index
    %c0_4 = arith.constant 0 : index
    %c0_5 = arith.constant 0 : index
    %4 = vector.load %arg2[%c0_3, %c0_4, %c0_5] : memref<5x96x84xf32, #tpu.memory_space<vmem>>, vector<1x96x84xf32>
    %5 = vector.shape_cast %4 : vector<1x96x84xf32> to vector<96x84xf32>
    %cst_6 = arith.constant dense<0.000000e+00> : vector<28x84xf32>
    %6 = tpu.matmul %3, %5, %cst_6 {dimension_numbers = #tpu.dot_dimension_numbers<[1], [0], [0], [1], [0, 0, 1, 1], [], []>} : vector<28x96xf32>, vector<96x84xf32>, vector<28x84xf32> -> vector<28x84xf32>
    %7 = arith.addf %0, %6 : vector<28x84xf32>
    %c0_7 = arith.constant 0 : index
    %c0_8 = arith.constant 0 : index
    %c0_9 = arith.constant 0 : index
    %8 = vector.load %arg3[%c0_7, %c0_8, %c0_9] : memref<5x96x84xf32, #tpu.memory_space<vmem>>, vector<1x96x84xf32>
    %9 = vector.shape_cast %8 : vector<1x96x84xf32> to vector<96x84xf32>
    %cst_10 = arith.constant dense<0.000000e+00> : vector<28x84xf32>
    %10 = tpu.matmul %3, %9, %cst_10 {dimension_numbers = #tpu.dot_dimension_numbers<[1], [0], [0], [1], [0, 0, 1, 1], [], []>} : vector<28x96xf32>, vector<96x84xf32>, vector<28x84xf32> -> vector<28x84xf32>
    %11 = arith.addf %1, %10 : vector<28x84xf32>
    %c0_11 = arith.constant 0 : index
    %c1 = arith.constant 1 : index
    %c0_12 = arith.constant 0 : index
    %12 = vector.load %arg1[%c0_11, %c1, %c0_12] : memref<1x32x96xf32, #tpu.memory_space<vmem>>, vector<1x28x96xf32>
    %13 = vector.shape_cast %12 : vector<1x28x96xf32> to vector<28x96xf32>
    %c1_13 = arith.constant 1 : index
    %c0_14 = arith.constant 0 : index
    %c0_15 = arith.constant 0 : index
    %14 = vector.load %arg2[%c1_13, %c0_14, %c0_15] : memref<5x96x84xf32, #tpu.memory_space<vmem>>, vector<1x96x84xf32>
    %15 = vector.shape_cast %14 : vector<1x96x84xf32> to vector<96x84xf32>
    %cst_16 = arith.constant dense<0.000000e+00> : vector<28x84xf32>
    %16 = tpu.matmul %13, %15, %cst_16 {dimension_numbers = #tpu.dot_dimension_numbers<[1], [0], [0], [1], [0, 0, 1, 1], [], []>} : vector<28x96xf32>, vector<96x84xf32>, vector<28x84xf32> -> vector<28x84xf32>
    %17 = arith.addf %7, %16 : vector<28x84xf32>
    %c1_17 = arith.constant 1 : index
    %c0_18 = arith.constant 0 : index
    %c0_19 = arith.constant 0 : index
    %18 = vector.load %arg3[%c1_17, %c0_18, %c0_19] : memref<5x96x84xf32, #tpu.memory_space<vmem>>, vector<1x96x84xf32>
    %19 = vector.shape_cast %18 : vector<1x96x84xf32> to vector<96x84xf32>
    %cst_20 = arith.constant dense<0.000000e+00> : vector<28x84xf32>
    %20 = tpu.matmul %13, %19, %cst_20 {dimension_numbers = #tpu.dot_dimension_numbers<[1], [0], [0], [1], [0, 0, 1, 1], [], []>} : vector<28x96xf32>, vector<96x84xf32>, vector<28x84xf32> -> vector<28x84xf32>
    %21 = arith.addf %11, %20 : vector<28x84xf32>
    %c0_21 = arith.constant 0 : index
    %c2 = arith.constant 2 : index
    %c0_22 = arith.constant 0 : index
    %22 = vector.load %arg1[%c0_21, %c2, %c0_22] : memref<1x32x96xf32, #tpu.memory_space<vmem>>, vector<1x28x96xf32>
    %23 = vector.shape_cast %22 : vector<1x28x96xf32> to vector<28x96xf32>
    %c2_23 = arith.constant 2 : index
    %c0_24 = arith.constant 0 : index
    %c0_25 = arith.constant 0 : index
    %24 = vector.load %arg2[%c2_23, %c0_24, %c0_25] : memref<5x96x84xf32, #tpu.memory_space<vmem>>, vector<1x96x84xf32>
    %25 = vector.shape_cast %24 : vector<1x96x84xf32> to vector<96x84xf32>
    %cst_26 = arith.constant dense<0.000000e+00> : vector<28x84xf32>
    %26 = tpu.matmul %23, %25, %cst_26 {dimension_numbers = #tpu.dot_dimension_numbers<[1], [0], [0], [1], [0, 0, 1, 1], [], []>} : vector<28x96xf32>, vector<96x84xf32>, vector<28x84xf32> -> vector<28x84xf32>
    %27 = arith.addf %17, %26 : vector<28x84xf32>
    %c2_27 = arith.constant 2 : index
    %c0_28 = arith.constant 0 : index
    %c0_29 = arith.constant 0 : index
    %28 = vector.load %arg3[%c2_27, %c0_28, %c0_29] : memref<5x96x84xf32, #tpu.memory_space<vmem>>, vector<1x96x84xf32>
    %29 = vector.shape_cast %28 : vector<1x96x84xf32> to vector<96x84xf32>
    %cst_30 = arith.constant dense<0.000000e+00> : vector<28x84xf32>
    %30 = tpu.matmul %23, %29, %cst_30 {dimension_numbers = #tpu.dot_dimension_numbers<[1], [0], [0], [1], [0, 0, 1, 1], [], []>} : vector<28x96xf32>, vector<96x84xf32>, vector<28x84xf32> -> vector<28x84xf32>
    %31 = arith.addf %21, %30 : vector<28x84xf32>
    %c0_31 = arith.constant 0 : index
    %c3 = arith.constant 3 : index
    %c0_32 = arith.constant 0 : index
    %32 = vector.load %arg1[%c0_31, %c3, %c0_32] : memref<1x32x96xf32, #tpu.memory_space<vmem>>, vector<1x28x96xf32>
    %33 = vector.shape_cast %32 : vector<1x28x96xf32> to vector<28x96xf32>
    %c3_33 = arith.constant 3 : index
    %c0_34 = arith.constant 0 : index
    %c0_35 = arith.constant 0 : index
    %34 = vector.load %arg2[%c3_33, %c0_34, %c0_35] : memref<5x96x84xf32, #tpu.memory_space<vmem>>, vector<1x96x84xf32>
    %35 = vector.shape_cast %34 : vector<1x96x84xf32> to vector<96x84xf32>
    %cst_36 = arith.constant dense<0.000000e+00> : vector<28x84xf32>
    %36 = tpu.matmul %33, %35, %cst_36 {dimension_numbers = #tpu.dot_dimension_numbers<[1], [0], [0], [1], [0, 0, 1, 1], [], []>} : vector<28x96xf32>, vector<96x84xf32>, vector<28x84xf32> -> vector<28x84xf32>
    %37 = arith.addf %27, %36 : vector<28x84xf32>
    %c3_37 = arith.constant 3 : index
    %c0_38 = arith.constant 0 : index
    %c0_39 = arith.constant 0 : index
    %38 = vector.load %arg3[%c3_37, %c0_38, %c0_39] : memref<5x96x84xf32, #tpu.memory_space<vmem>>, vector<1x96x84xf32>
    %39 = vector.shape_cast %38 : vector<1x96x84xf32> to vector<96x84xf32>
    %cst_40 = arith.constant dense<0.000000e+00> : vector<28x84xf32>
    %40 = tpu.matmul %33, %39, %cst_40 {dimension_numbers = #tpu.dot_dimension_numbers<[1], [0], [0], [1], [0, 0, 1, 1], [], []>} : vector<28x96xf32>, vector<96x84xf32>, vector<28x84xf32> -> vector<28x84xf32>
    %41 = arith.addf %31, %40 : vector<28x84xf32>
    %c0_41 = arith.constant 0 : index
    %c4 = arith.constant 4 : index
    %c0_42 = arith.constant 0 : index
    %42 = vector.load %arg1[%c0_41, %c4, %c0_42] : memref<1x32x96xf32, #tpu.memory_space<vmem>>, vector<1x28x96xf32>
    %43 = vector.shape_cast %42 : vector<1x28x96xf32> to vector<28x96xf32>
    %c4_43 = arith.constant 4 : index
    %c0_44 = arith.constant 0 : index
    %c0_45 = arith.constant 0 : index
    %44 = vector.load %arg2[%c4_43, %c0_44, %c0_45] : memref<5x96x84xf32, #tpu.memory_space<vmem>>, vector<1x96x84xf32>
    %45 = vector.shape_cast %44 : vector<1x96x84xf32> to vector<96x84xf32>
    %cst_46 = arith.constant dense<0.000000e+00> : vector<28x84xf32>
    %46 = tpu.matmul %43, %45, %cst_46 {dimension_numbers = #tpu.dot_dimension_numbers<[1], [0], [0], [1], [0, 0, 1, 1], [], []>} : vector<28x96xf32>, vector<96x84xf32>, vector<28x84xf32> -> vector<28x84xf32>
    %47 = arith.addf %37, %46 : vector<28x84xf32>
    %c4_47 = arith.constant 4 : index
    %c0_48 = arith.constant 0 : index
    %c0_49 = arith.constant 0 : index
    %48 = vector.load %arg3[%c4_47, %c0_48, %c0_49] : memref<5x96x84xf32, #tpu.memory_space<vmem>>, vector<1x96x84xf32>
    %49 = vector.shape_cast %48 : vector<1x96x84xf32> to vector<96x84xf32>
    %cst_50 = arith.constant dense<0.000000e+00> : vector<28x84xf32>
    %50 = tpu.matmul %43, %49, %cst_50 {dimension_numbers = #tpu.dot_dimension_numbers<[1], [0], [0], [1], [0, 0, 1, 1], [], []>} : vector<28x96xf32>, vector<96x84xf32>, vector<28x84xf32> -> vector<28x84xf32>
    %51 = arith.addf %41, %50 : vector<28x84xf32>
    %c0_51 = arith.constant 0 : index
    %c0_52 = arith.constant 0 : index
    %52 = vector.load %arg4[%c0_51, %c0_52] : memref<1x84xf32, #tpu.memory_space<vmem>>, vector<1x84xf32>
    %53 = vector.broadcast %52 : vector<1x84xf32> to vector<28x84xf32>
    %54 = arith.addf %47, %53 : vector<28x84xf32>
    %55 = vector.broadcast %52 : vector<1x84xf32> to vector<28x84xf32>
    %56 = arith.addf %51, %55 : vector<28x84xf32>
    %57 = arith.maximumf %54, %56 : vector<28x84xf32>
    %cst_53 = arith.constant 0.000000e+00 : f32
    %58 = vector.broadcast %cst_53 : f32 to vector<28x84xf32>
    %59 = arith.maximumf %57, %58 : vector<28x84xf32>
    %c0_54 = arith.constant 0 : index
    %c0_55 = arith.constant 0 : index
    %60 = vector.load %arg9[%c0_54, %c0_55] : memref<28x84xf32, #tpu.memory_space<vmem>>, vector<28x84xf32>
    tpu.vector_store %arg9[%c0_54, %c0_55], %59 {strides = array<i32>} : memref<28x84xf32, #tpu.memory_space<vmem>>, vector<28x84xf32>,
    %c0_56 = arith.constant 0 : index
    %c0_57 = arith.constant 0 : index
    %61 = tpu.strided_load %arg9[%c0_56, %c0_57] {strides = array<i32: 2, 1>} : memref<28x84xf32, #tpu.memory_space<vmem>>, vector<14x84xf32>
    %c1_58 = arith.constant 1 : index
    %c0_59 = arith.constant 0 : index
    %62 = tpu.strided_load %arg9[%c1_58, %c0_59] {strides = array<i32: 2, 1>} : memref<28x84xf32, #tpu.memory_space<vmem>>, vector<14x84xf32>
    %63 = arith.maximumf %61, %62 : vector<14x84xf32>
    %c0_60 = arith.constant 0 : index
    %c0_61 = arith.constant 0 : index
    %64 = vector.load %arg10[%c0_60, %c0_61] : memref<14x84xf32, #tpu.memory_space<vmem>>, vector<14x84xf32>
    tpu.vector_store %arg10[%c0_60, %c0_61], %63 {strides = array<i32>} : memref<14x84xf32, #tpu.memory_space<vmem>>, vector<14x84xf32>,
    %cst_62 = arith.constant 0.000000e+00 : f32
    %65 = vector.broadcast %cst_62 : f32 to vector<10x80xf32>
    %cst_63 = arith.constant 0.000000e+00 : f32
    %66 = vector.broadcast %cst_63 : f32 to vector<10x80xf32>
    %c0_64 = arith.constant 0 : index
    %c0_65 = arith.constant 0 : index
    %67 = vector.load %arg10[%c0_64, %c0_65] : memref<14x84xf32, #tpu.memory_space<vmem>>, vector<10x84xf32>
    %c0_66 = arith.constant 0 : index
    %c0_67 = arith.constant 0 : index
    %c0_68 = arith.constant 0 : index
    %68 = vector.load %arg5[%c0_66, %c0_67, %c0_68] : memref<5x84x80xf32, #tpu.memory_space<vmem>>, vector<1x84x80xf32>
    %69 = vector.shape_cast %68 : vector<1x84x80xf32> to vector<84x80xf32>
    %cst_69 = arith.constant dense<0.000000e+00> : vector<10x80xf32>
    %70 = tpu.matmul %67, %69, %cst_69 {dimension_numbers = #tpu.dot_dimension_numbers<[1], [0], [0], [1], [0, 0, 1, 1], [], []>} : vector<10x84xf32>, vector<84x80xf32>, vector<10x80xf32> -> vector<10x80xf32>
    %71 = arith.addf %65, %70 : vector<10x80xf32>
    %c0_70 = arith.constant 0 : index
    %c0_71 = arith.constant 0 : index
    %c0_72 = arith.constant 0 : index
    %72 = vector.load %arg6[%c0_70, %c0_71, %c0_72] : memref<5x84x80xf32, #tpu.memory_space<vmem>>, vector<1x84x80xf32>
    %73 = vector.shape_cast %72 : vector<1x84x80xf32> to vector<84x80xf32>
    %cst_73 = arith.constant dense<0.000000e+00> : vector<10x80xf32>
    %74 = tpu.matmul %67, %73, %cst_73 {dimension_numbers = #tpu.dot_dimension_numbers<[1], [0], [0], [1], [0, 0, 1, 1], [], []>} : vector<10x84xf32>, vector<84x80xf32>, vector<10x80xf32> -> vector<10x80xf32>
    %75 = arith.addf %66, %74 : vector<10x80xf32>
    %c1_74 = arith.constant 1 : index
    %c0_75 = arith.constant 0 : index
    %76 = vector.load %arg10[%c1_74, %c0_75] : memref<14x84xf32, #tpu.memory_space<vmem>>, vector<10x84xf32>
    %c1_76 = arith.constant 1 : index
    %c0_77 = arith.constant 0 : index
    %c0_78 = arith.constant 0 : index
    %77 = vector.load %arg5[%c1_76, %c0_77, %c0_78] : memref<5x84x80xf32, #tpu.memory_space<vmem>>, vector<1x84x80xf32>
    %78 = vector.shape_cast %77 : vector<1x84x80xf32> to vector<84x80xf32>
    %cst_79 = arith.constant dense<0.000000e+00> : vector<10x80xf32>
    %79 = tpu.matmul %76, %78, %cst_79 {dimension_numbers = #tpu.dot_dimension_numbers<[1], [0], [0], [1], [0, 0, 1, 1], [], []>} : vector<10x84xf32>, vector<84x80xf32>, vector<10x80xf32> -> vector<10x80xf32>
    %80 = arith.addf %71, %79 : vector<10x80xf32>
    %c1_80 = arith.constant 1 : index
    %c0_81 = arith.constant 0 : index
    %c0_82 = arith.constant 0 : index
    %81 = vector.load %arg6[%c1_80, %c0_81, %c0_82] : memref<5x84x80xf32, #tpu.memory_space<vmem>>, vector<1x84x80xf32>
    %82 = vector.shape_cast %81 : vector<1x84x80xf32> to vector<84x80xf32>
    %cst_83 = arith.constant dense<0.000000e+00> : vector<10x80xf32>
    %83 = tpu.matmul %76, %82, %cst_83 {dimension_numbers = #tpu.dot_dimension_numbers<[1], [0], [0], [1], [0, 0, 1, 1], [], []>} : vector<10x84xf32>, vector<84x80xf32>, vector<10x80xf32> -> vector<10x80xf32>
    %84 = arith.addf %75, %83 : vector<10x80xf32>
    %c2_84 = arith.constant 2 : index
    %c0_85 = arith.constant 0 : index
    %85 = vector.load %arg10[%c2_84, %c0_85] : memref<14x84xf32, #tpu.memory_space<vmem>>, vector<10x84xf32>
    %c2_86 = arith.constant 2 : index
    %c0_87 = arith.constant 0 : index
    %c0_88 = arith.constant 0 : index
    %86 = vector.load %arg5[%c2_86, %c0_87, %c0_88] : memref<5x84x80xf32, #tpu.memory_space<vmem>>, vector<1x84x80xf32>
    %87 = vector.shape_cast %86 : vector<1x84x80xf32> to vector<84x80xf32>
    %cst_89 = arith.constant dense<0.000000e+00> : vector<10x80xf32>
    %88 = tpu.matmul %85, %87, %cst_89 {dimension_numbers = #tpu.dot_dimension_numbers<[1], [0], [0], [1], [0, 0, 1, 1], [], []>} : vector<10x84xf32>, vector<84x80xf32>, vector<10x80xf32> -> vector<10x80xf32>
    %89 = arith.addf %80, %88 : vector<10x80xf32>
    %c2_90 = arith.constant 2 : index
    %c0_91 = arith.constant 0 : index
    %c0_92 = arith.constant 0 : index
    %90 = vector.load %arg6[%c2_90, %c0_91, %c0_92] : memref<5x84x80xf32, #tpu.memory_space<vmem>>, vector<1x84x80xf32>
    %91 = vector.shape_cast %90 : vector<1x84x80xf32> to vector<84x80xf32>
    %cst_93 = arith.constant dense<0.000000e+00> : vector<10x80xf32>
    %92 = tpu.matmul %85, %91, %cst_93 {dimension_numbers = #tpu.dot_dimension_numbers<[1], [0], [0], [1], [0, 0, 1, 1], [], []>} : vector<10x84xf32>, vector<84x80xf32>, vector<10x80xf32> -> vector<10x80xf32>
    %93 = arith.addf %84, %92 : vector<10x80xf32>
    %c3_94 = arith.constant 3 : index
    %c0_95 = arith.constant 0 : index
    %94 = vector.load %arg10[%c3_94, %c0_95] : memref<14x84xf32, #tpu.memory_space<vmem>>, vector<10x84xf32>
    %c3_96 = arith.constant 3 : index
    %c0_97 = arith.constant 0 : index
    %c0_98 = arith.constant 0 : index
    %95 = vector.load %arg5[%c3_96, %c0_97, %c0_98] : memref<5x84x80xf32, #tpu.memory_space<vmem>>, vector<1x84x80xf32>
    %96 = vector.shape_cast %95 : vector<1x84x80xf32> to vector<84x80xf32>
    %cst_99 = arith.constant dense<0.000000e+00> : vector<10x80xf32>
    %97 = tpu.matmul %94, %96, %cst_99 {dimension_numbers = #tpu.dot_dimension_numbers<[1], [0], [0], [1], [0, 0, 1, 1], [], []>} : vector<10x84xf32>, vector<84x80xf32>, vector<10x80xf32> -> vector<10x80xf32>
    %98 = arith.addf %89, %97 : vector<10x80xf32>
    %c3_100 = arith.constant 3 : index
    %c0_101 = arith.constant 0 : index
    %c0_102 = arith.constant 0 : index
    %99 = vector.load %arg6[%c3_100, %c0_101, %c0_102] : memref<5x84x80xf32, #tpu.memory_space<vmem>>, vector<1x84x80xf32>
    %100 = vector.shape_cast %99 : vector<1x84x80xf32> to vector<84x80xf32>
    %cst_103 = arith.constant dense<0.000000e+00> : vector<10x80xf32>
    %101 = tpu.matmul %94, %100, %cst_103 {dimension_numbers = #tpu.dot_dimension_numbers<[1], [0], [0], [1], [0, 0, 1, 1], [], []>} : vector<10x84xf32>, vector<84x80xf32>, vector<10x80xf32> -> vector<10x80xf32>
    %102 = arith.addf %93, %101 : vector<10x80xf32>
    %c4_104 = arith.constant 4 : index
    %c0_105 = arith.constant 0 : index
    %103 = vector.load %arg10[%c4_104, %c0_105] : memref<14x84xf32, #tpu.memory_space<vmem>>, vector<10x84xf32>
    %c4_106 = arith.constant 4 : index
    %c0_107 = arith.constant 0 : index
    %c0_108 = arith.constant 0 : index
    %104 = vector.load %arg5[%c4_106, %c0_107, %c0_108] : memref<5x84x80xf32, #tpu.memory_space<vmem>>, vector<1x84x80xf32>
    %105 = vector.shape_cast %104 : vector<1x84x80xf32> to vector<84x80xf32>
    %cst_109 = arith.constant dense<0.000000e+00> : vector<10x80xf32>
    %106 = tpu.matmul %103, %105, %cst_109 {dimension_numbers = #tpu.dot_dimension_numbers<[1], [0], [0], [1], [0, 0, 1, 1], [], []>} : vector<10x84xf32>, vector<84x80xf32>, vector<10x80xf32> -> vector<10x80xf32>
    %107 = arith.addf %98, %106 : vector<10x80xf32>
    %c4_110 = arith.constant 4 : index
    %c0_111 = arith.constant 0 : index
    %c0_112 = arith.constant 0 : index
    %108 = vector.load %arg6[%c4_110, %c0_111, %c0_112] : memref<5x84x80xf32, #tpu.memory_space<vmem>>, vector<1x84x80xf32>
    %109 = vector.shape_cast %108 : vector<1x84x80xf32> to vector<84x80xf32>
    %cst_113 = arith.constant dense<0.000000e+00> : vector<10x80xf32>
    %110 = tpu.matmul %103, %109, %cst_113 {dimension_numbers = #tpu.dot_dimension_numbers<[1], [0], [0], [1], [0, 0, 1, 1], [], []>} : vector<10x84xf32>, vector<84x80xf32>, vector<10x80xf32> -> vector<10x80xf32>
    %111 = arith.addf %102, %110 : vector<10x80xf32>
    %c0_114 = arith.constant 0 : index
    %c0_115 = arith.constant 0 : index
    %112 = vector.load %arg7[%c0_114, %c0_115] : memref<1x80xf32, #tpu.memory_space<vmem>>, vector<1x80xf32>
    %113 = vector.broadcast %112 : vector<1x80xf32> to vector<10x80xf32>
    %114 = arith.addf %107, %113 : vector<10x80xf32>
    %115 = vector.broadcast %112 : vector<1x80xf32> to vector<10x80xf32>
    %116 = arith.addf %111, %115 : vector<10x80xf32>
    %117 = arith.maximumf %114, %116 : vector<10x80xf32>
    %cst_116 = arith.constant 0.000000e+00 : f32
    %118 = vector.broadcast %cst_116 : f32 to vector<10x80xf32>
    %119 = arith.maximumf %117, %118 : vector<10x80xf32>
    %c0_117 = arith.constant 0 : index
    %c0_118 = arith.constant 0 : index
    %120 = vector.load %arg11[%c0_117, %c0_118] : memref<10x80xf32, #tpu.memory_space<vmem>>, vector<10x80xf32>
    tpu.vector_store %arg11[%c0_117, %c0_118], %119 {strides = array<i32>} : memref<10x80xf32, #tpu.memory_space<vmem>>, vector<10x80xf32>,
    %c0_119 = arith.constant 0 : index
    %c0_120 = arith.constant 0 : index
    %121 = tpu.strided_load %arg11[%c0_119, %c0_120] {strides = array<i32: 2, 1>} : memref<10x80xf32, #tpu.memory_space<vmem>>, vector<5x80xf32>
    %c1_121 = arith.constant 1 : index
    %c0_122 = arith.constant 0 : index
    %122 = tpu.strided_load %arg11[%c1_121, %c0_122] {strides = array<i32: 2, 1>} : memref<10x80xf32, #tpu.memory_space<vmem>>, vector<5x80xf32>
    %123 = arith.maximumf %121, %122 : vector<5x80xf32>
    %c0_123 = arith.constant 0 : index
    %c0_124 = arith.constant 0 : index
    %c0_125 = arith.constant 0 : index
    %124 = vector.load %arg8[%c0_123, %c0_124, %c0_125] : memref<1x5x80xf32, #tpu.memory_space<vmem>>, vector<1x5x80xf32>
    %125 = vector.shape_cast %124 : vector<1x5x80xf32> to vector<5x80xf32>
    %126 = vector.shape_cast %123 : vector<5x80xf32> to vector<1x5x80xf32>
    tpu.vector_store %arg8[%c0_123, %c0_124, %c0_125], %126 {strides = array<i32>} : memref<1x5x80xf32, #tpu.memory_space<vmem>>, vector<1x5x80xf32>,
    return
  }
  func.func @transform_0(%arg0: i32) -> (i32, i32, i32) {
    %c0_i32 = arith.constant 0 : i32
    %c0_i32_0 = arith.constant 0 : i32
    %c0_i32_1 = arith.constant 0 : i32
    return %arg0, %c0_i32, %c0_i32_0 : i32, i32, i32
  }
  func.func @transform_1(%arg0: i32) -> (i32, i32, i32) {
    %c0_i32 = arith.constant 0 : i32
    %c0_i32_0 = arith.constant 0 : i32
    %c0_i32_1 = arith.constant 0 : i32
    %c0_i32_2 = arith.constant 0 : i32
    return %c0_i32, %c0_i32_0, %c0_i32_1 : i32, i32, i32
  }
  func.func @transform_2(%arg0: i32) -> (i32, i32, i32) {
    %c0_i32 = arith.constant 0 : i32
    %c0_i32_0 = arith.constant 0 : i32
    %c0_i32_1 = arith.constant 0 : i32
    %c0_i32_2 = arith.constant 0 : i32
    return %c0_i32, %c0_i32_0, %c0_i32_1 : i32, i32, i32
  }
  func.func @transform_3(%arg0: i32) -> (i32, i32) {
    %c0_i32 = arith.constant 0 : i32
    %c0_i32_0 = arith.constant 0 : i32
    %c0_i32_1 = arith.constant 0 : i32
    return %c0_i32, %c0_i32_0 : i32, i32
  }
  func.func @transform_4(%arg0: i32) -> (i32, i32, i32) {
    %c0_i32 = arith.constant 0 : i32
    %c0_i32_0 = arith.constant 0 : i32
    %c0_i32_1 = arith.constant 0 : i32
    %c0_i32_2 = arith.constant 0 : i32
    return %c0_i32, %c0_i32_0, %c0_i32_1 : i32, i32, i32
  }
  func.func @transform_5(%arg0: i32) -> (i32, i32, i32) {
    %c0_i32 = arith.constant 0 : i32
    %c0_i32_0 = arith.constant 0 : i32
    %c0_i32_1 = arith.constant 0 : i32
    %c0_i32_2 = arith.constant 0 : i32
    return %c0_i32, %c0_i32_0, %c0_i32_1 : i32, i32, i32
  }
  func.func @transform_6(%arg0: i32) -> (i32, i32) {
    %c0_i32 = arith.constant 0 : i32
    %c0_i32_0 = arith.constant 0 : i32
    %c0_i32_1 = arith.constant 0 : i32
    return %c0_i32, %c0_i32_0 : i32, i32
  }
  func.func @transform_7(%arg0: i32) -> (i32, i32, i32) {
    %c0_i32 = arith.constant 0 : i32
    %c0_i32_0 = arith.constant 0 : i32
    %c0_i32_1 = arith.constant 0 : i32
    return %arg0, %c0_i32, %c0_i32_0 : i32, i32, i32
  }
}

module attributes {stable_mosaic.version = 11 : i64} {
  func.func @_fc_head_kernel(%arg0: i32, %arg1: memref<8x400xf32, #tpu.memory_space<vmem>>, %arg2: memref<400x120xf32, #tpu.memory_space<vmem>>, %arg3: memref<1x120xf32, #tpu.memory_space<vmem>>, %arg4: memref<120x84xf32, #tpu.memory_space<vmem>>, %arg5: memref<1x84xf32, #tpu.memory_space<vmem>>, %arg6: memref<84x10xf32, #tpu.memory_space<vmem>>, %arg7: memref<1x10xf32, #tpu.memory_space<vmem>>, %arg8: memref<8x10xf32, #tpu.memory_space<vmem>>) attributes {dimension_semantics = [#tpu.dimension_semantics<parallel>], iteration_bounds = array<i64: 1>, scalar_prefetch = 0 : i64, scratch_operands = 0 : i64, tpu.core_type = #tpu.core_type<tc>, window_params = [{transform_indices = @transform_0, window_bounds = array<i64: 8, 400>}, {pipeline_mode = #tpu.pipeline_mode<synchronous>, transform_indices = @transform_1, window_bounds = array<i64: 400, 120>}, {pipeline_mode = #tpu.pipeline_mode<synchronous>, transform_indices = @transform_2, window_bounds = array<i64: 1, 120>}, {pipeline_mode = #tpu.pipeline_mode<synchronous>, transform_indices = @transform_3, window_bounds = array<i64: 120, 84>}, {pipeline_mode = #tpu.pipeline_mode<synchronous>, transform_indices = @transform_4, window_bounds = array<i64: 1, 84>}, {pipeline_mode = #tpu.pipeline_mode<synchronous>, transform_indices = @transform_5, window_bounds = array<i64: 84, 10>}, {pipeline_mode = #tpu.pipeline_mode<synchronous>, transform_indices = @transform_6, window_bounds = array<i64: 1, 10>}, {transform_indices = @transform_7, window_bounds = array<i64: 8, 10>}]} {
    %c0 = arith.constant 0 : index
    %c0_0 = arith.constant 0 : index
    %0 = vector.load %arg1[%c0, %c0_0] : memref<8x400xf32, #tpu.memory_space<vmem>>, vector<8x400xf32>
    %c0_1 = arith.constant 0 : index
    %c0_2 = arith.constant 0 : index
    %1 = vector.load %arg2[%c0_1, %c0_2] : memref<400x120xf32, #tpu.memory_space<vmem>>, vector<400x120xf32>
    %cst = arith.constant dense<0.000000e+00> : vector<8x120xf32>
    %2 = tpu.matmul %0, %1, %cst {dimension_numbers = #tpu.dot_dimension_numbers<[1], [0], [0], [1], [0, 0, 1, 1], [], []>} : vector<8x400xf32>, vector<400x120xf32>, vector<8x120xf32> -> vector<8x120xf32>
    %c0_3 = arith.constant 0 : index
    %c0_4 = arith.constant 0 : index
    %3 = vector.load %arg3[%c0_3, %c0_4] : memref<1x120xf32, #tpu.memory_space<vmem>>, vector<1x120xf32>
    %4 = vector.broadcast %3 : vector<1x120xf32> to vector<8x120xf32>
    %5 = arith.addf %2, %4 : vector<8x120xf32>
    %cst_5 = arith.constant 0.000000e+00 : f32
    %6 = vector.broadcast %cst_5 : f32 to vector<8x120xf32>
    %7 = arith.maximumf %5, %6 : vector<8x120xf32>
    %c0_6 = arith.constant 0 : index
    %c0_7 = arith.constant 0 : index
    %8 = vector.load %arg4[%c0_6, %c0_7] : memref<120x84xf32, #tpu.memory_space<vmem>>, vector<120x84xf32>
    %cst_8 = arith.constant dense<0.000000e+00> : vector<8x84xf32>
    %9 = tpu.matmul %7, %8, %cst_8 {dimension_numbers = #tpu.dot_dimension_numbers<[1], [0], [0], [1], [0, 0, 1, 1], [], []>} : vector<8x120xf32>, vector<120x84xf32>, vector<8x84xf32> -> vector<8x84xf32>
    %c0_9 = arith.constant 0 : index
    %c0_10 = arith.constant 0 : index
    %10 = vector.load %arg5[%c0_9, %c0_10] : memref<1x84xf32, #tpu.memory_space<vmem>>, vector<1x84xf32>
    %11 = vector.broadcast %10 : vector<1x84xf32> to vector<8x84xf32>
    %12 = arith.addf %9, %11 : vector<8x84xf32>
    %cst_11 = arith.constant 0.000000e+00 : f32
    %13 = vector.broadcast %cst_11 : f32 to vector<8x84xf32>
    %14 = arith.maximumf %12, %13 : vector<8x84xf32>
    %c0_12 = arith.constant 0 : index
    %c0_13 = arith.constant 0 : index
    %15 = vector.load %arg6[%c0_12, %c0_13] : memref<84x10xf32, #tpu.memory_space<vmem>>, vector<84x10xf32>
    %cst_14 = arith.constant dense<0.000000e+00> : vector<8x10xf32>
    %16 = tpu.matmul %14, %15, %cst_14 {dimension_numbers = #tpu.dot_dimension_numbers<[1], [0], [0], [1], [0, 0, 1, 1], [], []>} : vector<8x84xf32>, vector<84x10xf32>, vector<8x10xf32> -> vector<8x10xf32>
    %c0_15 = arith.constant 0 : index
    %c0_16 = arith.constant 0 : index
    %17 = vector.load %arg7[%c0_15, %c0_16] : memref<1x10xf32, #tpu.memory_space<vmem>>, vector<1x10xf32>
    %18 = vector.broadcast %17 : vector<1x10xf32> to vector<8x10xf32>
    %19 = arith.addf %16, %18 : vector<8x10xf32>
    %c0_17 = arith.constant 0 : index
    %c0_18 = arith.constant 0 : index
    %20 = vector.load %arg8[%c0_17, %c0_18] : memref<8x10xf32, #tpu.memory_space<vmem>>, vector<8x10xf32>
    tpu.vector_store %arg8[%c0_17, %c0_18], %19 {strides = array<i32>} : memref<8x10xf32, #tpu.memory_space<vmem>>, vector<8x10xf32>,
    return
  }
  func.func @transform_0(%arg0: i32) -> (i32, i32) {
    %c0_i32 = arith.constant 0 : i32
    %c0_i32_0 = arith.constant 0 : i32
    return %arg0, %c0_i32 : i32, i32
  }
  func.func @transform_1(%arg0: i32) -> (i32, i32) {
    %c0_i32 = arith.constant 0 : i32
    %c0_i32_0 = arith.constant 0 : i32
    %c0_i32_1 = arith.constant 0 : i32
    return %c0_i32, %c0_i32_0 : i32, i32
  }
  func.func @transform_2(%arg0: i32) -> (i32, i32) {
    %c0_i32 = arith.constant 0 : i32
    %c0_i32_0 = arith.constant 0 : i32
    %c0_i32_1 = arith.constant 0 : i32
    return %c0_i32, %c0_i32_0 : i32, i32
  }
  func.func @transform_3(%arg0: i32) -> (i32, i32) {
    %c0_i32 = arith.constant 0 : i32
    %c0_i32_0 = arith.constant 0 : i32
    %c0_i32_1 = arith.constant 0 : i32
    return %c0_i32, %c0_i32_0 : i32, i32
  }
  func.func @transform_4(%arg0: i32) -> (i32, i32) {
    %c0_i32 = arith.constant 0 : i32
    %c0_i32_0 = arith.constant 0 : i32
    %c0_i32_1 = arith.constant 0 : i32
    return %c0_i32, %c0_i32_0 : i32, i32
  }
  func.func @transform_5(%arg0: i32) -> (i32, i32) {
    %c0_i32 = arith.constant 0 : i32
    %c0_i32_0 = arith.constant 0 : i32
    %c0_i32_1 = arith.constant 0 : i32
    return %c0_i32, %c0_i32_0 : i32, i32
  }
  func.func @transform_6(%arg0: i32) -> (i32, i32) {
    %c0_i32 = arith.constant 0 : i32
    %c0_i32_0 = arith.constant 0 : i32
    %c0_i32_1 = arith.constant 0 : i32
    return %c0_i32, %c0_i32_0 : i32, i32
  }
  func.func @transform_7(%arg0: i32) -> (i32, i32) {
    %c0_i32 = arith.constant 0 : i32
    %c0_i32_0 = arith.constant 0 : i32
    return %arg0, %c0_i32 : i32, i32
  }
}

</mosaic_0001>

<llo_original>
// kernel: net_forward.3
$region0: #{net_forward.3}
  #allocation0 [shape = 'u32[]', space=smem, size = 0x4, offset = 0x4, fixed_abs, tag = 'smem constant byte address 0x4 - core index']
  #allocation1 [shape = 'u32[144,128]{1,0:T(1,128)}', space=vmem, size = 0x12000, scoped, tag = 'internal scratch']
  %s0 = inlined_call_operand.vmem [shape: f32[8,400], index: 0, kind: input, shape index: {}]
  %s1 = inlined_call_operand.vmem [shape: f32[400,120], index: 1, kind: input, shape index: {}]
  %s2 = inlined_call_operand.vmem [shape: f32[1,120], index: 2, kind: input, shape index: {}]
  %s3 = inlined_call_operand.vmem [shape: f32[120,84], index: 3, kind: input, shape index: {}]
  %s4 = inlined_call_operand.vmem [shape: f32[1,84], index: 4, kind: input, shape index: {}]
  %s5 = inlined_call_operand.vmem [shape: f32[84,10], index: 5, kind: input, shape index: {}]
  %s6 = inlined_call_operand.vmem [shape: f32[1,10], index: 6, kind: input, shape index: {}]
  %s7 = inlined_call_operand.vmem [shape: f32[8,10], index: 7, kind: output, shape index: {}]
  %s8 = sld [smem:[#allocation0]]
  $region38: #{net_forward.3} parent=0
    _
  %s10 = ssub.s32 1, %s8
  %s11 = scalar_select 0, %s10, %s8
  // Predicated region
  $region2: #{net_forward.3} parent=0 // pred_check
    _
  $region3: #{net_forward.3} parent=0 // pred_check_branch
    %13 = sbr.rel (0) target = $region5
  $region4: #{net_forward.3} parent=0 // pred_region
    _
  $region5: #{net_forward.3} parent=0 // pred_fallthru
    _
  // Predicated region
  $region6: #{net_forward.3} parent=0 // pred_check
    _
  $region7: #{net_forward.3} parent=0 // pred_check_branch
    %15 = sbr.rel (0) target = $region9
  $region8: #{net_forward.3} parent=0 // pred_region
    _
  $region9: #{net_forward.3} parent=0 // pred_fallthru
    _
  // Predicated region
  $region10: #{net_forward.3} parent=0 // pred_check
    _
  $region11: #{net_forward.3} parent=0 // pred_check_branch
    %17 = sbr.rel (0) target = $region13
  $region12: #{net_forward.3} parent=0 // pred_region
    _
  $region13: #{net_forward.3} parent=0 // pred_fallthru
    _
  // Predicated region
  $region14: #{net_forward.3} parent=0 // pred_check
    _
  $region15: #{net_forward.3} parent=0 // pred_check_branch
    %19 = sbr.rel (0) target = $region17
  $region16: #{net_forward.3} parent=0 // pred_region
    _
  $region17: #{net_forward.3} parent=0 // pred_fallthru
    _
  // Predicated region
  $region18: #{net_forward.3} parent=0 // pred_check
    _
  $region19: #{net_forward.3} parent=0 // pred_check_branch
    %21 = sbr.rel (0) target = $region21
  $region20: #{net_forward.3} parent=0 // pred_region
    _
  $region21: #{net_forward.3} parent=0 // pred_fallthru
    _
  // Predicated region
  $region22: #{net_forward.3} parent=0 // pred_check
    _
  $region23: #{net_forward.3} parent=0 // pred_check_branch
    %23 = sbr.rel (0) target = $region25
  $region24: #{net_forward.3} parent=0 // pred_region
    _
  $region25: #{net_forward.3} parent=0 // pred_fallthru
    _
  // Predicated region
  $region26: #{net_forward.3} parent=0 // pred_check
    _
  $region27: #{net_forward.3} parent=0 // pred_check_branch
    %25 = sbr.rel (0) target = $region29
  $region28: #{net_forward.3} parent=0 // pred_region
    _
  $region29: #{net_forward.3} parent=0 // pred_fallthru
    _
  %v26 = vld [vmem:[%s0] sm:$0xff]
  %v27 = vld [vmem:[%s0 + $0x8] sm:$0xff]
  %v28 = vld [vmem:[%s0 + $0x10] sm:$0xff]
  %v29 = vld [vmem:[%s0 + $0x18] sm:$0xff]
  %v30 = vld [vmem:[%s1] sm:$0xff]
  %v31 = vld [vmem:[%s1 + $0x8] sm:$0xff]
  %v32 = vld [vmem:[%s1 + $0x10] sm:$0xff]
  %v33 = vld [vmem:[%s1 + $0x18] sm:$0xff]
  %v34 = vld [vmem:[%s1 + $0x20] sm:$0xff]
  %v35 = vld [vmem:[%s1 + $0x28] sm:$0xff]
  %v36 = vld [vmem:[%s1 + $0x30] sm:$0xff]
  %v37 = vld [vmem:[%s1 + $0x38] sm:$0xff]
  %v38 = vld [vmem:[%s1 + $0x40] sm:$0xff]
  %v39 = vld [vmem:[%s1 + $0x48] sm:$0xff]
  %v40 = vld [vmem:[%s1 + $0x50] sm:$0xff]
  %v41 = vld [vmem:[%s1 + $0x58] sm:$0xff]
  %v42 = vld [vmem:[%s1 + $0x60] sm:$0xff]
  %v43 = vld [vmem:[%s1 + $0x68] sm:$0xff]
  %v44 = vld [vmem:[%s1 + $0x70] sm:$0xff]
  %v45 = vld [vmem:[%s1 + $0x78] sm:$0xff]
  %v46 = vld [vmem:[%s1 + $0x80] sm:$0xff]
  %v47 = vld [vmem:[%s1 + $0x88] sm:$0xff]
  %v48 = vld [vmem:[%s1 + $0x90] sm:$0xff]
  %v49 = vld [vmem:[%s1 + $0x98] sm:$0xff]
  %v50 = vld [vmem:[%s1 + $0xa0] sm:$0xff]
  %v51 = vld [vmem:[%s1 + $0xa8] sm:$0xff]
  %v52 = vld [vmem:[%s1 + $0xb0] sm:$0xff]
  %v53 = vld [vmem:[%s1 + $0xb8] sm:$0xff]
  %v54 = vld [vmem:[%s1 + $0xc0] sm:$0xff]
  %v55 = vld [vmem:[%s1 + $0xc8] sm:$0xff]
  %v56 = vld [vmem:[%s1 + $0xd0] sm:$0xff]
  %v57 = vld [vmem:[%s1 + $0xd8] sm:$0xff]
  %v58 = vld [vmem:[%s1 + $0xe0] sm:$0xff]
  %v59 = vld [vmem:[%s1 + $0xe8] sm:$0xff]
  %v60 = vld [vmem:[%s1 + $0xf0] sm:$0xff]
  %v61 = vld [vmem:[%s1 + $0xf8] sm:$0xff]
  %v62 = vld [vmem:[%s1 + $0x100] sm:$0xff]
  %v63 = vld [vmem:[%s1 + $0x108] sm:$0xff]
  %v64 = vld [vmem:[%s1 + $0x110] sm:$0xff]
  %v65 = vld [vmem:[%s1 + $0x118] sm:$0xff]
  %v66 = vld [vmem:[%s1 + $0x120] sm:$0xff]
  %v67 = vld [vmem:[%s1 + $0x128] sm:$0xff]
  %v68 = vld [vmem:[%s1 + $0x130] sm:$0xff]
  %v69 = vld [vmem:[%s1 + $0x138] sm:$0xff]
  %v70 = vld [vmem:[%s1 + $0x140] sm:$0xff]
  %v71 = vld [vmem:[%s1 + $0x148] sm:$0xff]
  %v72 = vld [vmem:[%s1 + $0x150] sm:$0xff]
  %v73 = vld [vmem:[%s1 + $0x158] sm:$0xff]
  %v74 = vld [vmem:[%s1 + $0x160] sm:$0xff]
  %v75 = vld [vmem:[%s1 + $0x168] sm:$0xff]
  %v76 = vld [vmem:[%s1 + $0x170] sm:$0xff]
  %v77 = vld [vmem:[%s1 + $0x178] sm:$0xff]
  %v78 = vld [vmem:[%s1 + $0x180] sm:$0xff]
  %v79 = vld [vmem:[%s1 + $0x188] sm:$0xff]
  %v80 = vld [vmem:[%s2] sm:$0x1]
  %v82 = vlaneseq
  %v83 = vshrl.u32 %v82, 7
  %v84 = vsub.s32 0, %v83
  %v85 = vrot.slane %v80, %v84
  %vm87 = vcmask 130048
  %v89 = vsel %vm87, %v29, 0
  %91 = vmatprep.subr.mxu0 0.0
  %92 = vmatpush1.msra.mxu0 %v45
  %93 = vmatprep.subr.mxu0 0.0
  %94 = vmatpush1.msra.mxu0 %v44
  %95 = vmatprep.subr.mxu0 0.0
  %96 = vmatpush1.msra.mxu0 %v43
  %97 = vmatprep.subr.mxu0 0.0
  %98 = vmatpush1.msra.mxu0 %v42
  %99 = vmatprep.subr.mxu0 0.0
  %100 = vmatpush1.msra.mxu0 %v41
  %101 = vmatprep.subr.mxu0 0.0
  %102 = vmatpush1.msra.mxu0 %v40
  %103 = vmatprep.subr.mxu0 0.0
  %104 = vmatpush1.msra.mxu0 %v39
  %105 = vmatprep.subr.mxu0 0.0
  %106 = vmatpush1.msra.mxu0 %v38
  %107 = vmatprep.subr.mxu0 0.0
  %108 = vmatpush1.msra.mxu0 %v37
  %109 = vmatprep.subr.mxu0 0.0
  %110 = vmatpush1.msra.mxu0 %v36
  %111 = vmatprep.subr.mxu0 0.0
  %112 = vmatpush1.msra.mxu0 %v35
  %113 = vmatprep.subr.mxu0 0.0
  %114 = vmatpush1.msra.mxu0 %v34
  %115 = vmatprep.subr.mxu0 0.0
  %116 = vmatpush1.msra.mxu0 %v33
  %117 = vmatprep.subr.mxu0 0.0
  %118 = vmatpush1.msra.mxu0 %v32
  %119 = vmatprep.subr.mxu0 0.0
  %120 = vmatpush1.msra.mxu0 %v31
  %121 = vmatprep.subr.mxu0 0.0
  %122 = vmatpush1.msra.mxu0 %v30
  %123 = vmatprep.subr.mxu0 0.0
  %124 = vmatpush2.msra.mxu0 %v61
  %125 = vmatprep.subr.mxu0 0.0
  %126 = vmatpush2.msra.mxu0 %v60
  %127 = vmatprep.subr.mxu0 0.0
  %128 = vmatpush2.msra.mxu0 %v59
  %129 = vmatprep.subr.mxu0 0.0
  %130 = vmatpush2.msra.mxu0 %v58
  %131 = vmatprep.subr.mxu0 0.0
  %132 = vmatpush2.msra.mxu0 %v57
  %133 = vmatprep.subr.mxu0 0.0
  %134 = vmatpush2.msra.mxu0 %v56
  %135 = vmatprep.subr.mxu0 0.0
  %136 = vmatpush2.msra.mxu0 %v55
  %137 = vmatprep.subr.mxu0 0.0
  %138 = vmatpush2.msra.mxu0 %v54
  %139 = vmatprep.subr.mxu0 0.0
  %140 = vmatpush2.msra.mxu0 %v53
  %141 = vmatprep.subr.mxu0 0.0
  %142 = vmatpush2.msra.mxu0 %v52
  %143 = vmatprep.subr.mxu0 0.0
  %144 = vmatpush2.msra.mxu0 %v51
  %145 = vmatprep.subr.mxu0 0.0
  %146 = vmatpush2.msra.mxu0 %v50
  %147 = vmatprep.subr.mxu0 0.0
  %148 = vmatpush2.msra.mxu0 %v49
  %149 = vmatprep.subr.mxu0 0.0
  %150 = vmatpush2.msra.mxu0 %v48
  %151 = vmatprep.subr.mxu0 0.0
  %152 = vmatpush2.msra.mxu0 %v47
  %153 = vmatprep.subr.mxu0 0.0
  %154 = vmatpush2.msra.mxu0 %v46
  %155 = vmatprep.mubr.f32.mxu0 %v27
  %156 = vmatmul.mubr.f32.gmra.mxu0 %v26
  %v157 = vpop.f32.mrf.mxu0
  %v158 = vadd.f32 %v85, %v157
  %v159 = vpop.f32.mrf.mxu0
  %160 = vdwg.mxu0
  %161 = vmatprep.subr.mxu0 0.0
  %162 = vmatpush1.msra.mxu0 %v77
  %163 = vmatprep.subr.mxu0 0.0
  %164 = vmatpush1.msra.mxu0 %v76
  %165 = vmatprep.subr.mxu0 0.0
  %166 = vmatpush1.msra.mxu0 %v75
  %167 = vmatprep.subr.mxu0 0.0
  %168 = vmatpush1.msra.mxu0 %v74
  %169 = vmatprep.subr.mxu0 0.0
  %170 = vmatpush1.msra.mxu0 %v73
  %171 = vmatprep.subr.mxu0 0.0
  %172 = vmatpush1.msra.mxu0 %v72
  %173 = vmatprep.subr.mxu0 0.0
  %174 = vmatpush1.msra.mxu0 %v71
  %175 = vmatprep.subr.mxu0 0.0
  %176 = vmatpush1.msra.mxu0 %v70
  %177 = vmatprep.subr.mxu0 0.0
  %178 = vmatpush1.msra.mxu0 %v69
  %179 = vmatprep.subr.mxu0 0.0
  %180 = vmatpush1.msra.mxu0 %v68
  %181 = vmatprep.subr.mxu0 0.0
  %182 = vmatpush1.msra.mxu0 %v67
  %183 = vmatprep.subr.mxu0 0.0
  %184 = vmatpush1.msra.mxu0 %v66
  %185 = vmatprep.subr.mxu0 0.0
  %186 = vmatpush1.msra.mxu0 %v65
  %187 = vmatprep.subr.mxu0 0.0
  %188 = vmatpush1.msra.mxu0 %v64
  %189 = vmatprep.subr.mxu0 0.0
  %190 = vmatpush1.msra.mxu0 %v63
  %191 = vmatprep.subr.mxu0 0.0
  %192 = vmatpush1.msra.mxu0 %v62
  %193 = vmatprep.subr.mxu0 0.0
  %194 = vmatpush2.msra.mxu0 0.0
  %195 = vmatprep.subr.mxu0 0.0
  %196 = vmatpush2.msra.mxu0 0.0
  %197 = vmatprep.subr.mxu0 0.0
  %198 = vmatpush2.msra.mxu0 0.0
  %199 = vmatprep.subr.mxu0 0.0
  %200 = vmatpush2.msra.mxu0 0.0
  %201 = vmatprep.subr.mxu0 0.0
  %202 = vmatpush2.msra.mxu0 0.0
  %203 = vmatprep.subr.mxu0 0.0
  %204 = vmatpush2.msra.mxu0 0.0
  %205 = vmatprep.subr.mxu0 0.0
  %206 = vmatpush2.msra.mxu0 0.0
  %207 = vmatprep.subr.mxu0 0.0
  %208 = vmatpush2.msra.mxu0 0.0
  %209 = vmatprep.subr.mxu0 0.0
  %210 = vmatpush2.msra.mxu0 0.0
  %211 = vmatprep.subr.mxu0 0.0
  %212 = vmatpush2.msra.mxu0 0.0
  %213 = vmatprep.subr.mxu0 0.0
  %214 = vmatpush2.msra.mxu0 0.0
  %215 = vmatprep.subr.mxu0 0.0
  %216 = vmatpush2.msra.mxu0 0.0
  %217 = vmatprep.subr.mxu0 0.0
  %218 = vmatpush2.msra.mxu0 0.0
  %219 = vmatprep.subr.mxu0 0.0
  %220 = vmatpush2.msra.mxu0 0.0
  %221 = vmatprep.subr.mxu0 0.0
  %222 = vmatpush2.msra.mxu0 %v79
  %223 = vmatprep.subr.mxu0 0.0
  %224 = vmatpush2.msra.mxu0 %v78
  %225 = vmatprep.mubr.f32.mxu0 %v89
  %226 = vmatmul.mubr.f32.gmra.mxu0 %v28
  %v227 = vpop.f32.mrf.mxu0
  %v228 = vadd.f32 %v158, %v227
  %v229 = vpop.f32.mrf.mxu0
  %230 = vdwg.mxu0
  %v231 = vmax.f32 %v228, 0.0
  %v232 = vld [vmem:[%s3] sm:$0xff]
  %v233 = vld [vmem:[%s3 + $0x8] sm:$0xff]
  %v234 = vld [vmem:[%s3 + $0x10] sm:$0xff]
  %v235 = vld [vmem:[%s3 + $0x18] sm:$0xff]
  %v236 = vld [vmem:[%s3 + $0x20] sm:$0xff]
  %v237 = vld [vmem:[%s3 + $0x28] sm:$0xff]
  %v238 = vld [vmem:[%s3 + $0x30] sm:$0xff]
  %v239 = vld [vmem:[%s3 + $0x38] sm:$0xff]
  %v240 = vld [vmem:[%s3 + $0x40] sm:$0xff]
  %v241 = vld [vmem:[%s3 + $0x48] sm:$0xff]
  %v242 = vld [vmem:[%s3 + $0x50] sm:$0xff]
  %v243 = vld [vmem:[%s3 + $0x58] sm:$0xff]
  %v244 = vld [vmem:[%s3 + $0x60] sm:$0xff]
  %v245 = vld [vmem:[%s3 + $0x68] sm:$0xff]
  %v246 = vld [vmem:[%s3 + $0x70] sm:$0xff]
  %v247 = vld [vmem:[%s4] sm:$0x1]
  %v249 = vlaneseq
  %v250 = vshrl.u32 %v249, 7
  %v251 = vsub.s32 0, %v250
  %v252 = vrot.slane %v247, %v251
  %vm254 = vcmask 982016
  %v256 = vsel %vm254, %v231, 0
  %258 = vmatprep.subr.mxu0 0.0
  %259 = vmatpush1.msra.mxu0 0.0
  %260 = vmatprep.subr.mxu0 0.0
  %261 = vmatpush1.msra.mxu0 %v246
  %262 = vmatprep.subr.mxu0 0.0
  %263 = vmatpush1.msra.mxu0 %v245
  %264 = vmatprep.subr.mxu0 0.0
  %265 = vmatpush1.msra.mxu0 %v244
  %266 = vmatprep.subr.mxu0 0.0
  %267 = vmatpush1.msra.mxu0 %v243
  %268 = vmatprep.subr.mxu0 0.0
  %269 = vmatpush1.msra.mxu0 %v242
  %270 = vmatprep.subr.mxu0 0.0
  %271 = vmatpush1.msra.mxu0 %v241
  %272 = vmatprep.subr.mxu0 0.0
  %273 = vmatpush1.msra.mxu0 %v240
  %274 = vmatprep.subr.mxu0 0.0
  %275 = vmatpush1.msra.mxu0 %v239
  %276 = vmatprep.subr.mxu0 0.0
  %277 = vmatpush1.msra.mxu0 %v238
  %278 = vmatprep.subr.mxu0 0.0
  %279 = vmatpush1.msra.mxu0 %v237
  %280 = vmatprep.subr.mxu0 0.0
  %281 = vmatpush1.msra.mxu0 %v236
  %282 = vmatprep.subr.mxu0 0.0
  %283 = vmatpush1.msra.mxu0 %v235
  %284 = vmatprep.subr.mxu0 0.0
  %285 = vmatpush1.msra.mxu0 %v234
  %286 = vmatprep.subr.mxu0 0.0
  %287 = vmatpush1.msra.mxu0 %v233
  %288 = vmatprep.subr.mxu0 0.0
  %289 = vmatpush1.msra.mxu0 %v232
  %290 = vmatprep.subr.mxu0 0.0
  %291 = vmatpush2.msra.mxu0 0.0
  %292 = vmatprep.subr.mxu0 0.0
  %293 = vmatpush2.msra.mxu0 0.0
  %294 = vmatprep.subr.mxu0 0.0
  %295 = vmatpush2.msra.mxu0 0.0
  %296 = vmatprep.subr.mxu0 0.0
  %297 = vmatpush2.msra.mxu0 0.0
  %298 = vmatprep.subr.mxu0 0.0
  %299 = vmatpush2.msra.mxu0 0.0
  %300 = vmatprep.subr.mxu0 0.0
  %301 = vmatpush2.msra.mxu0 0.0
  %302 = vmatprep.subr.mxu0 0.0
  %303 = vmatpush2.msra.mxu0 0.0
  %304 = vmatprep.subr.mxu0 0.0
  %305 = vmatpush2.msra.mxu0 0.0
  %306 = vmatprep.subr.mxu0 0.0
  %307 = vmatpush2.msra.mxu0 0.0
  %308 = vmatprep.subr.mxu0 0.0
  %309 = vmatpush2.msra.mxu0 0.0
  %310 = vmatprep.subr.mxu0 0.0
  %311 = vmatpush2.msra.mxu0 0.0
  %312 = vmatprep.subr.mxu0 0.0
  %313 = vmatpush2.msra.mxu0 0.0
  %314 = vmatprep.subr.mxu0 0.0
  %315 = vmatpush2.msra.mxu0 0.0
  %316 = vmatprep.subr.mxu0 0.0
  %317 = vmatpush2.msra.mxu0 0.0
  %318 = vmatprep.subr.mxu0 0.0
  %319 = vmatpush2.msra.mxu0 0.0
  %320 = vmatprep.subr.mxu0 0.0
  %321 = vmatpush2.msra.mxu0 0.0
  %322 = vmatprep.mubr.f32.mxu0 0.0
  %323 = vmatmul.mubr.f32.gmra.mxu0 %v256
  %v324 = vpop.f32.mrf.mxu0
  %v325 = vadd.f32 %v252, %v324
  %v326 = vpop.f32.mrf.mxu0
  %327 = vdwg.mxu0
  %v328 = vmax.f32 %v325, 0.0
  %v329 = vld [vmem:[%s5] sm:$0xff]
  %v330 = vld [vmem:[%s5 + $0x8] sm:$0xff]
  %v331 = vld [vmem:[%s5 + $0x10] sm:$0xff]
  %v332 = vld [vmem:[%s5 + $0x18] sm:$0xff]
  %v333 = vld [vmem:[%s5 + $0x20] sm:$0xff]
  %v334 = vld [vmem:[%s5 + $0x28] sm:$0xff]
  %v335 = vld [vmem:[%s5 + $0x30] sm:$0xff]
  %v336 = vld [vmem:[%s5 + $0x38] sm:$0xff]
  %v337 = vld [vmem:[%s5 + $0x40] sm:$0xff]
  %v338 = vld [vmem:[%s5 + $0x48] sm:$0xff]
  %v339 = vld [vmem:[%s5 + $0x50] sm:$0xf]
  %v340 = vld [vmem:[%s6] sm:$0x1]
  %v342 = vlaneseq
  %v343 = vshrl.u32 %v342, 7
  %v344 = vsub.s32 0, %v343
  %v345 = vrot.slane %v340, %v344
  %vm347 = vcmask 687104
  %v349 = vsel %vm347, %v328, 0
  %vm351 = vcmask 1043456
  %v353 = vsel %vm351, %v339, 0
  %355 = vmatprep.subr.mxu0 0.0
  %356 = vmatpush1.msra.mxu0 0.0
  %357 = vmatprep.subr.mxu0 0.0
  %358 = vmatpush1.msra.mxu0 0.0
  %359 = vmatprep.subr.mxu0 0.0
  %360 = vmatpush1.msra.mxu0 0.0
  %361 = vmatprep.subr.mxu0 0.0
  %362 = vmatpush1.msra.mxu0 0.0
  %363 = vmatprep.subr.mxu0 0.0
  %364 = vmatpush1.msra.mxu0 0.0
  %365 = vmatprep.subr.mxu0 0.0
  %366 = vmatpush1.msra.mxu0 %v353
  %367 = vmatprep.subr.mxu0 0.0
  %368 = vmatpush1.msra.mxu0 %v338
  %369 = vmatprep.subr.mxu0 0.0
  %370 = vmatpush1.msra.mxu0 %v337
  %371 = vmatprep.subr.mxu0 0.0
  %372 = vmatpush1.msra.mxu0 %v336
  %373 = vmatprep.subr.mxu0 0.0
  %374 = vmatpush1.msra.mxu0 %v335
  %375 = vmatprep.subr.mxu0 0.0
  %376 = vmatpush1.msra.mxu0 %v334
  %377 = vmatprep.subr.mxu0 0.0
  %378 = vmatpush1.msra.mxu0 %v333
  %379 = vmatprep.subr.mxu0 0.0
  %380 = vmatpush1.msra.mxu0 %v332
  %381 = vmatprep.subr.mxu0 0.0
  %382 = vmatpush1.msra.mxu0 %v331
  %383 = vmatprep.subr.mxu0 0.0
  %384 = vmatpush1.msra.mxu0 %v330
  %385 = vmatprep.subr.mxu0 0.0
  %386 = vmatpush1.msra.mxu0 %v329
  %387 = vmatprep.subr.mxu0 0.0
  %388 = vmatpush2.msra.mxu0 0.0
  %389 = vmatprep.subr.mxu0 0.0
  %390 = vmatpush2.msra.mxu0 0.0
  %391 = vmatprep.subr.mxu0 0.0
  %392 = vmatpush2.msra.mxu0 0.0
  %393 = vmatprep.subr.mxu0 0.0
  %394 = vmatpush2.msra.mxu0 0.0
  %395 = vmatprep.subr.mxu0 0.0
  %396 = vmatpush2.msra.mxu0 0.0
  %397 = vmatprep.subr.mxu0 0.0
  %398 = vmatpush2.msra.mxu0 0.0
  %399 = vmatprep.subr.mxu0 0.0
  %400 = vmatpush2.msra.mxu0 0.0
  %401 = vmatprep.subr.mxu0 0.0
  %402 = vmatpush2.msra.mxu0 0.0
  %403 = vmatprep.subr.mxu0 0.0
  %404 = vmatpush2.msra.mxu0 0.0
  %405 = vmatprep.subr.mxu0 0.0
  %406 = vmatpush2.msra.mxu0 0.0
  %407 = vmatprep.subr.mxu0 0.0
  %408 = vmatpush2.msra.mxu0 0.0
  %409 = vmatprep.subr.mxu0 0.0
  %410 = vmatpush2.msra.mxu0 0.0
  %411 = vmatprep.subr.mxu0 0.0
  %412 = vmatpush2.msra.mxu0 0.0
  %413 = vmatprep.subr.mxu0 0.0
  %414 = vmatpush2.msra.mxu0 0.0
  %415 = vmatprep.subr.mxu0 0.0
  %416 = vmatpush2.msra.mxu0 0.0
  %417 = vmatprep.subr.mxu0 0.0
  %418 = vmatpush2.msra.mxu0 0.0
  %419 = vmatprep.mubr.f32.mxu0 0.0
  %420 = vmatmul.mubr.f32.gmra.mxu0 %v349
  %v421 = vpop.f32.mrf.mxu0
  %v422 = vadd.f32 %v345, %v421
  %v423 = vpop.f32.mrf.mxu0
  %424 = vdwg.mxu0
  %vm425 = vcmask 80896
  %426 = vst.msk [vmem:[%s7] sm:$0xff] %vm425, %v422
  // Predicated region
  $region30: #{net_forward.3} parent=0 // pred_check
    _
  $region31: #{net_forward.3} parent=0 // pred_check_branch
    %428 = sbr.rel (0) target = $region33
  $region32: #{net_forward.3} parent=0 // pred_region
    _
  $region33: #{net_forward.3} parent=0 // pred_fallthru
    _
  // Predicated region
  $region34: #{net_forward.3} parent=0 // pred_check
    _
  $region35: #{net_forward.3} parent=0 // pred_check_branch
    %430 = sbr.rel (0) target = $region37
  $region36: #{net_forward.3} parent=0 // pred_region
    _
  $region37: #{net_forward.3} parent=0 // pred_fallthru
    _

// kernel: net_forward.2
$region0: #{net_forward.2}
  #allocation0 [shape = 'u32[]', space=smem, size = 0x4, offset = 0x4, fixed_abs, tag = 'smem constant byte address 0x4 - core index']
  #allocation1 [shape = 'u32[144,128]{1,0:T(1,128)}', space=vmem, size = 0x12000, scoped, tag = 'internal scratch']
  #allocation2 [shape = 'f32[28,84]{1,0:T(8,128)}', space=vmem, size = 0x4000, scoped, tag = 'scratch operand']
  #allocation3 [shape = 'f32[14,84]{1,0:T(8,128)}', space=vmem, size = 0x2000, scoped, tag = 'scratch operand']
  #allocation4 [shape = 'f32[10,80]{1,0:T(8,128)}', space=vmem, size = 0x2000, scoped, tag = 'scratch operand']
  %s0 = inlined_call_operand.vmem [shape: f32[2,32,96], index: 0, kind: input, shape index: {}]
  %s1 = inlined_call_operand.vmem [shape: f32[5,96,84], index: 1, kind: input, shape index: {}]
  %s2 = inlined_call_operand.vmem [shape: f32[5,96,84], index: 2, kind: input, shape index: {}]
  %s3 = inlined_call_operand.vmem [shape: f32[1,84], index: 3, kind: input, shape index: {}]
  %s4 = inlined_call_operand.vmem [shape: f32[5,84,80], index: 4, kind: input, shape index: {}]
  %s5 = inlined_call_operand.vmem [shape: f32[5,84,80], index: 5, kind: input, shape index: {}]
  %s6 = inlined_call_operand.vmem [shape: f32[1,80], index: 6, kind: input, shape index: {}]
  %s7 = inlined_call_operand.vmem [shape: f32[2,5,80], index: 7, kind: output, shape index: {}]
  %s8 = sld [smem:[#allocation0]]
  $region61: #{net_forward.2} parent=0
    _
  %s10 = ssub.s32 1, %s8
  %s11 = scalar_select 0, %s10, %s8
  loop: start=0, step=1, limit=4
  $region2: #{net_forward.2} parent=0 // loop_pre_header
    _
  $region3: #{net_forward.2} parent=0 // loop_header
    %s13 = sphi 0, %s17
    %p14 = scmp.ge.s32.totalorder %s13, 4
    %s23 = sphi 0, %s25
    %s26 = sphi 0, %s23
    %s27 = sphi 0, %s26
    %s43 = sphi 0, %s27
    %s47 = sphi 0, %s47
    %s49 = sphi 0, %s47
    %s50 = sphi 0, %s49
    %s64 = sphi 0, %s50
    %s68 = sphi 0, %s68
    %s70 = sphi 0, %s68
    %s71 = sphi 0, %s70
    %s85 = sphi 0, %s71
    %s89 = sphi 0, %s89
    %s91 = sphi 0, %s89
    %s92 = sphi 0, %s91
    %s106 = sphi 0, %s92
    %s110 = sphi 0, %s110
    %s112 = sphi 0, %s110
    %s113 = sphi 0, %s112
    %s127 = sphi 0, %s113
    %s131 = sphi 0, %s131
    %s133 = sphi 0, %s131
    %s134 = sphi 0, %s133
    %s148 = sphi 0, %s134
    %s152 = sphi 0, %s152
    %s154 = sphi 0, %s152
    %s155 = sphi 0, %s154
    %s169 = sphi 0, %s155
    %s175 = sphi 0, %s177
    %s178 = sphi 0, %s175
    %s179 = sphi 0, %s178
    %s195 = sphi 0, %s179
  $region4: #{net_forward.2} parent=0 // loop_header_branch
    %16 = sbr.rel (%p14) target = $region8
  $region5: #{net_forward.2} parent=0 // loop_body
    %s18 = ssub.s32 %s13, 1
    %s19 = ssub.s32 %s13, 2
    %s20 = sadd.s32 %s13, 1
    %s21 = ssub.s32 %s13, %s20
    %p22 = scmp.eq.s32.totalorder %s21, 0
    %s24 = sadd.s32 %s23, 1
    %s25 = scalar_select %p22, %s23, %s24
    %p28 = pneg %p22
    %p29 = scmp.eq.s32.totalorder %s13, 1
    %p30 = por %p28, %p29
    %p31 = scmp.ne.s32.totalorder %s23, %s26
    %p32 = scmp.eq.s32.totalorder %s13, 0
    %p33 = por %p31, %p32
    %p34 = scmp.ne.s32.totalorder %s23, %s26
    %p35 = scmp.eq.s32.totalorder %s18, 1
    %p36 = por %p34, %p35
    %p37 = scmp.ne.s32.totalorder %s26, %s27
    %p38 = scmp.eq.s32.totalorder %s18, 0
    %p39 = por %p37, %p38
    %p40 = scmp.ne.s32.totalorder %s26, %s27
    %p41 = scmp.eq.s32.totalorder %s19, 1
    %p42 = por %p40, %p41
    %p44 = scmp.ne.s32.totalorder %s27, %s43
    %p45 = scmp.eq.s32.totalorder %s19, 0
    %p46 = por %p44, %p45
    %s48 = sadd.s32 %s47, 1
    %p51 = scmp.eq.s32.totalorder %s13, 1
    %p52 = scmp.ne.s32.totalorder %s47, %s49
    %p53 = scmp.eq.s32.totalorder %s13, 0
    %p54 = por %p52, %p53
    %p55 = scmp.ne.s32.totalorder %s47, %s49
    %p56 = scmp.eq.s32.totalorder %s18, 1
    %p57 = por %p55, %p56
    %p58 = scmp.ne.s32.totalorder %s49, %s50
    %p59 = scmp.eq.s32.totalorder %s18, 0
    %p60 = por %p58, %p59
    %p61 = scmp.ne.s32.totalorder %s49, %s50
    %p62 = scmp.eq.s32.totalorder %s19, 1
    %p63 = por %p61, %p62
    %p65 = scmp.ne.s32.totalorder %s50, %s64
    %p66 = scmp.eq.s32.totalorder %s19, 0
    %p67 = por %p65, %p66
    %s69 = sadd.s32 %s68, 1
    %p72 = scmp.eq.s32.totalorder %s13, 1
    %p73 = scmp.ne.s32.totalorder %s68, %s70
    %p74 = scmp.eq.s32.totalorder %s13, 0
    %p75 = por %p73, %p74
    %p76 = scmp.ne.s32.totalorder %s68, %s70
    %p77 = scmp.eq.s32.totalorder %s18, 1
    %p78 = por %p76, %p77
    %p79 = scmp.ne.s32.totalorder %s70, %s71
    %p80 = scmp.eq.s32.totalorder %s18, 0
    %p81 = por %p79, %p80
    %p82 = scmp.ne.s32.totalorder %s70, %s71
    %p83 = scmp.eq.s32.totalorder %s19, 1
    %p84 = por %p82, %p83
    %p86 = scmp.ne.s32.totalorder %s71, %s85
    %p87 = scmp.eq.s32.totalorder %s19, 0
    %p88 = por %p86, %p87
    %s90 = sadd.s32 %s89, 1
    %p93 = scmp.eq.s32.totalorder %s13, 1
    %p94 = scmp.ne.s32.totalorder %s89, %s91
    %p95 = scmp.eq.s32.totalorder %s13, 0
    %p96 = por %p94, %p95
    %p97 = scmp.ne.s32.totalorder %s89, %s91
    %p98 = scmp.eq.s32.totalorder %s18, 1
    %p99 = por %p97, %p98
    %p100 = scmp.ne.s32.totalorder %s91, %s92
    %p101 = scmp.eq.s32.totalorder %s18, 0
    %p102 = por %p100, %p101
    %p103 = scmp.ne.s32.totalorder %s91, %s92
    %p104 = scmp.eq.s32.totalorder %s19, 1
    %p105 = por %p103, %p104
    %p107 = scmp.ne.s32.totalorder %s92, %s106
    %p108 = scmp.eq.s32.totalorder %s19, 0
    %p109 = por %p107, %p108
    %s111 = sadd.s32 %s110, 1
    %p114 = scmp.eq.s32.totalorder %s13, 1
    %p115 = scmp.ne.s32.totalorder %s110, %s112
    %p116 = scmp.eq.s32.totalorder %s13, 0
    %p117 = por %p115, %p116
    %p118 = scmp.ne.s32.totalorder %s110, %s112
    %p119 = scmp.eq.s32.totalorder %s18, 1
    %p120 = por %p118, %p119
    %p121 = scmp.ne.s32.totalorder %s112, %s113
    %p122 = scmp.eq.s32.totalorder %s18, 0
    %p123 = por %p121, %p122
    %p124 = scmp.ne.s32.totalorder %s112, %s113
    %p125 = scmp.eq.s32.totalorder %s19, 1
    %p126 = por %p124, %p125
    %p128 = scmp.ne.s32.totalorder %s113, %s127
    %p129 = scmp.eq.s32.totalorder %s19, 0
    %p130 = por %p128, %p129
    %s132 = sadd.s32 %s131, 1
    %p135 = scmp.eq.s32.totalorder %s13, 1
    %p136 = scmp.ne.s32.totalorder %s131, %s133
    %p137 = scmp.eq.s32.totalorder %s13, 0
    %p138 = por %p136, %p137
    %p139 = scmp.ne.s32.totalorder %s131, %s133
    %p140 = scmp.eq.s32.totalorder %s18, 1
    %p141 = por %p139, %p140
    %p142 = scmp.ne.s32.totalorder %s133, %s134
    %p143 = scmp.eq.s32.totalorder %s18, 0
    %p144 = por %p142, %p143
    %p145 = scmp.ne.s32.totalorder %s133, %s134
    %p146 = scmp.eq.s32.totalorder %s19, 1
    %p147 = por %p145, %p146
    %p149 = scmp.ne.s32.totalorder %s134, %s148
    %p150 = scmp.eq.s32.totalorder %s19, 0
    %p151 = por %p149, %p150
    %s153 = sadd.s32 %s152, 1
    %p156 = scmp.eq.s32.totalorder %s13, 1
    %p157 = scmp.ne.s32.totalorder %s152, %s154
    %p158 = scmp.eq.s32.totalorder %s13, 0
    %p159 = por %p157, %p158
    %p160 = scmp.ne.s32.totalorder %s152, %s154
    %p161 = scmp.eq.s32.totalorder %s18, 1
    %p162 = por %p160, %p161
    %p163 = scmp.ne.s32.totalorder %s154, %s155
    %p164 = scmp.eq.s32.totalorder %s18, 0
    %p165 = por %p163, %p164
    %p166 = scmp.ne.s32.totalorder %s154, %s155
    %p167 = scmp.eq.s32.totalorder %s19, 1
    %p168 = por %p166, %p167
    %p170 = scmp.ne.s32.totalorder %s155, %s169
    %p171 = scmp.eq.s32.totalorder %s19, 0
    %p172 = por %p170, %p171
    %s173 = ssub.s32 %s13, %s20
    %p174 = scmp.eq.s32.totalorder %s173, 0
    %s176 = sadd.s32 %s175, 1
    %s177 = scalar_select %p174, %s175, %s176
    %p180 = pneg %p174
    %p181 = scmp.eq.s32.totalorder %s13, 1
    %p182 = por %p180, %p181
    %p183 = scmp.ne.s32.totalorder %s175, %s178
    %p184 = scmp.eq.s32.totalorder %s13, 0
    %p185 = por %p183, %p184
    %p186 = scmp.ne.s32.totalorder %s175, %s178
    %p187 = scmp.eq.s32.totalorder %s18, 1
    %p188 = por %p186, %p187
    %p189 = scmp.ne.s32.totalorder %s178, %s179
    %p190 = scmp.eq.s32.totalorder %s18, 0
    %p191 = por %p189, %p190
    %p192 = scmp.ne.s32.totalorder %s178, %s179
    %p193 = scmp.eq.s32.totalorder %s19, 1
    %p194 = por %p192, %p193
    %p196 = scmp.ne.s32.totalorder %s179, %s195
    %p197 = scmp.eq.s32.totalorder %s19, 0
    %p198 = por %p196, %p197
    %p199 = scmp.le.s32.totalorder 1, %s13
    %p200 = scmp.lt.s32.totalorder %s13, 3
    %p201 = pnand %p199, %p200
    %p202 = pneg %p201
    // Predicated region
    $region9: #{net_forward.2} parent=5 // pred_check
      _
    $region10: #{net_forward.2} parent=5 // pred_check_branch
      %204 = sbr.rel (%p201) target = $region12
    $region11: #{net_forward.2} parent=5 // pred_region
      %s205 = ssub.s32 %s13, 1
      // Predicated region
      $region13: #{net_forward.2} parent=11 // pred_check
        %p206 = pneg %p60
      $region14: #{net_forward.2} parent=11 // pred_check_branch
        %208 = sbr.rel (%p206) target = $region16
      $region15: #{net_forward.2} parent=11 // pred_region
        _
      $region16: #{net_forward.2} parent=11 // pred_fallthru
        _
      // Predicated region
      $region17: #{net_forward.2} parent=11 // pred_check
        %p209 = pneg %p81
      $region18: #{net_forward.2} parent=11 // pred_check_branch
        %211 = sbr.rel (%p209) target = $region20
      $region19: #{net_forward.2} parent=11 // pred_region
        _
      $region20: #{net_forward.2} parent=11 // pred_fallthru
        _
      // Predicated region
      $region21: #{net_forward.2} parent=11 // pred_check
        %p212 = pneg %p102
      $region22: #{net_forward.2} parent=11 // pred_check_branch
        %214 = sbr.rel (%p212) target = $region24
      $region23: #{net_forward.2} parent=11 // pred_region
        _
      $region24: #{net_forward.2} parent=11 // pred_fallthru
        _
      // Predicated region
      $region25: #{net_forward.2} parent=11 // pred_check
        %p215 = pneg %p123
      $region26: #{net_forward.2} parent=11 // pred_check_branch
        %217 = sbr.rel (%p215) target = $region28
      $region27: #{net_forward.2} parent=11 // pred_region
        _
      $region28: #{net_forward.2} parent=11 // pred_fallthru
        _
      // Predicated region
      $region29: #{net_forward.2} parent=11 // pred_check
        %p218 = pneg %p144
      $region30: #{net_forward.2} parent=11 // pred_check_branch
        %220 = sbr.rel (%p218) target = $region32
      $region31: #{net_forward.2} parent=11 // pred_region
        _
      $region32: #{net_forward.2} parent=11 // pred_fallthru
        _
      // Predicated region
      $region33: #{net_forward.2} parent=11 // pred_check
        %p221 = pneg %p165
      $region34: #{net_forward.2} parent=11 // pred_check_branch
        %223 = sbr.rel (%p221) target = $region36
      $region35: #{net_forward.2} parent=11 // pred_region
        _
      $region36: #{net_forward.2} parent=11 // pred_fallthru
        _
    $region12: #{net_forward.2} parent=5 // pred_fallthru
      _
    %p224 = scmp.lt.s32.totalorder %s13, 2
    // Predicated region
    $region37: #{net_forward.2} parent=5 // pred_check
      %p225 = pneg %p224
    $region38: #{net_forward.2} parent=5 // pred_check_branch
      %227 = sbr.rel (%p225) target = $region40
    $region39: #{net_forward.2} parent=5 // pred_region
      // Predicated region
      $region41: #{net_forward.2} parent=39 // pred_check
        %p228 = pneg %p33
      $region42: #{net_forward.2} parent=39 // pred_check_branch
        %230 = sbr.rel (%p228) target = $region44
      $region43: #{net_forward.2} parent=39 // pred_region
        %p231 = scmp.lt.s32.totalorder %s13, 1
        %s232 = scalar_select %p231, %s13, 1
        %s233 = smul.addr %s232, 4
        %s234 = smul.addr %s233, 8
        %s235 = scalar_lea.vmem %s0, %s234
      $region44: #{net_forward.2} parent=39 // pred_fallthru
        _
    $region40: #{net_forward.2} parent=5 // pred_fallthru
      _
    %p236 = scmp.le.s32.totalorder 1, %s13
    %p237 = scmp.lt.s32.totalorder %s13, 3
    %p238 = pnand %p236, %p237
    %p239 = pneg %p238
    // Predicated region
    $region45: #{net_forward.2} parent=5 // pred_check
      _
    $region46: #{net_forward.2} parent=5 // pred_check_branch
      %241 = sbr.rel (%p238) target = $region48
    $region47: #{net_forward.2} parent=5 // pred_region
      %s242 = ssub.s32 %s13, 1
      %p243 = scmp.lt.s32.totalorder %s18, 1
      %s244 = scalar_select %p243, %s18, 1
      %s245 = smul.addr %s244, 4
      %s246 = smul.addr %s245, 8
      %s247 = scalar_lea.vmem %s0, %s246
      %p248 = pneg %p39
      %p249 = pneg %p36
      %p250 = pneg %p60
      %p251 = pneg %p57
      %p252 = pneg %p81
      %p253 = pneg %p78
      %p254 = pneg %p102
      %p255 = pneg %p99
      %p256 = pneg %p123
      %p257 = pneg %p120
      %p258 = pneg %p144
      %p259 = pneg %p141
      %p260 = pneg %p165
      %p261 = pneg %p162
      %p262 = pneg %p191
      %p263 = pneg %p188
      %p264 = scmp.lt.s32.totalorder %s18, 1
      %s265 = scalar_select %p264, %s18, 1
      %s266 = smul.addr %s265, 8
      %s267 = scalar_lea.vmem %s7, %s266
      %p268 = scmp.lt.s32.totalorder %s18, 1
      %s269 = scalar_select %p268, %s18, 1
      %s270 = smul.addr %s269, 4
      %s271 = smul.addr %s270, 8
      %s272 = scalar_lea.vmem %s0, %s271
      %p273 = scmp.lt.s32.totalorder %s18, 1
      %s274 = scalar_select %p273, %s18, 1
      %s275 = smul.addr %s274, 8
      %s276 = scalar_lea.vmem %s7, %s275
      %v277 = vld [vmem:[%s272] sm:$0xff]
      %v278 = vld [vmem:[%s272 + $0x8] sm:$0xff]
      %v279 = vld [vmem:[%s272 + $0x10] sm:$0xff]
      %v280 = vld [vmem:[%s272 + $0x18] sm:$0xf]
      %v281 = vld [vmem:[%s1] sm:$0xff]
      %v282 = vld [vmem:[%s1 + $0x8] sm:$0xff]
      %v283 = vld [vmem:[%s1 + $0x10] sm:$0xff]
      %v284 = vld [vmem:[%s1 + $0x18] sm:$0xff]
      %v285 = vld [vmem:[%s1 + $0x20] sm:$0xff]
      %v286 = vld [vmem:[%s1 + $0x28] sm:$0xff]
      %v287 = vld [vmem:[%s1 + $0x30] sm:$0xff]
      %v288 = vld [vmem:[%s1 + $0x38] sm:$0xff]
      %v289 = vld [vmem:[%s1 + $0x40] sm:$0xff]
      %v290 = vld [vmem:[%s1 + $0x48] sm:$0xff]
      %v291 = vld [vmem:[%s1 + $0x50] sm:$0xff]
      %v292 = vld [vmem:[%s1 + $0x58] sm:$0xff]
      %v293 = vld [vmem:[%s2] sm:$0xff]
      %v294 = vld [vmem:[%s2 + $0x8] sm:$0xff]
      %v295 = vld [vmem:[%s2 + $0x10] sm:$0xff]
      %v296 = vld [vmem:[%s2 + $0x18] sm:$0xff]
      %v297 = vld [vmem:[%s2 + $0x20] sm:$0xff]
      %v298 = vld [vmem:[%s2 + $0x28] sm:$0xff]
      %v299 = vld [vmem:[%s2 + $0x30] sm:$0xff]
      %v300 = vld [vmem:[%s2 + $0x38] sm:$0xff]
      %v301 = vld [vmem:[%s2 + $0x40] sm:$0xff]
      %v302 = vld [vmem:[%s2 + $0x48] sm:$0xff]
      %v303 = vld [vmem:[%s2 + $0x50] sm:$0xff]
      %v304 = vld [vmem:[%s2 + $0x58] sm:$0xff]
      %v305 = vld [vmem:[%s272 + $0x1] sm:$0xff]
      %v306 = vld [vmem:[%s272 + $0x9] sm:$0xff]
      %v307 = vld [vmem:[%s272 + $0x11] sm:$0xff]
      %v308 = vld [vmem:[%s272 + $0x19] sm:$0xf]
      %s309 = scalar_lea.vmem %s1, 96
      %v310 = vld [vmem:[%s309] sm:$0xff]
      %v311 = vld [vmem:[%s309 + $0x8] sm:$0xff]
      %v312 = vld [vmem:[%s309 + $0x10] sm:$0xff]
      %v313 = vld [vmem:[%s309 + $0x18] sm:$0xff]
      %v314 = vld [vmem:[%s309 + $0x20] sm:$0xff]
      %v315 = vld [vmem:[%s309 + $0x28] sm:$0xff]
      %v316 = vld [vmem:[%s309 + $0x30] sm:$0xff]
      %v317 = vld [vmem:[%s309 + $0x38] sm:$0xff]
      %v318 = vld [vmem:[%s309 + $0x40] sm:$0xff]
      %v319 = vld [vmem:[%s309 + $0x48] sm:$0xff]
      %v320 = vld [vmem:[%s309 + $0x50] sm:$0xff]
      %v321 = vld [vmem:[%s309 + $0x58] sm:$0xff]
      %vm322 = vcmask 785408
      %v324 = vsel %vm322, %v305, 0
      %v327 = vsel %vm322, %v306, 0
      %v330 = vsel %vm322, %v307, 0
      %v333 = vsel %vm322, %v308, 0
      %335 = vmatprep.subr.mxu0 0.0
      %336 = vmatpush1.msra.mxu0 0.0
      %337 = vmatprep.subr.mxu0 0.0
      %338 = vmatpush1.msra.mxu0 0.0
      %339 = vmatprep.subr.mxu0 0.0
      %340 = vmatpush1.msra.mxu0 0.0
      %341 = vmatprep.subr.mxu0 0.0
      %342 = vmatpush1.msra.mxu0 0.0
      %343 = vmatprep.subr.mxu0 0.0
      %344 = vmatpush1.msra.mxu0 %v321
      %345 = vmatprep.subr.mxu0 0.0
      %346 = vmatpush1.msra.mxu0 %v320
      %347 = vmatprep.subr.mxu0 0.0
      %348 = vmatpush1.msra.mxu0 %v319
      %349 = vmatprep.subr.mxu0 0.0
      %350 = vmatpush1.msra.mxu0 %v318
      %351 = vmatprep.subr.mxu0 0.0
      %352 = vmatpush1.msra.mxu0 %v317
      %353 = vmatprep.subr.mxu0 0.0
      %354 = vmatpush1.msra.mxu0 %v316
      %355 = vmatprep.subr.mxu0 0.0
      %356 = vmatpush1.msra.mxu0 %v315
      %357 = vmatprep.subr.mxu0 0.0
      %358 = vmatpush1.msra.mxu0 %v314
      %359 = vmatprep.subr.mxu0 0.0
      %360 = vmatpush1.msra.mxu0 %v313
      %361 = vmatprep.subr.mxu0 0.0
      %362 = vmatpush1.msra.mxu0 %v312
      %363 = vmatprep.subr.mxu0 0.0
      %364 = vmatpush1.msra.mxu0 %v311
      %365 = vmatprep.subr.mxu0 0.0
      %366 = vmatpush1.msra.mxu0 %v310
      %367 = vmatprep.subr.mxu0 0.0
      %368 = vmatpush2.msra.mxu0 0.0
      %369 = vmatprep.subr.mxu0 0.0
      %370 = vmatpush2.msra.mxu0 0.0
      %371 = vmatprep.subr.mxu0 0.0
      %372 = vmatpush2.msra.mxu0 0.0
      %373 = vmatprep.subr.mxu0 0.0
      %374 = vmatpush2.msra.mxu0 0.0
      %375 = vmatprep.subr.mxu0 0.0
      %376 = vmatpush2.msra.mxu0 0.0
      %377 = vmatprep.subr.mxu0 0.0
      %378 = vmatpush2.msra.mxu0 0.0
      %379 = vmatprep.subr.mxu0 0.0
      %380 = vmatpush2.msra.mxu0 0.0
      %381 = vmatprep.subr.mxu0 0.0
      %382 = vmatpush2.msra.mxu0 0.0
      %383 = vmatprep.subr.mxu0 0.0
      %384 = vmatpush2.msra.mxu0 0.0
      %385 = vmatprep.subr.mxu0 0.0
      %386 = vmatpush2.msra.mxu0 0.0
      %387 = vmatprep.subr.mxu0 0.0
      %388 = vmatpush2.msra.mxu0 0.0
      %389 = vmatprep.subr.mxu0 0.0
      %390 = vmatpush2.msra.mxu0 0.0
      %391 = vmatprep.subr.mxu0 0.0
      %392 = vmatpush2.msra.mxu0 0.0
      %393 = vmatprep.subr.mxu0 0.0
      %394 = vmatpush2.msra.mxu0 0.0
      %395 = vmatprep.subr.mxu0 0.0
      %396 = vmatpush2.msra.mxu0 0.0
      %397 = vmatprep.subr.mxu0 0.0
      %398 = vmatpush2.msra.mxu0 0.0
      %399 = vmatprep.mubr.f32.mxu0 0.0
      %400 = vmatmul.mubr.f32.gmra.mxu0 %v324
      %v401 = vpop.f32.mrf.mxu0
      %v402 = vadd.f32 0.0, %v401
      %v403 = vpop.f32.mrf.mxu0
      %404 = vmatprep.mubr.f32.mxu0 0.0
      %405 = vmatmul.mubr.f32.gmra.mxu0 %v327
      %v406 = vpop.f32.mrf.mxu0
      %v407 = vadd.f32 0.0, %v406
      %v408 = vpop.f32.mrf.mxu0
      %409 = vmatprep.mubr.f32.mxu0 0.0
      %410 = vmatmul.mubr.f32.gmra.mxu0 %v330
      %v411 = vpop.f32.mrf.mxu0
      %v412 = vadd.f32 0.0, %v411
      %v413 = vpop.f32.mrf.mxu0
      %414 = vmatprep.mubr.f32.mxu0 0.0
      %415 = vmatmul.mubr.f32.gmra.mxu0 %v333
      %v416 = vpop.f32.mrf.mxu0
      %v417 = vadd.f32 0.0, %v416
      %v418 = vpop.f32.mrf.mxu0
      %419 = vdwg.mxu0
      %v421 = vsel %vm322, %v277, 0
      %v424 = vsel %vm322, %v278, 0
      %v427 = vsel %vm322, %v279, 0
      %v430 = vsel %vm322, %v280, 0
      %432 = vmatprep.subr.mxu0 0.0
      %433 = vmatpush1.msra.mxu0 0.0
      %434 = vmatprep.subr.mxu0 0.0
      %435 = vmatpush1.msra.mxu0 0.0
      %436 = vmatprep.subr.mxu0 0.0
      %437 = vmatpush1.msra.mxu0 0.0
      %438 = vmatprep.subr.mxu0 0.0
      %439 = vmatpush1.msra.mxu0 0.0
      %440 = vmatprep.subr.mxu0 0.0
      %441 = vmatpush1.msra.mxu0 %v292
      %442 = vmatprep.subr.mxu0 0.0
      %443 = vmatpush1.msra.mxu0 %v291
      %444 = vmatprep.subr.mxu0 0.0
      %445 = vmatpush1.msra.mxu0 %v290
      %446 = vmatprep.subr.mxu0 0.0
      %447 = vmatpush1.msra.mxu0 %v289
      %448 = vmatprep.subr.mxu0 0.0
      %449 = vmatpush1.msra.mxu0 %v288
      %450 = vmatprep.subr.mxu0 0.0
      %451 = vmatpush1.msra.mxu0 %v287
      %452 = vmatprep.subr.mxu0 0.0
      %453 = vmatpush1.msra.mxu0 %v286
      %454 = vmatprep.subr.mxu0 0.0
      %455 = vmatpush1.msra.mxu0 %v285
      %456 = vmatprep.subr.mxu0 0.0
      %457 = vmatpush1.msra.mxu0 %v284
      %458 = vmatprep.subr.mxu0 0.0
      %459 = vmatpush1.msra.mxu0 %v283
      %460 = vmatprep.subr.mxu0 0.0
      %461 = vmatpush1.msra.mxu0 %v282
      %462 = vmatprep.subr.mxu0 0.0
      %463 = vmatpush1.msra.mxu0 %v281
      %464 = vmatprep.subr.mxu0 0.0
      %465 = vmatpush2.msra.mxu0 0.0
      %466 = vmatprep.subr.mxu0 0.0
      %467 = vmatpush2.msra.mxu0 0.0
      %468 = vmatprep.subr.mxu0 0.0
      %469 = vmatpush2.msra.mxu0 0.0
      %470 = vmatprep.subr.mxu0 0.0
      %471 = vmatpush2.msra.mxu0 0.0
      %472 = vmatprep.subr.mxu0 0.0
      %473 = vmatpush2.msra.mxu0 0.0
      %474 = vmatprep.subr.mxu0 0.0
      %475 = vmatpush2.msra.mxu0 0.0
      %476 = vmatprep.subr.mxu0 0.0
      %477 = vmatpush2.msra.mxu0 0.0
      %478 = vmatprep.subr.mxu0 0.0
      %479 = vmatpush2.msra.mxu0 0.0
      %480 = vmatprep.subr.mxu0 0.0
      %481 = vmatpush2.msra.mxu0 0.0
      %482 = vmatprep.subr.mxu0 0.0
      %483 = vmatpush2.msra.mxu0 0.0
      %484 = vmatprep.subr.mxu0 0.0
      %485 = vmatpush2.msra.mxu0 0.0
      %486 = vmatprep.subr.mxu0 0.0
      %487 = vmatpush2.msra.mxu0 0.0
      %488 = vmatprep.subr.mxu0 0.0
      %489 = vmatpush2.msra.mxu0 0.0
      %490 = vmatprep.subr.mxu0 0.0
      %491 = vmatpush2.msra.mxu0 0.0
      %492 = vmatprep.subr.mxu0 0.0
      %493 = vmatpush2.msra.mxu0 0.0
      %494 = vmatprep.subr.mxu0 0.0
      %495 = vmatpush2.msra.mxu0 0.0
      %496 = vmatprep.mubr.f32.mxu0 0.0
      %497 = vmatmul.mubr.f32.gmra.mxu0 %v421
      %v498 = vpop.f32.mrf.mxu0
      %v499 = vadd.f32 %v402, %v498
      %v500 = vpop.f32.mrf.mxu0
      %501 = vmatprep.mubr.f32.mxu0 0.0
      %502 = vmatmul.mubr.f32.gmra.mxu0 %v424
      %v503 = vpop.f32.mrf.mxu0
      %v504 = vadd.f32 %v407, %v503
      %v505 = vpop.f32.mrf.mxu0
      %506 = vmatprep.mubr.f32.mxu0 0.0
      %507 = vmatmul.mubr.f32.gmra.mxu0 %v427
      %v508 = vpop.f32.mrf.mxu0
      %v509 = vadd.f32 %v412, %v508
      %v510 = vpop.f32.mrf.mxu0
      %511 = vmatprep.mubr.f32.mxu0 0.0
      %512 = vmatmul.mubr.f32.gmra.mxu0 %v430
      %v513 = vpop.f32.mrf.mxu0
      %v514 = vadd.f32 %v417, %v513
      %v515 = vpop.f32.mrf.mxu0
      %516 = vdwg.mxu0
      %s517 = scalar_lea.vmem %s2, 96
      %v518 = vld [vmem:[%s517] sm:$0xff]
      %v519 = vld [vmem:[%s517 + $0x8] sm:$0xff]
      %v520 = vld [vmem:[%s517 + $0x10] sm:$0xff]
      %v521 = vld [vmem:[%s517 + $0x18] sm:$0xff]
      %v522 = vld [vmem:[%s517 + $0x20] sm:$0xff]
      %v523 = vld [vmem:[%s517 + $0x28] sm:$0xff]
      %v524 = vld [vmem:[%s517 + $0x30] sm:$0xff]
      %v525 = vld [vmem:[%s517 + $0x38] sm:$0xff]
      %v526 = vld [vmem:[%s517 + $0x40] sm:$0xff]
      %v527 = vld [vmem:[%s517 + $0x48] sm:$0xff]
      %v528 = vld [vmem:[%s517 + $0x50] sm:$0xff]
      %v529 = vld [vmem:[%s517 + $0x58] sm:$0xff]
      %530 = vmatprep.subr.mxu0 0.0
      %531 = vmatpush1.msra.mxu0 0.0
      %532 = vmatprep.subr.mxu0 0.0
      %533 = vmatpush1.msra.mxu0 0.0
      %534 = vmatprep.subr.mxu0 0.0
      %535 = vmatpush1.msra.mxu0 0.0
      %536 = vmatprep.subr.mxu0 0.0
      %537 = vmatpush1.msra.mxu0 0.0
      %538 = vmatprep.subr.mxu0 0.0
      %539 = vmatpush1.msra.mxu0 %v529
      %540 = vmatprep.subr.mxu0 0.0
      %541 = vmatpush1.msra.mxu0 %v528
      %542 = vmatprep.subr.mxu0 0.0
      %543 = vmatpush1.msra.mxu0 %v527
      %544 = vmatprep.subr.mxu0 0.0
      %545 = vmatpush1.msra.mxu0 %v526
      %546 = vmatprep.subr.mxu0 0.0
      %547 = vmatpush1.msra.mxu0 %v525
      %548 = vmatprep.subr.mxu0 0.0
      %549 = vmatpush1.msra.mxu0 %v524
      %550 = vmatprep.subr.mxu0 0.0
      %551 = vmatpush1.msra.mxu0 %v523
      %552 = vmatprep.subr.mxu0 0.0
      %553 = vmatpush1.msra.mxu0 %v522
      %554 = vmatprep.subr.mxu0 0.0
      %555 = vmatpush1.msra.mxu0 %v521
      %556 = vmatprep.subr.mxu0 0.0
      %557 = vmatpush1.msra.mxu0 %v520
      %558 = vmatprep.subr.mxu0 0.0
      %559 = vmatpush1.msra.mxu0 %v519
      %560 = vmatprep.subr.mxu0 0.0
      %561 = vmatpush1.msra.mxu0 %v518
      %562 = vmatprep.subr.mxu0 0.0
      %563 = vmatpush2.msra.mxu0 0.0
      %564 = vmatprep.subr.mxu0 0.0
      %565 = vmatpush2.msra.mxu0 0.0
      %566 = vmatprep.subr.mxu0 0.0
      %567 = vmatpush2.msra.mxu0 0.0
      %568 = vmatprep.subr.mxu0 0.0
      %569 = vmatpush2.msra.mxu0 0.0
      %570 = vmatprep.subr.mxu0 0.0
      %571 = vmatpush2.msra.mxu0 0.0
      %572 = vmatprep.subr.mxu0 0.0
      %573 = vmatpush2.msra.mxu0 0.0
      %574 = vmatprep.subr.mxu0 0.0
      %575 = vmatpush2.msra.mxu0 0.0
      %576 = vmatprep.subr.mxu0 0.0
      %577 = vmatpush2.msra.mxu0 0.0
      %578 = vmatprep.subr.mxu0 0.0
      %579 = vmatpush2.msra.mxu0 0.0
      %580 = vmatprep.subr.mxu0 0.0
      %581 = vmatpush2.msra.mxu0 0.0
      %582 = vmatprep.subr.mxu0 0.0
      %583 = vmatpush2.msra.mxu0 0.0
      %584 = vmatprep.subr.mxu0 0.0
      %585 = vmatpush2.msra.mxu0 0.0
      %586 = vmatprep.subr.mxu0 0.0
      %587 = vmatpush2.msra.mxu0 0.0
      %588 = vmatprep.subr.mxu0 0.0
      %589 = vmatpush2.msra.mxu0 0.0
      %590 = vmatprep.subr.mxu0 0.0
      %591 = vmatpush2.msra.mxu0 0.0
      %592 = vmatprep.subr.mxu0 0.0
      %593 = vmatpush2.msra.mxu0 0.0
      %594 = vmatprep.mubr.f32.mxu0 0.0
      %595 = vmatmul.mubr.f32.gmra.mxu0 %v324
      %v596 = vpop.f32.mrf.mxu0
      %v597 = vadd.f32 0.0, %v596
      %v598 = vpop.f32.mrf.mxu0
      %599 = vmatprep.mubr.f32.mxu0 0.0
      %600 = vmatmul.mubr.f32.gmra.mxu0 %v327
      %v601 = vpop.f32.mrf.mxu0
      %v602 = vadd.f32 0.0, %v601
      %v603 = vpop.f32.mrf.mxu0
      %604 = vmatprep.mubr.f32.mxu0 0.0
      %605 = vmatmul.mubr.f32.gmra.mxu0 %v330
      %v606 = vpop.f32.mrf.mxu0
      %v607 = vadd.f32 0.0, %v606
      %v608 = vpop.f32.mrf.mxu0
      %609 = vmatprep.mubr.f32.mxu0 0.0
      %610 = vmatmul.mubr.f32.gmra.mxu0 %v333
      %v611 = vpop.f32.mrf.mxu0
      %v612 = vadd.f32 0.0, %v611
      %v613 = vpop.f32.mrf.mxu0
      %614 = vdwg.mxu0
      %615 = vmatprep.subr.mxu0 0.0
      %616 = vmatpush1.msra.mxu0 0.0
      %617 = vmatprep.subr.mxu0 0.0
      %618 = vmatpush1.msra.mxu0 0.0
      %619 = vmatprep.subr.mxu0 0.0
      %620 = vmatpush1.msra.mxu0 0.0
      %621 = vmatprep.subr.mxu0 0.0
      %622 = vmatpush1.msra.mxu0 0.0
      %623 = vmatprep.subr.mxu0 0.0
      %624 = vmatpush1.msra.mxu0 %v304
      %625 = vmatprep.subr.mxu0 0.0
      %626 = vmatpush1.msra.mxu0 %v303
      %627 = vmatprep.subr.mxu0 0.0
      %628 = vmatpush1.msra.mxu0 %v302
      %629 = vmatprep.subr.mxu0 0.0
      %630 = vmatpush1.msra.mxu0 %v301
      %631 = vmatprep.subr.mxu0 0.0
      %632 = vmatpush1.msra.mxu0 %v300
      %633 = vmatprep.subr.mxu0 0.0
      %634 = vmatpush1.msra.mxu0 %v299
      %635 = vmatprep.subr.mxu0 0.0
      %636 = vmatpush1.msra.mxu0 %v298
      %637 = vmatprep.subr.mxu0 0.0
      %638 = vmatpush1.msra.mxu0 %v297
      %639 = vmatprep.subr.mxu0 0.0
      %640 = vmatpush1.msra.mxu0 %v296
      %641 = vmatprep.subr.mxu0 0.0
      %642 = vmatpush1.msra.mxu0 %v295
      %643 = vmatprep.subr.mxu0 0.0
      %644 = vmatpush1.msra.mxu0 %v294
      %645 = vmatprep.subr.mxu0 0.0
      %646 = vmatpush1.msra.mxu0 %v293
      %647 = vmatprep.subr.mxu0 0.0
      %648 = vmatpush2.msra.mxu0 0.0
      %649 = vmatprep.subr.mxu0 0.0
      %650 = vmatpush2.msra.mxu0 0.0
      %651 = vmatprep.subr.mxu0 0.0
      %652 = vmatpush2.msra.mxu0 0.0
      %653 = vmatprep.subr.mxu0 0.0
      %654 = vmatpush2.msra.mxu0 0.0
      %655 = vmatprep.subr.mxu0 0.0
      %656 = vmatpush2.msra.mxu0 0.0
      %657 = vmatprep.subr.mxu0 0.0
      %658 = vmatpush2.msra.mxu0 0.0
      %659 = vmatprep.subr.mxu0 0.0
      %660 = vmatpush2.msra.mxu0 0.0
      %661 = vmatprep.subr.mxu0 0.0
      %662 = vmatpush2.msra.mxu0 0.0
      %663 = vmatprep.subr.mxu0 0.0
      %664 = vmatpush2.msra.mxu0 0.0
      %665 = vmatprep.subr.mxu0 0.0
      %666 = vmatpush2.msra.mxu0 0.0
      %667 = vmatprep.subr.mxu0 0.0
      %668 = vmatpush2.msra.mxu0 0.0
      %669 = vmatprep.subr.mxu0 0.0
      %670 = vmatpush2.msra.mxu0 0.0
      %671 = vmatprep.subr.mxu0 0.0
      %672 = vmatpush2.msra.mxu0 0.0
      %673 = vmatprep.subr.mxu0 0.0
      %674 = vmatpush2.msra.mxu0 0.0
      %675 = vmatprep.subr.mxu0 0.0
      %676 = vmatpush2.msra.mxu0 0.0
      %677 = vmatprep.subr.mxu0 0.0
      %678 = vmatpush2.msra.mxu0 0.0
      %679 = vmatprep.mubr.f32.mxu0 0.0
      %680 = vmatmul.mubr.f32.gmra.mxu0 %v421
      %v681 = vpop.f32.mrf.mxu0
      %v682 = vadd.f32 %v597, %v681
      %v683 = vpop.f32.mrf.mxu0
      %684 = vmatprep.mubr.f32.mxu0 0.0
      %685 = vmatmul.mubr.f32.gmra.mxu0 %v424
      %v686 = vpop.f32.mrf.mxu0
      %v687 = vadd.f32 %v602, %v686
      %v688 = vpop.f32.mrf.mxu0
      %689 = vmatprep.mubr.f32.mxu0 0.0
      %690 = vmatmul.mubr.f32.gmra.mxu0 %v427
      %v691 = vpop.f32.mrf.mxu0
      %v692 = vadd.f32 %v607, %v691
      %v693 = vpop.f32.mrf.mxu0
      %694 = vmatprep.mubr.f32.mxu0 0.0
      %695 = vmatmul.mubr.f32.gmra.mxu0 %v430
      %v696 = vpop.f32.mrf.mxu0
      %v697 = vadd.f32 %v612, %v696
      %v698 = vpop.f32.mrf.mxu0
      %699 = vdwg.mxu0
      %v700 = vld [vmem:[%s272 + $0x2] sm:$0xff]
      %v701 = vld [vmem:[%s272 + $0xa] sm:$0xff]
      %v702 = vld [vmem:[%s272 + $0x12] sm:$0xff]
      %v703 = vld [vmem:[%s272 + $0x1a] sm:$0xf]
      %s704 = scalar_lea.vmem %s1, 192
      %v705 = vld [vmem:[%s704] sm:$0xff]
      %v706 = vld [vmem:[%s704 + $0x8] sm:$0xff]
      %v707 = vld [vmem:[%s704 + $0x10] sm:$0xff]
      %v708 = vld [vmem:[%s704 + $0x18] sm:$0xff]
      %v709 = vld [vmem:[%s704 + $0x20] sm:$0xff]
      %v710 = vld [vmem:[%s704 + $0x28] sm:$0xff]
      %v711 = vld [vmem:[%s704 + $0x30] sm:$0xff]
      %v712 = vld [vmem:[%s704 + $0x38] sm:$0xff]
      %v713 = vld [vmem:[%s704 + $0x40] sm:$0xff]
      %v714 = vld [vmem:[%s704 + $0x48] sm:$0xff]
      %v715 = vld [vmem:[%s704 + $0x50] sm:$0xff]
      %v716 = vld [vmem:[%s704 + $0x58] sm:$0xff]
      %v718 = vsel %vm322, %v700, 0
      %v721 = vsel %vm322, %v701, 0
      %v724 = vsel %vm322, %v702, 0
      %v727 = vsel %vm322, %v703, 0
      %729 = vmatprep.subr.mxu0 0.0
      %730 = vmatpush1.msra.mxu0 0.0
      %731 = vmatprep.subr.mxu0 0.0
      %732 = vmatpush1.msra.mxu0 0.0
      %733 = vmatprep.subr.mxu0 0.0
      %734 = vmatpush1.msra.mxu0 0.0
      %735 = vmatprep.subr.mxu0 0.0
      %736 = vmatpush1.msra.mxu0 0.0
      %737 = vmatprep.subr.mxu0 0.0
      %738 = vmatpush1.msra.mxu0 %v716
      %739 = vmatprep.subr.mxu0 0.0
      %740 = vmatpush1.msra.mxu0 %v715
      %741 = vmatprep.subr.mxu0 0.0
      %742 = vmatpush1.msra.mxu0 %v714
      %743 = vmatprep.subr.mxu0 0.0
      %744 = vmatpush1.msra.mxu0 %v713
      %745 = vmatprep.subr.mxu0 0.0
      %746 = vmatpush1.msra.mxu0 %v712
      %747 = vmatprep.subr.mxu0 0.0
      %748 = vmatpush1.msra.mxu0 %v711
      %749 = vmatprep.subr.mxu0 0.0
      %750 = vmatpush1.msra.mxu0 %v710
      %751 = vmatprep.subr.mxu0 0.0
      %752 = vmatpush1.msra.mxu0 %v709
      %753 = vmatprep.subr.mxu0 0.0
      %754 = vmatpush1.msra.mxu0 %v708
      %755 = vmatprep.subr.mxu0 0.0
      %756 = vmatpush1.msra.mxu0 %v707
      %757 = vmatprep.subr.mxu0 0.0
      %758 = vmatpush1.msra.mxu0 %v706
      %759 = vmatprep.subr.mxu0 0.0
      %760 = vmatpush1.msra.mxu0 %v705
      %761 = vmatprep.subr.mxu0 0.0
      %762 = vmatpush2.msra.mxu0 0.0
      %763 = vmatprep.subr.mxu0 0.0
      %764 = vmatpush2.msra.mxu0 0.0
      %765 = vmatprep.subr.mxu0 0.0
      %766 = vmatpush2.msra.mxu0 0.0
      %767 = vmatprep.subr.mxu0 0.0
      %768 = vmatpush2.msra.mxu0 0.0
      %769 = vmatprep.subr.mxu0 0.0
      %770 = vmatpush2.msra.mxu0 0.0
      %771 = vmatprep.subr.mxu0 0.0
      %772 = vmatpush2.msra.mxu0 0.0
      %773 = vmatprep.subr.mxu0 0.0
      %774 = vmatpush2.msra.mxu0 0.0
      %775 = vmatprep.subr.mxu0 0.0
      %776 = vmatpush2.msra.mxu0 0.0
      %777 = vmatprep.subr.mxu0 0.0
      %778 = vmatpush2.msra.mxu0 0.0
      %779 = vmatprep.subr.mxu0 0.0
      %780 = vmatpush2.msra.mxu0 0.0
      %781 = vmatprep.subr.mxu0 0.0
      %782 = vmatpush2.msra.mxu0 0.0
      %783 = vmatprep.subr.mxu0 0.0
      %784 = vmatpush2.msra.mxu0 0.0
      %785 = vmatprep.subr.mxu0 0.0
      %786 = vmatpush2.msra.mxu0 0.0
      %787 = vmatprep.subr.mxu0 0.0
      %788 = vmatpush2.msra.mxu0 0.0
      %789 = vmatprep.subr.mxu0 0.0
      %790 = vmatpush2.msra.mxu0 0.0
      %791 = vmatprep.subr.mxu0 0.0
      %792 = vmatpush2.msra.mxu0 0.0
      %793 = vmatprep.mubr.f32.mxu0 0.0
      %794 = vmatmul.mubr.f32.gmra.mxu0 %v718
      %v795 = vpop.f32.mrf.mxu0
      %v796 = vadd.f32 0.0, %v795
      %v797 = vpop.f32.mrf.mxu0
      %798 = vmatprep.mubr.f32.mxu0 0.0
      %799 = vmatmul.mubr.f32.gmra.mxu0 %v721
      %v800 = vpop.f32.mrf.mxu0
      %v801 = vadd.f32 0.0, %v800
      %v802 = vpop.f32.mrf.mxu0
      %803 = vmatprep.mubr.f32.mxu0 0.0
      %804 = vmatmul.mubr.f32.gmra.mxu0 %v724
      %v805 = vpop.f32.mrf.mxu0
      %v806 = vadd.f32 0.0, %v805
      %v807 = vpop.f32.mrf.mxu0
      %808 = vmatprep.mubr.f32.mxu0 0.0
      %809 = vmatmul.mubr.f32.gmra.mxu0 %v727
      %v810 = vpop.f32.mrf.mxu0
      %v811 = vadd.f32 0.0, %v810
      %v812 = vpop.f32.mrf.mxu0
      %813 = vdwg.mxu0
      %v814 = vadd.f32 %v499, %v796
      %v815 = vadd.f32 %v504, %v801
      %v816 = vadd.f32 %v509, %v806
      %v817 = vadd.f32 %v514, %v811
      %s818 = scalar_lea.vmem %s2, 192
      %v819 = vld [vmem:[%s818] sm:$0xff]
      %v820 = vld [vmem:[%s818 + $0x8] sm:$0xff]
      %v821 = vld [vmem:[%s818 + $0x10] sm:$0xff]
      %v822 = vld [vmem:[%s818 + $0x18] sm:$0xff]
      %v823 = vld [vmem:[%s818 + $0x20] sm:$0xff]
      %v824 = vld [vmem:[%s818 + $0x28] sm:$0xff]
      %v825 = vld [vmem:[%s818 + $0x30] sm:$0xff]
      %v826 = vld [vmem:[%s818 + $0x38] sm:$0xff]
      %v827 = vld [vmem:[%s818 + $0x40] sm:$0xff]
      %v828 = vld [vmem:[%s818 + $0x48] sm:$0xff]
      %v829 = vld [vmem:[%s818 + $0x50] sm:$0xff]
      %v830 = vld [vmem:[%s818 + $0x58] sm:$0xff]
      %831 = vmatprep.subr.mxu0 0.0
      %832 = vmatpush1.msra.mxu0 0.0
      %833 = vmatprep.subr.mxu0 0.0
      %834 = vmatpush1.msra.mxu0 0.0
      %835 = vmatprep.subr.mxu0 0.0
      %836 = vmatpush1.msra.mxu0 0.0
      %837 = vmatprep.subr.mxu0 0.0
      %838 = vmatpush1.msra.mxu0 0.0
      %839 = vmatprep.subr.mxu0 0.0
      %840 = vmatpush1.msra.mxu0 %v830
      %841 = vmatprep.subr.mxu0 0.0
      %842 = vmatpush1.msra.mxu0 %v829
      %843 = vmatprep.subr.mxu0 0.0
      %844 = vmatpush1.msra.mxu0 %v828
      %845 = vmatprep.subr.mxu0 0.0
      %846 = vmatpush1.msra.mxu0 %v827
      %847 = vmatprep.subr.mxu0 0.0
      %848 = vmatpush1.msra.mxu0 %v826
      %849 = vmatprep.subr.mxu0 0.0
      %850 = vmatpush1.msra.mxu0 %v825
      %851 = vmatprep.subr.mxu0 0.0
      %852 = vmatpush1.msra.mxu0 %v824
      %853 = vmatprep.subr.mxu0 0.0
      %854 = vmatpush1.msra.mxu0 %v823
      %855 = vmatprep.subr.mxu0 0.0
      %856 = vmatpush1.msra.mxu0 %v822
      %857 = vmatprep.subr.mxu0 0.0
      %858 = vmatpush1.msra.mxu0 %v821
      %859 = vmatprep.subr.mxu0 0.0
      %860 = vmatpush1.msra.mxu0 %v820
      %861 = vmatprep.subr.mxu0 0.0
      %862 = vmatpush1.msra.mxu0 %v819
      %863 = vmatprep.subr.mxu0 0.0
      %864 = vmatpush2.msra.mxu0 0.0
      %865 = vmatprep.subr.mxu0 0.0
      %866 = vmatpush2.msra.mxu0 0.0
      %867 = vmatprep.subr.mxu0 0.0
      %868 = vmatpush2.msra.mxu0 0.0
      %869 = vmatprep.subr.mxu0 0.0
      %870 = vmatpush2.msra.mxu0 0.0
      %871 = vmatprep.subr.mxu0 0.0
      %872 = vmatpush2.msra.mxu0 0.0
      %873 = vmatprep.subr.mxu0 0.0
      %874 = vmatpush2.msra.mxu0 0.0
      %875 = vmatprep.subr.mxu0 0.0
      %876 = vmatpush2.msra.mxu0 0.0
      %877 = vmatprep.subr.mxu0 0.0
      %878 = vmatpush2.msra.mxu0 0.0
      %879 = vmatprep.subr.mxu0 0.0
      %880 = vmatpush2.msra.mxu0 0.0
      %881 = vmatprep.subr.mxu0 0.0
      %882 = vmatpush2.msra.mxu0 0.0
      %883 = vmatprep.subr.mxu0 0.0
      %884 = vmatpush2.msra.mxu0 0.0
      %885 = vmatprep.subr.mxu0 0.0
      %886 = vmatpush2.msra.mxu0 0.0
      %887 = vmatprep.subr.mxu0 0.0
      %888 = vmatpush2.msra.mxu0 0.0
      %889 = vmatprep.subr.mxu0 0.0
      %890 = vmatpush2.msra.mxu0 0.0
      %891 = vmatprep.subr.mxu0 0.0
      %892 = vmatpush2.msra.mxu0 0.0
      %893 = vmatprep.subr.mxu0 0.0
      %894 = vmatpush2.msra.mxu0 0.0
      %895 = vmatprep.mubr.f32.mxu0 0.0
      %896 = vmatmul.mubr.f32.gmra.mxu0 %v718
      %v897 = vpop.f32.mrf.mxu0
      %v898 = vadd.f32 0.0, %v897
      %v899 = vpop.f32.mrf.mxu0
      %900 = vmatprep.mubr.f32.mxu0 0.0
      %901 = vmatmul.mubr.f32.gmra.mxu0 %v721
      %v902 = vpop.f32.mrf.mxu0
      %v903 = vadd.f32 0.0, %v902
      %v904 = vpop.f32.mrf.mxu0
      %905 = vmatprep.mubr.f32.mxu0 0.0
      %906 = vmatmul.mubr.f32.gmra.mxu0 %v724
      %v907 = vpop.f32.mrf.mxu0
      %v908 = vadd.f32 0.0, %v907
      %v909 = vpop.f32.mrf.mxu0
      %910 = vmatprep.mubr.f32.mxu0 0.0
      %911 = vmatmul.mubr.f32.gmra.mxu0 %v727
      %v912 = vpop.f32.mrf.mxu0
      %v913 = vadd.f32 0.0, %v912
      %v914 = vpop.f32.mrf.mxu0
      %915 = vdwg.mxu0
      %v916 = vadd.f32 %v682, %v898
      %v917 = vadd.f32 %v687, %v903
      %v918 = vadd.f32 %v692, %v908
      %v919 = vadd.f32 %v697, %v913
      %v920 = vld [vmem:[%s272 + $0x3] sm:$0xff]
      %v921 = vld [vmem:[%s272 + $0xb] sm:$0xff]
      %v922 = vld [vmem:[%s272 + $0x13] sm:$0xff]
      %v923 = vld [vmem:[%s272 + $0x1b] sm:$0xf]
      %s924 = scalar_lea.vmem %s1, 288
      %v925 = vld [vmem:[%s924] sm:$0xff]
      %v926 = vld [vmem:[%s924 + $0x8] sm:$0xff]
      %v927 = vld [vmem:[%s924 + $0x10] sm:$0xff]
      %v928 = vld [vmem:[%s924 + $0x18] sm:$0xff]
      %v929 = vld [vmem:[%s924 + $0x20] sm:$0xff]
      %v930 = vld [vmem:[%s924 + $0x28] sm:$0xff]
      %v931 = vld [vmem:[%s924 + $0x30] sm:$0xff]
      %v932 = vld [vmem:[%s924 + $0x38] sm:$0xff]
      %v933 = vld [vmem:[%s924 + $0x40] sm:$0xff]
      %v934 = vld [vmem:[%s924 + $0x48] sm:$0xff]
      %v935 = vld [vmem:[%s924 + $0x50] sm:$0xff]
      %v936 = vld [vmem:[%s924 + $0x58] sm:$0xff]
      %v938 = vsel %vm322, %v920, 0
      %v941 = vsel %vm322, %v921, 0
      %v944 = vsel %vm322, %v922, 0
      %v947 = vsel %vm322, %v923, 0
      %949 = vmatprep.subr.mxu0 0.0
      %950 = vmatpush1.msra.mxu0 0.0
      %951 = vmatprep.subr.mxu0 0.0
      %952 = vmatpush1.msra.mxu0 0.0
      %953 = vmatprep.subr.mxu0 0.0
      %954 = vmatpush1.msra.mxu0 0.0
      %955 = vmatprep.subr.mxu0 0.0
      %956 = vmatpush1.msra.mxu0 0.0
      %957 = vmatprep.subr.mxu0 0.0
      %958 = vmatpush1.msra.mxu0 %v936
      %959 = vmatprep.subr.mxu0 0.0
      %960 = vmatpush1.msra.mxu0 %v935
      %961 = vmatprep.subr.mxu0 0.0
      %962 = vmatpush1.msra.mxu0 %v934
      %963 = vmatprep.subr.mxu0 0.0
      %964 = vmatpush1.msra.mxu0 %v933
      %965 = vmatprep.subr.mxu0 0.0
      %966 = vmatpush1.msra.mxu0 %v932
      %967 = vmatprep.subr.mxu0 0.0
      %968 = vmatpush1.msra.mxu0 %v931
      %969 = vmatprep.subr.mxu0 0.0
      %970 = vmatpush1.msra.mxu0 %v930
      %971 = vmatprep.subr.mxu0 0.0
      %972 = vmatpush1.msra.mxu0 %v929
      %973 = vmatprep.subr.mxu0 0.0
      %974 = vmatpush1.msra.mxu0 %v928
      %975 = vmatprep.subr.mxu0 0.0
      %976 = vmatpush1.msra.mxu0 %v927
      %977 = vmatprep.subr.mxu0 0.0
      %978 = vmatpush1.msra.mxu0 %v926
      %979 = vmatprep.subr.mxu0 0.0
      %980 = vmatpush1.msra.mxu0 %v925
      %981 = vmatprep.subr.mxu0 0.0
      %982 = vmatpush2.msra.mxu0 0.0
      %983 = vmatprep.subr.mxu0 0.0
      %984 = vmatpush2.msra.mxu0 0.0
      %985 = vmatprep.subr.mxu0 0.0
      %986 = vmatpush2.msra.mxu0 0.0
      %987 = vmatprep.subr.mxu0 0.0
      %988 = vmatpush2.msra.mxu0 0.0
      %989 = vmatprep.subr.mxu0 0.0
      %990 = vmatpush2.msra.mxu0 0.0
      %991 = vmatprep.subr.mxu0 0.0
      %992 = vmatpush2.msra.mxu0 0.0
      %993 = vmatprep.subr.mxu0 0.0
      %994 = vmatpush2.msra.mxu0 0.0
      %995 = vmatprep.subr.mxu0 0.0
      %996 = vmatpush2.msra.mxu0 0.0
      %997 = vmatprep.subr.mxu0 0.0
      %998 = vmatpush2.msra.mxu0 0.0
      %999 = vmatprep.subr.mxu0 0.0
      %1000 = vmatpush2.msra.mxu0 0.0
      %1001 = vmatprep.subr.mxu0 0.0
      %1002 = vmatpush2.msra.mxu0 0.0
      %1003 = vmatprep.subr.mxu0 0.0
      %1004 = vmatpush2.msra.mxu0 0.0
      %1005 = vmatprep.subr.mxu0 0.0
      %1006 = vmatpush2.msra.mxu0 0.0
      %1007 = vmatprep.subr.mxu0 0.0
      %1008 = vmatpush2.msra.mxu0 0.0
      %1009 = vmatprep.subr.mxu0 0.0
      %1010 = vmatpush2.msra.mxu0 0.0
      %1011 = vmatprep.subr.mxu0 0.0
      %1012 = vmatpush2.msra.mxu0 0.0
      %1013 = vmatprep.mubr.f32.mxu0 0.0
      %1014 = vmatmul.mubr.f32.gmra.mxu0 %v938
      %v1015 = vpop.f32.mrf.mxu0
      %v1016 = vadd.f32 0.0, %v1015
      %v1017 = vpop.f32.mrf.mxu0
      %1018 = vmatprep.mubr.f32.mxu0 0.0
      %1019 = vmatmul.mubr.f32.gmra.mxu0 %v941
      %v1020 = vpop.f32.mrf.mxu0
      %v1021 = vadd.f32 0.0, %v1020
      %v1022 = vpop.f32.mrf.mxu0
      %1023 = vmatprep.mubr.f32.mxu0 0.0
      %1024 = vmatmul.mubr.f32.gmra.mxu0 %v944
      %v1025 = vpop.f32.mrf.mxu0
      %v1026 = vadd.f32 0.0, %v1025
      %v1027 = vpop.f32.mrf.mxu0
      %1028 = vmatprep.mubr.f32.mxu0 0.0
      %1029 = vmatmul.mubr.f32.gmra.mxu0 %v947
      %v1030 = vpop.f32.mrf.mxu0
      %v1031 = vadd.f32 0.0, %v1030
      %v1032 = vpop.f32.mrf.mxu0
      %1033 = vdwg.mxu0
      %v1034 = vadd.f32 %v814, %v1016
      %v1035 = vadd.f32 %v815, %v1021
      %v1036 = vadd.f32 %v816, %v1026
      %v1037 = vadd.f32 %v817, %v1031
      %s1038 = scalar_lea.vmem %s2, 288
      %v1039 = vld [vmem:[%s1038] sm:$0xff]
      %v1040 = vld [vmem:[%s1038 + $0x8] sm:$0xff]
      %v1041 = vld [vmem:[%s1038 + $0x10] sm:$0xff]
      %v1042 = vld [vmem:[%s1038 + $0x18] sm:$0xff]
      %v1043 = vld [vmem:[%s1038 + $0x20] sm:$0xff]
      %v1044 = vld [vmem:[%s1038 + $0x28] sm:$0xff]
      %v1045 = vld [vmem:[%s1038 + $0x30] sm:$0xff]
      %v1046 = vld [vmem:[%s1038 + $0x38] sm:$0xff]
      %v1047 = vld [vmem:[%s1038 + $0x40] sm:$0xff]
      %v1048 = vld [vmem:[%s1038 + $0x48] sm:$0xff]
      %v1049 = vld [vmem:[%s1038 + $0x50] sm:$0xff]
      %v1050 = vld [vmem:[%s1038 + $0x58] sm:$0xff]
      %1051 = vmatprep.subr.mxu0 0.0
      %1052 = vmatpush1.msra.mxu0 0.0
      %1053 = vmatprep.subr.mxu0 0.0
      %1054 = vmatpush1.msra.mxu0 0.0
      %1055 = vmatprep.subr.mxu0 0.0
      %1056 = vmatpush1.msra.mxu0 0.0
      %1057 = vmatprep.subr.mxu0 0.0
      %1058 = vmatpush1.msra.mxu0 0.0
      %1059 = vmatprep.subr.mxu0 0.0
      %1060 = vmatpush1.msra.mxu0 %v1050
      %1061 = vmatprep.subr.mxu0 0.0
      %1062 = vmatpush1.msra.mxu0 %v1049
      %1063 = vmatprep.subr.mxu0 0.0
      %1064 = vmatpush1.msra.mxu0 %v1048
      %1065 = vmatprep.subr.mxu0 0.0
      %1066 = vmatpush1.msra.mxu0 %v1047
      %1067 = vmatprep.subr.mxu0 0.0
      %1068 = vmatpush1.msra.mxu0 %v1046
      %1069 = vmatprep.subr.mxu0 0.0
      %1070 = vmatpush1.msra.mxu0 %v1045
      %1071 = vmatprep.subr.mxu0 0.0
      %1072 = vmatpush1.msra.mxu0 %v1044
      %1073 = vmatprep.subr.mxu0 0.0
      %1074 = vmatpush1.msra.mxu0 %v1043
      %1075 = vmatprep.subr.mxu0 0.0
      %1076 = vmatpush1.msra.mxu0 %v1042
      %1077 = vmatprep.subr.mxu0 0.0
      %1078 = vmatpush1.msra.mxu0 %v1041
      %1079 = vmatprep.subr.mxu0 0.0
      %1080 = vmatpush1.msra.mxu0 %v1040
      %1081 = vmatprep.subr.mxu0 0.0
      %1082 = vmatpush1.msra.mxu0 %v1039
      %1083 = vmatprep.subr.mxu0 0.0
      %1084 = vmatpush2.msra.mxu0 0.0
      %1085 = vmatprep.subr.mxu0 0.0
      %1086 = vmatpush2.msra.mxu0 0.0
      %1087 = vmatprep.subr.mxu0 0.0
      %1088 = vmatpush2.msra.mxu0 0.0
      %1089 = vmatprep.subr.mxu0 0.0
      %1090 = vmatpush2.msra.mxu0 0.0
      %1091 = vmatprep.subr.mxu0 0.0
      %1092 = vmatpush2.msra.mxu0 0.0
      %1093 = vmatprep.subr.mxu0 0.0
      %1094 = vmatpush2.msra.mxu0 0.0
      %1095 = vmatprep.subr.mxu0 0.0
      %1096 = vmatpush2.msra.mxu0 0.0
      %1097 = vmatprep.subr.mxu0 0.0
      %1098 = vmatpush2.msra.mxu0 0.0
      %1099 = vmatprep.subr.mxu0 0.0
      %1100 = vmatpush2.msra.mxu0 0.0
      %1101 = vmatprep.subr.mxu0 0.0
      %1102 = vmatpush2.msra.mxu0 0.0
      %1103 = vmatprep.subr.mxu0 0.0
      %1104 = vmatpush2.msra.mxu0 0.0
      %1105 = vmatprep.subr.mxu0 0.0
      %1106 = vmatpush2.msra.mxu0 0.0
      %1107 = vmatprep.subr.mxu0 0.0
      %1108 = vmatpush2.msra.mxu0 0.0
      %1109 = vmatprep.subr.mxu0 0.0
      %1110 = vmatpush2.msra.mxu0 0.0
      %1111 = vmatprep.subr.mxu0 0.0
      %1112 = vmatpush2.msra.mxu0 0.0
      %1113 = vmatprep.subr.mxu0 0.0
      %1114 = vmatpush2.msra.mxu0 0.0
      %1115 = vmatprep.mubr.f32.mxu0 0.0
      %1116 = vmatmul.mubr.f32.gmra.mxu0 %v938
      %v1117 = vpop.f32.mrf.mxu0
      %v1118 = vadd.f32 0.0, %v1117
      %v1119 = vpop.f32.mrf.mxu0
      %1120 = vmatprep.mubr.f32.mxu0 0.0
      %1121 = vmatmul.mubr.f32.gmra.mxu0 %v941
      %v1122 = vpop.f32.mrf.mxu0
      %v1123 = vadd.f32 0.0, %v1122
      %v1124 = vpop.f32.mrf.mxu0
      %1125 = vmatprep.mubr.f32.mxu0 0.0
      %1126 = vmatmul.mubr.f32.gmra.mxu0 %v944
      %v1127 = vpop.f32.mrf.mxu0
      %v1128 = vadd.f32 0.0, %v1127
      %v1129 = vpop.f32.mrf.mxu0
      %1130 = vmatprep.mubr.f32.mxu0 0.0
      %1131 = vmatmul.mubr.f32.gmra.mxu0 %v947
      %v1132 = vpop.f32.mrf.mxu0
      %v1133 = vadd.f32 0.0, %v1132
      %v1134 = vpop.f32.mrf.mxu0
      %1135 = vdwg.mxu0
      %v1136 = vadd.f32 %v916, %v1118
      %v1137 = vadd.f32 %v917, %v1123
      %v1138 = vadd.f32 %v918, %v1128
      %v1139 = vadd.f32 %v919, %v1133
      %v1140 = vld [vmem:[%s272 + $0x4] sm:$0xff]
      %v1141 = vld [vmem:[%s272 + $0xc] sm:$0xff]
      %v1142 = vld [vmem:[%s272 + $0x14] sm:$0xff]
      %v1143 = vld [vmem:[%s272 + $0x1c] sm:$0xf]
      %s1144 = scalar_lea.vmem %s1, 384
      %v1145 = vld [vmem:[%s1144] sm:$0xff]
      %v1146 = vld [vmem:[%s1144 + $0x8] sm:$0xff]
      %v1147 = vld [vmem:[%s1144 + $0x10] sm:$0xff]
      %v1148 = vld [vmem:[%s1144 + $0x18] sm:$0xff]
      %v1149 = vld [vmem:[%s1144 + $0x20] sm:$0xff]
      %v1150 = vld [vmem:[%s1144 + $0x28] sm:$0xff]
      %v1151 = vld [vmem:[%s1144 + $0x30] sm:$0xff]
      %v1152 = vld [vmem:[%s1144 + $0x38] sm:$0xff]
      %v1153 = vld [vmem:[%s1144 + $0x40] sm:$0xff]
      %v1154 = vld [vmem:[%s1144 + $0x48] sm:$0xff]
      %v1155 = vld [vmem:[%s1144 + $0x50] sm:$0xff]
      %v1156 = vld [vmem:[%s1144 + $0x58] sm:$0xff]
      %v1158 = vsel %vm322, %v1140, 0
      %v1161 = vsel %vm322, %v1141, 0
      %v1164 = vsel %vm322, %v1142, 0
      %v1167 = vsel %vm322, %v1143, 0
      %1169 = vmatprep.subr.mxu0 0.0
      %1170 = vmatpush1.msra.mxu0 0.0
      %1171 = vmatprep.subr.mxu0 0.0
      %1172 = vmatpush1.msra.mxu0 0.0
      %1173 = vmatprep.subr.mxu0 0.0
      %1174 = vmatpush1.msra.mxu0 0.0
      %1175 = vmatprep.subr.mxu0 0.0
      %1176 = vmatpush1.msra.mxu0 0.0
      %1177 = vmatprep.subr.mxu0 0.0
      %1178 = vmatpush1.msra.mxu0 %v1156
      %1179 = vmatprep.subr.mxu0 0.0
      %1180 = vmatpush1.msra.mxu0 %v1155
      %1181 = vmatprep.subr.mxu0 0.0
      %1182 = vmatpush1.msra.mxu0 %v1154
      %1183 = vmatprep.subr.mxu0 0.0
      %1184 = vmatpush1.msra.mxu0 %v1153
      %1185 = vmatprep.subr.mxu0 0.0
      %1186 = vmatpush1.msra.mxu0 %v1152
      %1187 = vmatprep.subr.mxu0 0.0
      %1188 = vmatpush1.msra.mxu0 %v1151
      %1189 = vmatprep.subr.mxu0 0.0
      %1190 = vmatpush1.msra.mxu0 %v1150
      %1191 = vmatprep.subr.mxu0 0.0
      %1192 = vmatpush1.msra.mxu0 %v1149
      %1193 = vmatprep.subr.mxu0 0.0
      %1194 = vmatpush1.msra.mxu0 %v1148
      %1195 = vmatprep.subr.mxu0 0.0
      %1196 = vmatpush1.msra.mxu0 %v1147
      %1197 = vmatprep.subr.mxu0 0.0
      %1198 = vmatpush1.msra.mxu0 %v1146
      %1199 = vmatprep.subr.mxu0 0.0
      %1200 = vmatpush1.msra.mxu0 %v1145
      %1201 = vmatprep.subr.mxu0 0.0
      %1202 = vmatpush2.msra.mxu0 0.0
      %1203 = vmatprep.subr.mxu0 0.0
      %1204 = vmatpush2.msra.mxu0 0.0
      %1205 = vmatprep.subr.mxu0 0.0
      %1206 = vmatpush2.msra.mxu0 0.0
      %1207 = vmatprep.subr.mxu0 0.0
      %1208 = vmatpush2.msra.mxu0 0.0
      %1209 = vmatprep.subr.mxu0 0.0
      %1210 = vmatpush2.msra.mxu0 0.0
      %1211 = vmatprep.subr.mxu0 0.0
      %1212 = vmatpush2.msra.mxu0 0.0
      %1213 = vmatprep.subr.mxu0 0.0
      %1214 = vmatpush2.msra.mxu0 0.0
      %1215 = vmatprep.subr.mxu0 0.0
      %1216 = vmatpush2.msra.mxu0 0.0
      %1217 = vmatprep.subr.mxu0 0.0
      %1218 = vmatpush2.msra.mxu0 0.0
      %1219 = vmatprep.subr.mxu0 0.0
      %1220 = vmatpush2.msra.mxu0 0.0
      %1221 = vmatprep.subr.mxu0 0.0
      %1222 = vmatpush2.msra.mxu0 0.0
      %1223 = vmatprep.subr.mxu0 0.0
      %1224 = vmatpush2.msra.mxu0 0.0
      %1225 = vmatprep.subr.mxu0 0.0
      %1226 = vmatpush2.msra.mxu0 0.0
      %1227 = vmatprep.subr.mxu0 0.0
      %1228 = vmatpush2.msra.mxu0 0.0
      %1229 = vmatprep.subr.mxu0 0.0
      %1230 = vmatpush2.msra.mxu0 0.0
      %1231 = vmatprep.subr.mxu0 0.0
      %1232 = vmatpush2.msra.mxu0 0.0
      %1233 = vmatprep.mubr.f32.mxu0 0.0
      %1234 = vmatmul.mubr.f32.gmra.mxu0 %v1158
      %v1235 = vpop.f32.mrf.mxu0
      %v1236 = vadd.f32 0.0, %v1235
      %v1237 = vpop.f32.mrf.mxu0
      %1238 = vmatprep.mubr.f32.mxu0 0.0
      %1239 = vmatmul.mubr.f32.gmra.mxu0 %v1161
      %v1240 = vpop.f32.mrf.mxu0
      %v1241 = vadd.f32 0.0, %v1240
      %v1242 = vpop.f32.mrf.mxu0
      %1243 = vmatprep.mubr.f32.mxu0 0.0
      %1244 = vmatmul.mubr.f32.gmra.mxu0 %v1164
      %v1245 = vpop.f32.mrf.mxu0
      %v1246 = vadd.f32 0.0, %v1245
      %v1247 = vpop.f32.mrf.mxu0
      %1248 = vmatprep.mubr.f32.mxu0 0.0
      %1249 = vmatmul.mubr.f32.gmra.mxu0 %v1167
      %v1250 = vpop.f32.mrf.mxu0
      %v1251 = vadd.f32 0.0, %v1250
      %v1252 = vpop.f32.mrf.mxu0
      %1253 = vdwg.mxu0
      %v1254 = vadd.f32 %v1034, %v1236
      %v1255 = vadd.f32 %v1035, %v1241
      %v1256 = vadd.f32 %v1036, %v1246
      %v1257 = vadd.f32 %v1037, %v1251
      %s1258 = scalar_lea.vmem %s2, 384
      %v1259 = vld [vmem:[%s1258] sm:$0xff]
      %v1260 = vld [vmem:[%s1258 + $0x8] sm:$0xff]
      %v1261 = vld [vmem:[%s1258 + $0x10] sm:$0xff]
      %v1262 = vld [vmem:[%s1258 + $0x18] sm:$0xff]
      %v1263 = vld [vmem:[%s1258 + $0x20] sm:$0xff]
      %v1264 = vld [vmem:[%s1258 + $0x28] sm:$0xff]
      %v1265 = vld [vmem:[%s1258 + $0x30] sm:$0xff]
      %v1266 = vld [vmem:[%s1258 + $0x38] sm:$0xff]
      %v1267 = vld [vmem:[%s1258 + $0x40] sm:$0xff]
      %v1268 = vld [vmem:[%s1258 + $0x48] sm:$0xff]
      %v1269 = vld [vmem:[%s1258 + $0x50] sm:$0xff]
      %v1270 = vld [vmem:[%s1258 + $0x58] sm:$0xff]
      %1271 = vmatprep.subr.mxu0 0.0
      %1272 = vmatpush1.msra.mxu0 0.0
      %1273 = vmatprep.subr.mxu0 0.0
      %1274 = vmatpush1.msra.mxu0 0.0
      %1275 = vmatprep.subr.mxu0 0.0
      %1276 = vmatpush1.msra.mxu0 0.0
      %1277 = vmatprep.subr.mxu0 0.0
      %1278 = vmatpush1.msra.mxu0 0.0
      %1279 = vmatprep.subr.mxu0 0.0
      %1280 = vmatpush1.msra.mxu0 %v1270
      %1281 = vmatprep.subr.mxu0 0.0
      %1282 = vmatpush1.msra.mxu0 %v1269
      %1283 = vmatprep.subr.mxu0 0.0
      %1284 = vmatpush1.msra.mxu0 %v1268
      %1285 = vmatprep.subr.mxu0 0.0
      %1286 = vmatpush1.msra.mxu0 %v1267
      %1287 = vmatprep.subr.mxu0 0.0
      %1288 = vmatpush1.msra.mxu0 %v1266
      %1289 = vmatprep.subr.mxu0 0.0
      %1290 = vmatpush1.msra.mxu0 %v1265
      %1291 = vmatprep.subr.mxu0 0.0
      %1292 = vmatpush1.msra.mxu0 %v1264
      %1293 = vmatprep.subr.mxu0 0.0
      %1294 = vmatpush1.msra.mxu0 %v1263
      %1295 = vmatprep.subr.mxu0 0.0
      %1296 = vmatpush1.msra.mxu0 %v1262
      %1297 = vmatprep.subr.mxu0 0.0
      %1298 = vmatpush1.msra.mxu0 %v1261
      %1299 = vmatprep.subr.mxu0 0.0
      %1300 = vmatpush1.msra.mxu0 %v1260
      %1301 = vmatprep.subr.mxu0 0.0
      %1302 = vmatpush1.msra.mxu0 %v1259
      %1303 = vmatprep.subr.mxu0 0.0
      %1304 = vmatpush2.msra.mxu0 0.0
      %1305 = vmatprep.subr.mxu0 0.0
      %1306 = vmatpush2.msra.mxu0 0.0
      %1307 = vmatprep.subr.mxu0 0.0
      %1308 = vmatpush2.msra.mxu0 0.0
      %1309 = vmatprep.subr.mxu0 0.0
      %1310 = vmatpush2.msra.mxu0 0.0
      %1311 = vmatprep.subr.mxu0 0.0
      %1312 = vmatpush2.msra.mxu0 0.0
      %1313 = vmatprep.subr.mxu0 0.0
      %1314 = vmatpush2.msra.mxu0 0.0
      %1315 = vmatprep.subr.mxu0 0.0
      %1316 = vmatpush2.msra.mxu0 0.0
      %1317 = vmatprep.subr.mxu0 0.0
      %1318 = vmatpush2.msra.mxu0 0.0
      %1319 = vmatprep.subr.mxu0 0.0
      %1320 = vmatpush2.msra.mxu0 0.0
      %1321 = vmatprep.subr.mxu0 0.0
      %1322 = vmatpush2.msra.mxu0 0.0
      %1323 = vmatprep.subr.mxu0 0.0
      %1324 = vmatpush2.msra.mxu0 0.0
      %1325 = vmatprep.subr.mxu0 0.0
      %1326 = vmatpush2.msra.mxu0 0.0
      %1327 = vmatprep.subr.mxu0 0.0
      %1328 = vmatpush2.msra.mxu0 0.0
      %1329 = vmatprep.subr.mxu0 0.0
      %1330 = vmatpush2.msra.mxu0 0.0
      %1331 = vmatprep.subr.mxu0 0.0
      %1332 = vmatpush2.msra.mxu0 0.0
      %1333 = vmatprep.subr.mxu0 0.0
      %1334 = vmatpush2.msra.mxu0 0.0
      %1335 = vmatprep.mubr.f32.mxu0 0.0
      %1336 = vmatmul.mubr.f32.gmra.mxu0 %v1158
      %v1337 = vpop.f32.mrf.mxu0
      %v1338 = vadd.f32 0.0, %v1337
      %v1339 = vpop.f32.mrf.mxu0
      %1340 = vmatprep.mubr.f32.mxu0 0.0
      %1341 = vmatmul.mubr.f32.gmra.mxu0 %v1161
      %v1342 = vpop.f32.mrf.mxu0
      %v1343 = vadd.f32 0.0, %v1342
      %v1344 = vpop.f32.mrf.mxu0
      %1345 = vmatprep.mubr.f32.mxu0 0.0
      %1346 = vmatmul.mubr.f32.gmra.mxu0 %v1164
      %v1347 = vpop.f32.mrf.mxu0
      %v1348 = vadd.f32 0.0, %v1347
      %v1349 = vpop.f32.mrf.mxu0
      %1350 = vmatprep.mubr.f32.mxu0 0.0
      %1351 = vmatmul.mubr.f32.gmra.mxu0 %v1167
      %v1352 = vpop.f32.mrf.mxu0
      %v1353 = vadd.f32 0.0, %v1352
      %v1354 = vpop.f32.mrf.mxu0
      %1355 = vdwg.mxu0
      %v1356 = vadd.f32 %v1136, %v1338
      %v1357 = vadd.f32 %v1137, %v1343
      %v1358 = vadd.f32 %v1138, %v1348
      %v1359 = vadd.f32 %v1139, %v1353
      %v1360 = vld [vmem:[%s3] sm:$0x1]
      %v1362 = vlaneseq
      %v1363 = vshrl.u32 %v1362, 7
      %v1364 = vsub.s32 0, %v1363
      %v1365 = vrot.slane %v1360, %v1364
      %v1367 = vadd.f32 %v1254, %v1365
      %v1368 = vadd.f32 %v1255, %v1365
      %v1369 = vadd.f32 %v1256, %v1365
      %v1370 = vadd.f32 %v1257, %v1365
      %v1371 = vadd.f32 %v1356, %v1365
      %v1372 = vadd.f32 %v1357, %v1365
      %v1373 = vadd.f32 %v1358, %v1365
      %v1374 = vadd.f32 %v1359, %v1365
      %v1375 = vmax.f32 %v1367, %v1371
      %v1376 = vmax.f32 %v1368, %v1372
      %v1377 = vmax.f32 %v1369, %v1373
      %v1378 = vmax.f32 %v1370, %v1374
      %v1379 = vmax.f32 %v1375, 0.0
      %v1380 = vmax.f32 %v1376, 0.0
      %v1381 = vmax.f32 %v1377, 0.0
      %v1382 = vmax.f32 %v1378, 0.0
      %vm1383 = vcmask 687104
      %1384 = vst.msk [vmem:[#allocation2] sm:$0xff] %vm1383, %v1379
      %1385 = vst.msk [vmem:[#allocation2 + $0x8] sm:$0xff] %vm1383, %v1380
      %1386 = vst.msk [vmem:[#allocation2 + $0x10] sm:$0xff] %vm1383, %v1381
      %vm1387 = vcmask 683008
      %1388 = vst.msk [vmem:[#allocation2 + $0x18] sm:$0xf] %vm1387, %v1382
      %v1389 = vld [vmem:[#allocation2] ss:$2 sm:$0xff]
      %s1390 = scalar_lea.vmem [#allocation2], 16
      %v1391 = vld [vmem:[%s1390] ss:$2 sm:$0x3f]
      %s1392 = scalar_lea.vmem [#allocation2], 1
      %v1393 = vld [vmem:[%s1392] ss:$2 sm:$0xff]
      %s1394 = scalar_lea.vmem [#allocation2], 17
      %v1395 = vld [vmem:[%s1394] ss:$2 sm:$0x3f]
      %v1396 = vmax.f32 %v1389, %v1393
      %v1397 = vmax.f32 %v1391, %v1395
      %1398 = vst.msk [vmem:[#allocation3] sm:$0xff] %vm1383, %v1396
      %vm1399 = vcmask 685056
      %1400 = vst.msk [vmem:[#allocation3 + $0x8] sm:$0x3f] %vm1399, %v1397
      %v1401 = vld [vmem:[#allocation3] sm:$0xff]
      %v1402 = vld [vmem:[#allocation3 + $0x8] sm:$0x3]
      %v1403 = vld [vmem:[%s4] sm:$0xff]
      %v1404 = vld [vmem:[%s4 + $0x8] sm:$0xff]
      %v1405 = vld [vmem:[%s4 + $0x10] sm:$0xff]
      %v1406 = vld [vmem:[%s4 + $0x18] sm:$0xff]
      %v1407 = vld [vmem:[%s4 + $0x20] sm:$0xff]
      %v1408 = vld [vmem:[%s4 + $0x28] sm:$0xff]
      %v1409 = vld [vmem:[%s4 + $0x30] sm:$0xff]
      %v1410 = vld [vmem:[%s4 + $0x38] sm:$0xff]
      %v1411 = vld [vmem:[%s4 + $0x40] sm:$0xff]
      %v1412 = vld [vmem:[%s4 + $0x48] sm:$0xff]
      %v1413 = vld [vmem:[%s4 + $0x50] sm:$0xf]
      %v1414 = vld [vmem:[%s5] sm:$0xff]
      %v1415 = vld [vmem:[%s5 + $0x8] sm:$0xff]
      %v1416 = vld [vmem:[%s5 + $0x10] sm:$0xff]
      %v1417 = vld [vmem:[%s5 + $0x18] sm:$0xff]
      %v1418 = vld [vmem:[%s5 + $0x20] sm:$0xff]
      %v1419 = vld [vmem:[%s5 + $0x28] sm:$0xff]
      %v1420 = vld [vmem:[%s5 + $0x30] sm:$0xff]
      %v1421 = vld [vmem:[%s5 + $0x38] sm:$0xff]
      %v1422 = vld [vmem:[%s5 + $0x40] sm:$0xff]
      %v1423 = vld [vmem:[%s5 + $0x48] sm:$0xff]
      %v1424 = vld [vmem:[%s5 + $0x50] sm:$0xf]
      %v1425 = vld [vmem:[#allocation3 + $0x1] sm:$0xff]
      %v1426 = vld [vmem:[#allocation3 + $0x9] sm:$0x3]
      %s1427 = scalar_lea.vmem %s4, 88
      %v1428 = vld [vmem:[%s1427] sm:$0xff]
      %v1429 = vld [vmem:[%s1427 + $0x8] sm:$0xff]
      %v1430 = vld [vmem:[%s1427 + $0x10] sm:$0xff]
      %v1431 = vld [vmem:[%s1427 + $0x18] sm:$0xff]
      %v1432 = vld [vmem:[%s1427 + $0x20] sm:$0xff]
      %v1433 = vld [vmem:[%s1427 + $0x28] sm:$0xff]
      %v1434 = vld [vmem:[%s1427 + $0x30] sm:$0xff]
      %v1435 = vld [vmem:[%s1427 + $0x38] sm:$0xff]
      %v1436 = vld [vmem:[%s1427 + $0x40] sm:$0xff]
      %v1437 = vld [vmem:[%s1427 + $0x48] sm:$0xff]
      %v1438 = vld [vmem:[%s1427 + $0x50] sm:$0xf]
      %v1440 = vsel %vm1383, %v1425, 0
      %v1443 = vsel %vm1383, %v1426, 0
      %vm1445 = vcmask 1043456
      %v1447 = vsel %vm1445, %v1438, 0
      %1449 = vmatprep.subr.mxu0 0.0
      %1450 = vmatpush1.msra.mxu0 0.0
      %1451 = vmatprep.subr.mxu0 0.0
      %1452 = vmatpush1.msra.mxu0 0.0
      %1453 = vmatprep.subr.mxu0 0.0
      %1454 = vmatpush1.msra.mxu0 0.0
      %1455 = vmatprep.subr.mxu0 0.0
      %1456 = vmatpush1.msra.mxu0 0.0
      %1457 = vmatprep.subr.mxu0 0.0
      %1458 = vmatpush1.msra.mxu0 0.0
      %1459 = vmatprep.subr.mxu0 0.0
      %1460 = vmatpush1.msra.mxu0 %v1447
      %1461 = vmatprep.subr.mxu0 0.0
      %1462 = vmatpush1.msra.mxu0 %v1437
      %1463 = vmatprep.subr.mxu0 0.0
      %1464 = vmatpush1.msra.mxu0 %v1436
      %1465 = vmatprep.subr.mxu0 0.0
      %1466 = vmatpush1.msra.mxu0 %v1435
      %1467 = vmatprep.subr.mxu0 0.0
      %1468 = vmatpush1.msra.mxu0 %v1434
      %1469 = vmatprep.subr.mxu0 0.0
      %1470 = vmatpush1.msra.mxu0 %v1433
      %1471 = vmatprep.subr.mxu0 0.0
      %1472 = vmatpush1.msra.mxu0 %v1432
      %1473 = vmatprep.subr.mxu0 0.0
      %1474 = vmatpush1.msra.mxu0 %v1431
      %1475 = vmatprep.subr.mxu0 0.0
      %1476 = vmatpush1.msra.mxu0 %v1430
      %1477 = vmatprep.subr.mxu0 0.0
      %1478 = vmatpush1.msra.mxu0 %v1429
      %1479 = vmatprep.subr.mxu0 0.0
      %1480 = vmatpush1.msra.mxu0 %v1428
      %1481 = vmatprep.subr.mxu0 0.0
      %1482 = vmatpush2.msra.mxu0 0.0
      %1483 = vmatprep.subr.mxu0 0.0
      %1484 = vmatpush2.msra.mxu0 0.0
      %1485 = vmatprep.subr.mxu0 0.0
      %1486 = vmatpush2.msra.mxu0 0.0
      %1487 = vmatprep.subr.mxu0 0.0
      %1488 = vmatpush2.msra.mxu0 0.0
      %1489 = vmatprep.subr.mxu0 0.0
      %1490 = vmatpush2.msra.mxu0 0.0
      %1491 = vmatprep.subr.mxu0 0.0
      %1492 = vmatpush2.msra.mxu0 0.0
      %1493 = vmatprep.subr.mxu0 0.0
      %1494 = vmatpush2.msra.mxu0 0.0
      %1495 = vmatprep.subr.mxu0 0.0
      %1496 = vmatpush2.msra.mxu0 0.0
      %1497 = vmatprep.subr.mxu0 0.0
      %1498 = vmatpush2.msra.mxu0 0.0
      %1499 = vmatprep.subr.mxu0 0.0
      %1500 = vmatpush2.msra.mxu0 0.0
      %1501 = vmatprep.subr.mxu0 0.0
      %1502 = vmatpush2.msra.mxu0 0.0
      %1503 = vmatprep.subr.mxu0 0.0
      %1504 = vmatpush2.msra.mxu0 0.0
      %1505 = vmatprep.subr.mxu0 0.0
      %1506 = vmatpush2.msra.mxu0 0.0
      %1507 = vmatprep.subr.mxu0 0.0
      %1508 = vmatpush2.msra.mxu0 0.0
      %1509 = vmatprep.subr.mxu0 0.0
      %1510 = vmatpush2.msra.mxu0 0.0
      %1511 = vmatprep.subr.mxu0 0.0
      %1512 = vmatpush2.msra.mxu0 0.0
      %1513 = vmatprep.mubr.f32.mxu0 0.0
      %1514 = vmatmul.mubr.f32.gmra.mxu0 %v1440
      %v1515 = vpop.f32.mrf.mxu0
      %v1516 = vadd.f32 0.0, %v1515
      %v1517 = vpop.f32.mrf.mxu0
      %1518 = vmatprep.mubr.f32.mxu0 0.0
      %1519 = vmatmul.mubr.f32.gmra.mxu0 %v1443
      %v1520 = vpop.f32.mrf.mxu0
      %v1521 = vadd.f32 0.0, %v1520
      %v1522 = vpop.f32.mrf.mxu0
      %1523 = vdwg.mxu0
      %v1525 = vsel %vm1383, %v1401, 0
      %v1528 = vsel %vm1383, %v1402, 0
      %v1531 = vsel %vm1445, %v1413, 0
      %1533 = vmatprep.subr.mxu0 0.0
      %1534 = vmatpush1.msra.mxu0 0.0
      %1535 = vmatprep.subr.mxu0 0.0
      %1536 = vmatpush1.msra.mxu0 0.0
      %1537 = vmatprep.subr.mxu0 0.0
      %1538 = vmatpush1.msra.mxu0 0.0
      %1539 = vmatprep.subr.mxu0 0.0
      %1540 = vmatpush1.msra.mxu0 0.0
      %1541 = vmatprep.subr.mxu0 0.0
      %1542 = vmatpush1.msra.mxu0 0.0
      %1543 = vmatprep.subr.mxu0 0.0
      %1544 = vmatpush1.msra.mxu0 %v1531
      %1545 = vmatprep.subr.mxu0 0.0
      %1546 = vmatpush1.msra.mxu0 %v1412
      %1547 = vmatprep.subr.mxu0 0.0
      %1548 = vmatpush1.msra.mxu0 %v1411
      %1549 = vmatprep.subr.mxu0 0.0
      %1550 = vmatpush1.msra.mxu0 %v1410
      %1551 = vmatprep.subr.mxu0 0.0
      %1552 = vmatpush1.msra.mxu0 %v1409
      %1553 = vmatprep.subr.mxu0 0.0
      %1554 = vmatpush1.msra.mxu0 %v1408
      %1555 = vmatprep.subr.mxu0 0.0
      %1556 = vmatpush1.msra.mxu0 %v1407
      %1557 = vmatprep.subr.mxu0 0.0
      %1558 = vmatpush1.msra.mxu0 %v1406
      %1559 = vmatprep.subr.mxu0 0.0
      %1560 = vmatpush1.msra.mxu0 %v1405
      %1561 = vmatprep.subr.mxu0 0.0
      %1562 = vmatpush1.msra.mxu0 %v1404
      %1563 = vmatprep.subr.mxu0 0.0
      %1564 = vmatpush1.msra.mxu0 %v1403
      %1565 = vmatprep.subr.mxu0 0.0
      %1566 = vmatpush2.msra.mxu0 0.0
      %1567 = vmatprep.subr.mxu0 0.0
      %1568 = vmatpush2.msra.mxu0 0.0
      %1569 = vmatprep.subr.mxu0 0.0
      %1570 = vmatpush2.msra.mxu0 0.0
      %1571 = vmatprep.subr.mxu0 0.0
      %1572 = vmatpush2.msra.mxu0 0.0
      %1573 = vmatprep.subr.mxu0 0.0
      %1574 = vmatpush2.msra.mxu0 0.0
      %1575 = vmatprep.subr.mxu0 0.0
      %1576 = vmatpush2.msra.mxu0 0.0
      %1577 = vmatprep.subr.mxu0 0.0
      %1578 = vmatpush2.msra.mxu0 0.0
      %1579 = vmatprep.subr.mxu0 0.0
      %1580 = vmatpush2.msra.mxu0 0.0
      %1581 = vmatprep.subr.mxu0 0.0
      %1582 = vmatpush2.msra.mxu0 0.0
      %1583 = vmatprep.subr.mxu0 0.0
      %1584 = vmatpush2.msra.mxu0 0.0
      %1585 = vmatprep.subr.mxu0 0.0
      %1586 = vmatpush2.msra.mxu0 0.0
      %1587 = vmatprep.subr.mxu0 0.0
      %1588 = vmatpush2.msra.mxu0 0.0
      %1589 = vmatprep.subr.mxu0 0.0
      %1590 = vmatpush2.msra.mxu0 0.0
      %1591 = vmatprep.subr.mxu0 0.0
      %1592 = vmatpush2.msra.mxu0 0.0
      %1593 = vmatprep.subr.mxu0 0.0
      %1594 = vmatpush2.msra.mxu0 0.0
      %1595 = vmatprep.subr.mxu0 0.0
      %1596 = vmatpush2.msra.mxu0 0.0
      %1597 = vmatprep.mubr.f32.mxu0 0.0
      %1598 = vmatmul.mubr.f32.gmra.mxu0 %v1525
      %v1599 = vpop.f32.mrf.mxu0
      %v1600 = vadd.f32 %v1516, %v1599
      %v1601 = vpop.f32.mrf.mxu0
      %1602 = vmatprep.mubr.f32.mxu0 0.0
      %1603 = vmatmul.mubr.f32.gmra.mxu0 %v1528
      %v1604 = vpop.f32.mrf.mxu0
      %v1605 = vadd.f32 %v1521, %v1604
      %v1606 = vpop.f32.mrf.mxu0
      %1607 = vdwg.mxu0
      %s1608 = scalar_lea.vmem %s5, 88
      %v1609 = vld [vmem:[%s1608] sm:$0xff]
      %v1610 = vld [vmem:[%s1608 + $0x8] sm:$0xff]
      %v1611 = vld [vmem:[%s1608 + $0x10] sm:$0xff]
      %v1612 = vld [vmem:[%s1608 + $0x18] sm:$0xff]
      %v1613 = vld [vmem:[%s1608 + $0x20] sm:$0xff]
      %v1614 = vld [vmem:[%s1608 + $0x28] sm:$0xff]
      %v1615 = vld [vmem:[%s1608 + $0x30] sm:$0xff]
      %v1616 = vld [vmem:[%s1608 + $0x38] sm:$0xff]
      %v1617 = vld [vmem:[%s1608 + $0x40] sm:$0xff]
      %v1618 = vld [vmem:[%s1608 + $0x48] sm:$0xff]
      %v1619 = vld [vmem:[%s1608 + $0x50] sm:$0xf]
      %v1621 = vsel %vm1445, %v1619, 0
      %1623 = vmatprep.subr.mxu0 0.0
      %1624 = vmatpush1.msra.mxu0 0.0
      %1625 = vmatprep.subr.mxu0 0.0
      %1626 = vmatpush1.msra.mxu0 0.0
      %1627 = vmatprep.subr.mxu0 0.0
      %1628 = vmatpush1.msra.mxu0 0.0
      %1629 = vmatprep.subr.mxu0 0.0
      %1630 = vmatpush1.msra.mxu0 0.0
      %1631 = vmatprep.subr.mxu0 0.0
      %1632 = vmatpush1.msra.mxu0 0.0
      %1633 = vmatprep.subr.mxu0 0.0
      %1634 = vmatpush1.msra.mxu0 %v1621
      %1635 = vmatprep.subr.mxu0 0.0
      %1636 = vmatpush1.msra.mxu0 %v1618
      %1637 = vmatprep.subr.mxu0 0.0
      %1638 = vmatpush1.msra.mxu0 %v1617
      %1639 = vmatprep.subr.mxu0 0.0
      %1640 = vmatpush1.msra.mxu0 %v1616
      %1641 = vmatprep.subr.mxu0 0.0
      %1642 = vmatpush1.msra.mxu0 %v1615
      %1643 = vmatprep.subr.mxu0 0.0
      %1644 = vmatpush1.msra.mxu0 %v1614
      %1645 = vmatprep.subr.mxu0 0.0
      %1646 = vmatpush1.msra.mxu0 %v1613
      %1647 = vmatprep.subr.mxu0 0.0
      %1648 = vmatpush1.msra.mxu0 %v1612
      %1649 = vmatprep.subr.mxu0 0.0
      %1650 = vmatpush1.msra.mxu0 %v1611
      %1651 = vmatprep.subr.mxu0 0.0
      %1652 = vmatpush1.msra.mxu0 %v1610
      %1653 = vmatprep.subr.mxu0 0.0
      %1654 = vmatpush1.msra.mxu0 %v1609
      %1655 = vmatprep.subr.mxu0 0.0
      %1656 = vmatpush2.msra.mxu0 0.0
      %1657 = vmatprep.subr.mxu0 0.0
      %1658 = vmatpush2.msra.mxu0 0.0
      %1659 = vmatprep.subr.mxu0 0.0
      %1660 = vmatpush2.msra.mxu0 0.0
      %1661 = vmatprep.subr.mxu0 0.0
      %1662 = vmatpush2.msra.mxu0 0.0
      %1663 = vmatprep.subr.mxu0 0.0
      %1664 = vmatpush2.msra.mxu0 0.0
      %1665 = vmatprep.subr.mxu0 0.0
      %1666 = vmatpush2.msra.mxu0 0.0
      %1667 = vmatprep.subr.mxu0 0.0
      %1668 = vmatpush2.msra.mxu0 0.0
      %1669 = vmatprep.subr.mxu0 0.0
      %1670 = vmatpush2.msra.mxu0 0.0
      %1671 = vmatprep.subr.mxu0 0.0
      %1672 = vmatpush2.msra.mxu0 0.0
      %1673 = vmatprep.subr.mxu0 0.0
      %1674 = vmatpush2.msra.mxu0 0.0
      %1675 = vmatprep.subr.mxu0 0.0
      %1676 = vmatpush2.msra.mxu0 0.0
      %1677 = vmatprep.subr.mxu0 0.0
      %1678 = vmatpush2.msra.mxu0 0.0
      %1679 = vmatprep.subr.mxu0 0.0
      %1680 = vmatpush2.msra.mxu0 0.0
      %1681 = vmatprep.subr.mxu0 0.0
      %1682 = vmatpush2.msra.mxu0 0.0
      %1683 = vmatprep.subr.mxu0 0.0
      %1684 = vmatpush2.msra.mxu0 0.0
      %1685 = vmatprep.subr.mxu0 0.0
      %1686 = vmatpush2.msra.mxu0 0.0
      %1687 = vmatprep.mubr.f32.mxu0 0.0
      %1688 = vmatmul.mubr.f32.gmra.mxu0 %v1440
      %v1689 = vpop.f32.mrf.mxu0
      %v1690 = vadd.f32 0.0, %v1689
      %v1691 = vpop.f32.mrf.mxu0
      %1692 = vmatprep.mubr.f32.mxu0 0.0
      %1693 = vmatmul.mubr.f32.gmra.mxu0 %v1443
      %v1694 = vpop.f32.mrf.mxu0
      %v1695 = vadd.f32 0.0, %v1694
      %v1696 = vpop.f32.mrf.mxu0
      %1697 = vdwg.mxu0
      %v1699 = vsel %vm1445, %v1424, 0
      %1701 = vmatprep.subr.mxu0 0.0
      %1702 = vmatpush1.msra.mxu0 0.0
      %1703 = vmatprep.subr.mxu0 0.0
      %1704 = vmatpush1.msra.mxu0 0.0
      %1705 = vmatprep.subr.mxu0 0.0
      %1706 = vmatpush1.msra.mxu0 0.0
      %1707 = vmatprep.subr.mxu0 0.0
      %1708 = vmatpush1.msra.mxu0 0.0
      %1709 = vmatprep.subr.mxu0 0.0
      %1710 = vmatpush1.msra.mxu0 0.0
      %1711 = vmatprep.subr.mxu0 0.0
      %1712 = vmatpush1.msra.mxu0 %v1699
      %1713 = vmatprep.subr.mxu0 0.0
      %1714 = vmatpush1.msra.mxu0 %v1423
      %1715 = vmatprep.subr.mxu0 0.0
      %1716 = vmatpush1.msra.mxu0 %v1422
      %1717 = vmatprep.subr.mxu0 0.0
      %1718 = vmatpush1.msra.mxu0 %v1421
      %1719 = vmatprep.subr.mxu0 0.0
      %1720 = vmatpush1.msra.mxu0 %v1420
      %1721 = vmatprep.subr.mxu0 0.0
      %1722 = vmatpush1.msra.mxu0 %v1419
      %1723 = vmatprep.subr.mxu0 0.0
      %1724 = vmatpush1.msra.mxu0 %v1418
      %1725 = vmatprep.subr.mxu0 0.0
      %1726 = vmatpush1.msra.mxu0 %v1417
      %1727 = vmatprep.subr.mxu0 0.0
      %1728 = vmatpush1.msra.mxu0 %v1416
      %1729 = vmatprep.subr.mxu0 0.0
      %1730 = vmatpush1.msra.mxu0 %v1415
      %1731 = vmatprep.subr.mxu0 0.0
      %1732 = vmatpush1.msra.mxu0 %v1414
      %1733 = vmatprep.subr.mxu0 0.0
      %1734 = vmatpush2.msra.mxu0 0.0
      %1735 = vmatprep.subr.mxu0 0.0
      %1736 = vmatpush2.msra.mxu0 0.0
      %1737 = vmatprep.subr.mxu0 0.0
      %1738 = vmatpush2.msra.mxu0 0.0
      %1739 = vmatprep.subr.mxu0 0.0
      %1740 = vmatpush2.msra.mxu0 0.0
      %1741 = vmatprep.subr.mxu0 0.0
      %1742 = vmatpush2.msra.mxu0 0.0
      %1743 = vmatprep.subr.mxu0 0.0
      %1744 = vmatpush2.msra.mxu0 0.0
      %1745 = vmatprep.subr.mxu0 0.0
      %1746 = vmatpush2.msra.mxu0 0.0
      %1747 = vmatprep.subr.mxu0 0.0
      %1748 = vmatpush2.msra.mxu0 0.0
      %1749 = vmatprep.subr.mxu0 0.0
      %1750 = vmatpush2.msra.mxu0 0.0
      %1751 = vmatprep.subr.mxu0 0.0
      %1752 = vmatpush2.msra.mxu0 0.0
      %1753 = vmatprep.subr.mxu0 0.0
      %1754 = vmatpush2.msra.mxu0 0.0
      %1755 = vmatprep.subr.mxu0 0.0
      %1756 = vmatpush2.msra.mxu0 0.0
      %1757 = vmatprep.subr.mxu0 0.0
      %1758 = vmatpush2.msra.mxu0 0.0
      %1759 = vmatprep.subr.mxu0 0.0
      %1760 = vmatpush2.msra.mxu0 0.0
      %1761 = vmatprep.subr.mxu0 0.0
      %1762 = vmatpush2.msra.mxu0 0.0
      %1763 = vmatprep.subr.mxu0 0.0
      %1764 = vmatpush2.msra.mxu0 0.0
      %1765 = vmatprep.mubr.f32.mxu0 0.0
      %1766 = vmatmul.mubr.f32.gmra.mxu0 %v1525
      %v1767 = vpop.f32.mrf.mxu0
      %v1768 = vadd.f32 %v1690, %v1767
      %v1769 = vpop.f32.mrf.mxu0
      %1770 = vmatprep.mubr.f32.mxu0 0.0
      %1771 = vmatmul.mubr.f32.gmra.mxu0 %v1528
      %v1772 = vpop.f32.mrf.mxu0
      %v1773 = vadd.f32 %v1695, %v1772
      %v1774 = vpop.f32.mrf.mxu0
      %1775 = vdwg.mxu0
      %v1776 = vld [vmem:[#allocation3 + $0x2] sm:$0xff]
      %v1777 = vld [vmem:[#allocation3 + $0xa] sm:$0x3]
      %s1778 = scalar_lea.vmem %s4, 176
      %v1779 = vld [vmem:[%s1778] sm:$0xff]
      %v1780 = vld [vmem:[%s1778 + $0x8] sm:$0xff]
      %v1781 = vld [vmem:[%s1778 + $0x10] sm:$0xff]
      %v1782 = vld [vmem:[%s1778 + $0x18] sm:$0xff]
      %v1783 = vld [vmem:[%s1778 + $0x20] sm:$0xff]
      %v1784 = vld [vmem:[%s1778 + $0x28] sm:$0xff]
      %v1785 = vld [vmem:[%s1778 + $0x30] sm:$0xff]
      %v1786 = vld [vmem:[%s1778 + $0x38] sm:$0xff]
      %v1787 = vld [vmem:[%s1778 + $0x40] sm:$0xff]
      %v1788 = vld [vmem:[%s1778 + $0x48] sm:$0xff]
      %v1789 = vld [vmem:[%s1778 + $0x50] sm:$0xf]
      %v1791 = vsel %vm1383, %v1776, 0
      %v1794 = vsel %vm1383, %v1777, 0
      %v1797 = vsel %vm1445, %v1789, 0
      %1799 = vmatprep.subr.mxu0 0.0
      %1800 = vmatpush1.msra.mxu0 0.0
      %1801 = vmatprep.subr.mxu0 0.0
      %1802 = vmatpush1.msra.mxu0 0.0
      %1803 = vmatprep.subr.mxu0 0.0
      %1804 = vmatpush1.msra.mxu0 0.0
      %1805 = vmatprep.subr.mxu0 0.0
      %1806 = vmatpush1.msra.mxu0 0.0
      %1807 = vmatprep.subr.mxu0 0.0
      %1808 = vmatpush1.msra.mxu0 0.0
      %1809 = vmatprep.subr.mxu0 0.0
      %1810 = vmatpush1.msra.mxu0 %v1797
      %1811 = vmatprep.subr.mxu0 0.0
      %1812 = vmatpush1.msra.mxu0 %v1788
      %1813 = vmatprep.subr.mxu0 0.0
      %1814 = vmatpush1.msra.mxu0 %v1787
      %1815 = vmatprep.subr.mxu0 0.0
      %1816 = vmatpush1.msra.mxu0 %v1786
      %1817 = vmatprep.subr.mxu0 0.0
      %1818 = vmatpush1.msra.mxu0 %v1785
      %1819 = vmatprep.subr.mxu0 0.0
      %1820 = vmatpush1.msra.mxu0 %v1784
      %1821 = vmatprep.subr.mxu0 0.0
      %1822 = vmatpush1.msra.mxu0 %v1783
      %1823 = vmatprep.subr.mxu0 0.0
      %1824 = vmatpush1.msra.mxu0 %v1782
      %1825 = vmatprep.subr.mxu0 0.0
      %1826 = vmatpush1.msra.mxu0 %v1781
      %1827 = vmatprep.subr.mxu0 0.0
      %1828 = vmatpush1.msra.mxu0 %v1780
      %1829 = vmatprep.subr.mxu0 0.0
      %1830 = vmatpush1.msra.mxu0 %v1779
      %1831 = vmatprep.subr.mxu0 0.0
      %1832 = vmatpush2.msra.mxu0 0.0
      %1833 = vmatprep.subr.mxu0 0.0
      %1834 = vmatpush2.msra.mxu0 0.0
      %1835 = vmatprep.subr.mxu0 0.0
      %1836 = vmatpush2.msra.mxu0 0.0
      %1837 = vmatprep.subr.mxu0 0.0
      %1838 = vmatpush2.msra.mxu0 0.0
      %1839 = vmatprep.subr.mxu0 0.0
      %1840 = vmatpush2.msra.mxu0 0.0
      %1841 = vmatprep.subr.mxu0 0.0
      %1842 = vmatpush2.msra.mxu0 0.0
      %1843 = vmatprep.subr.mxu0 0.0
      %1844 = vmatpush2.msra.mxu0 0.0
      %1845 = vmatprep.subr.mxu0 0.0
      %1846 = vmatpush2.msra.mxu0 0.0
      %1847 = vmatprep.subr.mxu0 0.0
      %1848 = vmatpush2.msra.mxu0 0.0
      %1849 = vmatprep.subr.mxu0 0.0
      %1850 = vmatpush2.msra.mxu0 0.0
      %1851 = vmatprep.subr.mxu0 0.0
      %1852 = vmatpush2.msra.mxu0 0.0
      %1853 = vmatprep.subr.mxu0 0.0
      %1854 = vmatpush2.msra.mxu0 0.0
      %1855 = vmatprep.subr.mxu0 0.0
      %1856 = vmatpush2.msra.mxu0 0.0
      %1857 = vmatprep.subr.mxu0 0.0
      %1858 = vmatpush2.msra.mxu0 0.0
      %1859 = vmatprep.subr.mxu0 0.0
      %1860 = vmatpush2.msra.mxu0 0.0
      %1861 = vmatprep.subr.mxu0 0.0
      %1862 = vmatpush2.msra.mxu0 0.0
      %1863 = vmatprep.mubr.f32.mxu0 0.0
      %1864 = vmatmul.mubr.f32.gmra.mxu0 %v1791
      %v1865 = vpop.f32.mrf.mxu0
      %v1866 = vadd.f32 0.0, %v1865
      %v1867 = vpop.f32.mrf.mxu0
      %1868 = vmatprep.mubr.f32.mxu0 0.0
      %1869 = vmatmul.mubr.f32.gmra.mxu0 %v1794
      %v1870 = vpop.f32.mrf.mxu0
      %v1871 = vadd.f32 0.0, %v1870
      %v1872 = vpop.f32.mrf.mxu0
      %1873 = vdwg.mxu0
      %v1874 = vadd.f32 %v1600, %v1866
      %v1875 = vadd.f32 %v1605, %v1871
      %s1876 = scalar_lea.vmem %s5, 176
      %v1877 = vld [vmem:[%s1876] sm:$0xff]
      %v1878 = vld [vmem:[%s1876 + $0x8] sm:$0xff]
      %v1879 = vld [vmem:[%s1876 + $0x10] sm:$0xff]
      %v1880 = vld [vmem:[%s1876 + $0x18] sm:$0xff]
      %v1881 = vld [vmem:[%s1876 + $0x20] sm:$0xff]
      %v1882 = vld [vmem:[%s1876 + $0x28] sm:$0xff]
      %v1883 = vld [vmem:[%s1876 + $0x30] sm:$0xff]
      %v1884 = vld [vmem:[%s1876 + $0x38] sm:$0xff]
      %v1885 = vld [vmem:[%s1876 + $0x40] sm:$0xff]
      %v1886 = vld [vmem:[%s1876 + $0x48] sm:$0xff]
      %v1887 = vld [vmem:[%s1876 + $0x50] sm:$0xf]
      %v1889 = vsel %vm1445, %v1887, 0
      %1891 = vmatprep.subr.mxu0 0.0
      %1892 = vmatpush1.msra.mxu0 0.0
      %1893 = vmatprep.subr.mxu0 0.0
      %1894 = vmatpush1.msra.mxu0 0.0
      %1895 = vmatprep.subr.mxu0 0.0
      %1896 = vmatpush1.msra.mxu0 0.0
      %1897 = vmatprep.subr.mxu0 0.0
      %1898 = vmatpush1.msra.mxu0 0.0
      %1899 = vmatprep.subr.mxu0 0.0
      %1900 = vmatpush1.msra.mxu0 0.0
      %1901 = vmatprep.subr.mxu0 0.0
      %1902 = vmatpush1.msra.mxu0 %v1889
      %1903 = vmatprep.subr.mxu0 0.0
      %1904 = vmatpush1.msra.mxu0 %v1886
      %1905 = vmatprep.subr.mxu0 0.0
      %1906 = vmatpush1.msra.mxu0 %v1885
      %1907 = vmatprep.subr.mxu0 0.0
      %1908 = vmatpush1.msra.mxu0 %v1884
      %1909 = vmatprep.subr.mxu0 0.0
      %1910 = vmatpush1.msra.mxu0 %v1883
      %1911 = vmatprep.subr.mxu0 0.0
      %1912 = vmatpush1.msra.mxu0 %v1882
      %1913 = vmatprep.subr.mxu0 0.0
      %1914 = vmatpush1.msra.mxu0 %v1881
      %1915 = vmatprep.subr.mxu0 0.0
      %1916 = vmatpush1.msra.mxu0 %v1880
      %1917 = vmatprep.subr.mxu0 0.0
      %1918 = vmatpush1.msra.mxu0 %v1879
      %1919 = vmatprep.subr.mxu0 0.0
      %1920 = vmatpush1.msra.mxu0 %v1878
      %1921 = vmatprep.subr.mxu0 0.0
      %1922 = vmatpush1.msra.mxu0 %v1877
      %1923 = vmatprep.subr.mxu0 0.0
      %1924 = vmatpush2.msra.mxu0 0.0
      %1925 = vmatprep.subr.mxu0 0.0
      %1926 = vmatpush2.msra.mxu0 0.0
      %1927 = vmatprep.subr.mxu0 0.0
      %1928 = vmatpush2.msra.mxu0 0.0
      %1929 = vmatprep.subr.mxu0 0.0
      %1930 = vmatpush2.msra.mxu0 0.0
      %1931 = vmatprep.subr.mxu0 0.0
      %1932 = vmatpush2.msra.mxu0 0.0
      %1933 = vmatprep.subr.mxu0 0.0
      %1934 = vmatpush2.msra.mxu0 0.0
      %1935 = vmatprep.subr.mxu0 0.0
      %1936 = vmatpush2.msra.mxu0 0.0
      %1937 = vmatprep.subr.mxu0 0.0
      %1938 = vmatpush2.msra.mxu0 0.0
      %1939 = vmatprep.subr.mxu0 0.0
      %1940 = vmatpush2.msra.mxu0 0.0
      %1941 = vmatprep.subr.mxu0 0.0
      %1942 = vmatpush2.msra.mxu0 0.0
      %1943 = vmatprep.subr.mxu0 0.0
      %1944 = vmatpush2.msra.mxu0 0.0
      %1945 = vmatprep.subr.mxu0 0.0
      %1946 = vmatpush2.msra.mxu0 0.0
      %1947 = vmatprep.subr.mxu0 0.0
      %1948 = vmatpush2.msra.mxu0 0.0
      %1949 = vmatprep.subr.mxu0 0.0
      %1950 = vmatpush2.msra.mxu0 0.0
      %1951 = vmatprep.subr.mxu0 0.0
      %1952 = vmatpush2.msra.mxu0 0.0
      %1953 = vmatprep.subr.mxu0 0.0
      %1954 = vmatpush2.msra.mxu0 0.0
      %1955 = vmatprep.mubr.f32.mxu0 0.0
      %1956 = vmatmul.mubr.f32.gmra.mxu0 %v1791
      %v1957 = vpop.f32.mrf.mxu0
      %v1958 = vadd.f32 0.0, %v1957
      %v1959 = vpop.f32.mrf.mxu0
      %1960 = vmatprep.mubr.f32.mxu0 0.0
      %1961 = vmatmul.mubr.f32.gmra.mxu0 %v1794
      %v1962 = vpop.f32.mrf.mxu0
      %v1963 = vadd.f32 0.0, %v1962
      %v1964 = vpop.f32.mrf.mxu0
      %1965 = vdwg.mxu0
      %v1966 = vadd.f32 %v1768, %v1958
      %v1967 = vadd.f32 %v1773, %v1963
      %v1968 = vld [vmem:[#allocation3 + $0x3] sm:$0xff]
      %v1969 = vld [vmem:[#allocation3 + $0xb] sm:$0x3]
      %s1970 = scalar_lea.vmem %s4, 264
      %v1971 = vld [vmem:[%s1970] sm:$0xff]
      %v1972 = vld [vmem:[%s1970 + $0x8] sm:$0xff]
      %v1973 = vld [vmem:[%s1970 + $0x10] sm:$0xff]
      %v1974 = vld [vmem:[%s1970 + $0x18] sm:$0xff]
      %v1975 = vld [vmem:[%s1970 + $0x20] sm:$0xff]
      %v1976 = vld [vmem:[%s1970 + $0x28] sm:$0xff]
      %v1977 = vld [vmem:[%s1970 + $0x30] sm:$0xff]
      %v1978 = vld [vmem:[%s1970 + $0x38] sm:$0xff]
      %v1979 = vld [vmem:[%s1970 + $0x40] sm:$0xff]
      %v1980 = vld [vmem:[%s1970 + $0x48] sm:$0xff]
      %v1981 = vld [vmem:[%s1970 + $0x50] sm:$0xf]
      %v1983 = vsel %vm1383, %v1968, 0
      %v1986 = vsel %vm1383, %v1969, 0
      %v1989 = vsel %vm1445, %v1981, 0
      %1991 = vmatprep.subr.mxu0 0.0
      %1992 = vmatpush1.msra.mxu0 0.0
      %1993 = vmatprep.subr.mxu0 0.0
      %1994 = vmatpush1.msra.mxu0 0.0
      %1995 = vmatprep.subr.mxu0 0.0
      %1996 = vmatpush1.msra.mxu0 0.0
      %1997 = vmatprep.subr.mxu0 0.0
      %1998 = vmatpush1.msra.mxu0 0.0
      %1999 = vmatprep.subr.mxu0 0.0
      %2000 = vmatpush1.msra.mxu0 0.0
      %2001 = vmatprep.subr.mxu0 0.0
      %2002 = vmatpush1.msra.mxu0 %v1989
      %2003 = vmatprep.subr.mxu0 0.0
      %2004 = vmatpush1.msra.mxu0 %v1980
      %2005 = vmatprep.subr.mxu0 0.0
      %2006 = vmatpush1.msra.mxu0 %v1979
      %2007 = vmatprep.subr.mxu0 0.0
      %2008 = vmatpush1.msra.mxu0 %v1978
      %2009 = vmatprep.subr.mxu0 0.0
      %2010 = vmatpush1.msra.mxu0 %v1977
      %2011 = vmatprep.subr.mxu0 0.0
      %2012 = vmatpush1.msra.mxu0 %v1976
      %2013 = vmatprep.subr.mxu0 0.0
      %2014 = vmatpush1.msra.mxu0 %v1975
      %2015 = vmatprep.subr.mxu0 0.0
      %2016 = vmatpush1.msra.mxu0 %v1974
      %2017 = vmatprep.subr.mxu0 0.0
      %2018 = vmatpush1.msra.mxu0 %v1973
      %2019 = vmatprep.subr.mxu0 0.0
      %2020 = vmatpush1.msra.mxu0 %v1972
      %2021 = vmatprep.subr.mxu0 0.0
      %2022 = vmatpush1.msra.mxu0 %v1971
      %2023 = vmatprep.subr.mxu0 0.0
      %2024 = vmatpush2.msra.mxu0 0.0
      %2025 = vmatprep.subr.mxu0 0.0
      %2026 = vmatpush2.msra.mxu0 0.0
      %2027 = vmatprep.subr.mxu0 0.0
      %2028 = vmatpush2.msra.mxu0 0.0
      %2029 = vmatprep.subr.mxu0 0.0
      %2030 = vmatpush2.msra.mxu0 0.0
      %2031 = vmatprep.subr.mxu0 0.0
      %2032 = vmatpush2.msra.mxu0 0.0
      %2033 = vmatprep.subr.mxu0 0.0
      %2034 = vmatpush2.msra.mxu0 0.0
      %2035 = vmatprep.subr.mxu0 0.0
      %2036 = vmatpush2.msra.mxu0 0.0
      %2037 = vmatprep.subr.mxu0 0.0
      %2038 = vmatpush2.msra.mxu0 0.0
      %2039 = vmatprep.subr.mxu0 0.0
      %2040 = vmatpush2.msra.mxu0 0.0
      %2041 = vmatprep.subr.mxu0 0.0
      %2042 = vmatpush2.msra.mxu0 0.0
      %2043 = vmatprep.subr.mxu0 0.0
      %2044 = vmatpush2.msra.mxu0 0.0
      %2045 = vmatprep.subr.mxu0 0.0
      %2046 = vmatpush2.msra.mxu0 0.0
      %2047 = vmatprep.subr.mxu0 0.0
      %2048 = vmatpush2.msra.mxu0 0.0
      %2049 = vmatprep.subr.mxu0 0.0
      %2050 = vmatpush2.msra.mxu0 0.0
      %2051 = vmatprep.subr.mxu0 0.0
      %2052 = vmatpush2.msra.mxu0 0.0
      %2053 = vmatprep.subr.mxu0 0.0
      %2054 = vmatpush2.msra.mxu0 0.0
      %2055 = vmatprep.mubr.f32.mxu0 0.0
      %2056 = vmatmul.mubr.f32.gmra.mxu0 %v1983
      %v2057 = vpop.f32.mrf.mxu0
      %v2058 = vadd.f32 0.0, %v2057
      %v2059 = vpop.f32.mrf.mxu0
      %2060 = vmatprep.mubr.f32.mxu0 0.0
      %2061 = vmatmul.mubr.f32.gmra.mxu0 %v1986
      %v2062 = vpop.f32.mrf.mxu0
      %v2063 = vadd.f32 0.0, %v2062
      %v2064 = vpop.f32.mrf.mxu0
      %2065 = vdwg.mxu0
      %v2066 = vadd.f32 %v1874, %v2058
      %v2067 = vadd.f32 %v1875, %v2063
      %s2068 = scalar_lea.vmem %s5, 264
      %v2069 = vld [vmem:[%s2068] sm:$0xff]
      %v2070 = vld [vmem:[%s2068 + $0x8] sm:$0xff]
      %v2071 = vld [vmem:[%s2068 + $0x10] sm:$0xff]
      %v2072 = vld [vmem:[%s2068 + $0x18] sm:$0xff]
      %v2073 = vld [vmem:[%s2068 + $0x20] sm:$0xff]
      %v2074 = vld [vmem:[%s2068 + $0x28] sm:$0xff]
      %v2075 = vld [vmem:[%s2068 + $0x30] sm:$0xff]
      %v2076 = vld [vmem:[%s2068 + $0x38] sm:$0xff]
      %v2077 = vld [vmem:[%s2068 + $0x40] sm:$0xff]
      %v2078 = vld [vmem:[%s2068 + $0x48] sm:$0xff]
      %v2079 = vld [vmem:[%s2068 + $0x50] sm:$0xf]
      %v2081 = vsel %vm1445, %v2079, 0
      %2083 = vmatprep.subr.mxu0 0.0
      %2084 = vmatpush1.msra.mxu0 0.0
      %2085 = vmatprep.subr.mxu0 0.0
      %2086 = vmatpush1.msra.mxu0 0.0
      %2087 = vmatprep.subr.mxu0 0.0
      %2088 = vmatpush1.msra.mxu0 0.0
      %2089 = vmatprep.subr.mxu0 0.0
      %2090 = vmatpush1.msra.mxu0 0.0
      %2091 = vmatprep.subr.mxu0 0.0
      %2092 = vmatpush1.msra.mxu0 0.0
      %2093 = vmatprep.subr.mxu0 0.0
      %2094 = vmatpush1.msra.mxu0 %v2081
      %2095 = vmatprep.subr.mxu0 0.0
      %2096 = vmatpush1.msra.mxu0 %v2078
      %2097 = vmatprep.subr.mxu0 0.0
      %2098 = vmatpush1.msra.mxu0 %v2077
      %2099 = vmatprep.subr.mxu0 0.0
      %2100 = vmatpush1.msra.mxu0 %v2076
      %2101 = vmatprep.subr.mxu0 0.0
      %2102 = vmatpush1.msra.mxu0 %v2075
      %2103 = vmatprep.subr.mxu0 0.0
      %2104 = vmatpush1.msra.mxu0 %v2074
      %2105 = vmatprep.subr.mxu0 0.0
      %2106 = vmatpush1.msra.mxu0 %v2073
      %2107 = vmatprep.subr.mxu0 0.0
      %2108 = vmatpush1.msra.mxu0 %v2072
      %2109 = vmatprep.subr.mxu0 0.0
      %2110 = vmatpush1.msra.mxu0 %v2071
      %2111 = vmatprep.subr.mxu0 0.0
      %2112 = vmatpush1.msra.mxu0 %v2070
      %2113 = vmatprep.subr.mxu0 0.0
      %2114 = vmatpush1.msra.mxu0 %v2069
      %2115 = vmatprep.subr.mxu0 0.0
      %2116 = vmatpush2.msra.mxu0 0.0
      %2117 = vmatprep.subr.mxu0 0.0
      %2118 = vmatpush2.msra.mxu0 0.0
      %2119 = vmatprep.subr.mxu0 0.0
      %2120 = vmatpush2.msra.mxu0 0.0
      %2121 = vmatprep.subr.mxu0 0.0
      %2122 = vmatpush2.msra.mxu0 0.0
      %2123 = vmatprep.subr.mxu0 0.0
      %2124 = vmatpush2.msra.mxu0 0.0
      %2125 = vmatprep.subr.mxu0 0.0
      %2126 = vmatpush2.msra.mxu0 0.0
      %2127 = vmatprep.subr.mxu0 0.0
      %2128 = vmatpush2.msra.mxu0 0.0
      %2129 = vmatprep.subr.mxu0 0.0
      %2130 = vmatpush2.msra.mxu0 0.0
      %2131 = vmatprep.subr.mxu0 0.0
      %2132 = vmatpush2.msra.mxu0 0.0
      %2133 = vmatprep.subr.mxu0 0.0
      %2134 = vmatpush2.msra.mxu0 0.0
      %2135 = vmatprep.subr.mxu0 0.0
      %2136 = vmatpush2.msra.mxu0 0.0
      %2137 = vmatprep.subr.mxu0 0.0
      %2138 = vmatpush2.msra.mxu0 0.0
      %2139 = vmatprep.subr.mxu0 0.0
      %2140 = vmatpush2.msra.mxu0 0.0
      %2141 = vmatprep.subr.mxu0 0.0
      %2142 = vmatpush2.msra.mxu0 0.0
      %2143 = vmatprep.subr.mxu0 0.0
      %2144 = vmatpush2.msra.mxu0 0.0
      %2145 = vmatprep.subr.mxu0 0.0
      %2146 = vmatpush2.msra.mxu0 0.0
      %2147 = vmatprep.mubr.f32.mxu0 0.0
      %2148 = vmatmul.mubr.f32.gmra.mxu0 %v1983
      %v2149 = vpop.f32.mrf.mxu0
      %v2150 = vadd.f32 0.0, %v2149
      %v2151 = vpop.f32.mrf.mxu0
      %2152 = vmatprep.mubr.f32.mxu0 0.0
      %2153 = vmatmul.mubr.f32.gmra.mxu0 %v1986
      %v2154 = vpop.f32.mrf.mxu0
      %v2155 = vadd.f32 0.0, %v2154
      %v2156 = vpop.f32.mrf.mxu0
      %2157 = vdwg.mxu0
      %v2158 = vadd.f32 %v1966, %v2150
      %v2159 = vadd.f32 %v1967, %v2155
      %v2160 = vld [vmem:[#allocation3 + $0x4] sm:$0xff]
      %v2161 = vld [vmem:[#allocation3 + $0xc] sm:$0x3]
      %s2162 = scalar_lea.vmem %s4, 352
      %v2163 = vld [vmem:[%s2162] sm:$0xff]
      %v2164 = vld [vmem:[%s2162 + $0x8] sm:$0xff]
      %v2165 = vld [vmem:[%s2162 + $0x10] sm:$0xff]
      %v2166 = vld [vmem:[%s2162 + $0x18] sm:$0xff]
      %v2167 = vld [vmem:[%s2162 + $0x20] sm:$0xff]
      %v2168 = vld [vmem:[%s2162 + $0x28] sm:$0xff]
      %v2169 = vld [vmem:[%s2162 + $0x30] sm:$0xff]
      %v2170 = vld [vmem:[%s2162 + $0x38] sm:$0xff]
      %v2171 = vld [vmem:[%s2162 + $0x40] sm:$0xff]
      %v2172 = vld [vmem:[%s2162 + $0x48] sm:$0xff]
      %v2173 = vld [vmem:[%s2162 + $0x50] sm:$0xf]
      %v2175 = vsel %vm1383, %v2160, 0
      %v2178 = vsel %vm1383, %v2161, 0
      %v2181 = vsel %vm1445, %v2173, 0
      %2183 = vmatprep.subr.mxu0 0.0
      %2184 = vmatpush1.msra.mxu0 0.0
      %2185 = vmatprep.subr.mxu0 0.0
      %2186 = vmatpush1.msra.mxu0 0.0
      %2187 = vmatprep.subr.mxu0 0.0
      %2188 = vmatpush1.msra.mxu0 0.0
      %2189 = vmatprep.subr.mxu0 0.0
      %2190 = vmatpush1.msra.mxu0 0.0
      %2191 = vmatprep.subr.mxu0 0.0
      %2192 = vmatpush1.msra.mxu0 0.0
      %2193 = vmatprep.subr.mxu0 0.0
      %2194 = vmatpush1.msra.mxu0 %v2181
      %2195 = vmatprep.subr.mxu0 0.0
      %2196 = vmatpush1.msra.mxu0 %v2172
      %2197 = vmatprep.subr.mxu0 0.0
      %2198 = vmatpush1.msra.mxu0 %v2171
      %2199 = vmatprep.subr.mxu0 0.0
      %2200 = vmatpush1.msra.mxu0 %v2170
      %2201 = vmatprep.subr.mxu0 0.0
      %2202 = vmatpush1.msra.mxu0 %v2169
      %2203 = vmatprep.subr.mxu0 0.0
      %2204 = vmatpush1.msra.mxu0 %v2168
      %2205 = vmatprep.subr.mxu0 0.0
      %2206 = vmatpush1.msra.mxu0 %v2167
      %2207 = vmatprep.subr.mxu0 0.0
      %2208 = vmatpush1.msra.mxu0 %v2166
      %2209 = vmatprep.subr.mxu0 0.0
      %2210 = vmatpush1.msra.mxu0 %v2165
      %2211 = vmatprep.subr.mxu0 0.0
      %2212 = vmatpush1.msra.mxu0 %v2164
      %2213 = vmatprep.subr.mxu0 0.0
      %2214 = vmatpush1.msra.mxu0 %v2163
      %2215 = vmatprep.subr.mxu0 0.0
      %2216 = vmatpush2.msra.mxu0 0.0
      %2217 = vmatprep.subr.mxu0 0.0
      %2218 = vmatpush2.msra.mxu0 0.0
      %2219 = vmatprep.subr.mxu0 0.0
      %2220 = vmatpush2.msra.mxu0 0.0
      %2221 = vmatprep.subr.mxu0 0.0
      %2222 = vmatpush2.msra.mxu0 0.0
      %2223 = vmatprep.subr.mxu0 0.0
      %2224 = vmatpush2.msra.mxu0 0.0
      %2225 = vmatprep.subr.mxu0 0.0
      %2226 = vmatpush2.msra.mxu0 0.0
      %2227 = vmatprep.subr.mxu0 0.0
      %2228 = vmatpush2.msra.mxu0 0.0
      %2229 = vmatprep.subr.mxu0 0.0
      %2230 = vmatpush2.msra.mxu0 0.0
      %2231 = vmatprep.subr.mxu0 0.0
      %2232 = vmatpush2.msra.mxu0 0.0
      %2233 = vmatprep.subr.mxu0 0.0
      %2234 = vmatpush2.msra.mxu0 0.0
      %2235 = vmatprep.subr.mxu0 0.0
      %2236 = vmatpush2.msra.mxu0 0.0
      %2237 = vmatprep.subr.mxu0 0.0
      %2238 = vmatpush2.msra.mxu0 0.0
      %2239 = vmatprep.subr.mxu0 0.0
      %2240 = vmatpush2.msra.mxu0 0.0
      %2241 = vmatprep.subr.mxu0 0.0
      %2242 = vmatpush2.msra.mxu0 0.0
      %2243 = vmatprep.subr.mxu0 0.0
      %2244 = vmatpush2.msra.mxu0 0.0
      %2245 = vmatprep.subr.mxu0 0.0
      %2246 = vmatpush2.msra.mxu0 0.0
      %2247 = vmatprep.mubr.f32.mxu0 0.0
      %2248 = vmatmul.mubr.f32.gmra.mxu0 %v2175
      %v2249 = vpop.f32.mrf.mxu0
      %v2250 = vadd.f32 0.0, %v2249
      %v2251 = vpop.f32.mrf.mxu0
      %2252 = vmatprep.mubr.f32.mxu0 0.0
      %2253 = vmatmul.mubr.f32.gmra.mxu0 %v2178
      %v2254 = vpop.f32.mrf.mxu0
      %v2255 = vadd.f32 0.0, %v2254
      %v2256 = vpop.f32.mrf.mxu0
      %2257 = vdwg.mxu0
      %v2258 = vadd.f32 %v2066, %v2250
      %v2259 = vadd.f32 %v2067, %v2255
      %s2260 = scalar_lea.vmem %s5, 352
      %v2261 = vld [vmem:[%s2260] sm:$0xff]
      %v2262 = vld [vmem:[%s2260 + $0x8] sm:$0xff]
      %v2263 = vld [vmem:[%s2260 + $0x10] sm:$0xff]
      %v2264 = vld [vmem:[%s2260 + $0x18] sm:$0xff]
      %v2265 = vld [vmem:[%s2260 + $0x20] sm:$0xff]
      %v2266 = vld [vmem:[%s2260 + $0x28] sm:$0xff]
      %v2267 = vld [vmem:[%s2260 + $0x30] sm:$0xff]
      %v2268 = vld [vmem:[%s2260 + $0x38] sm:$0xff]
      %v2269 = vld [vmem:[%s2260 + $0x40] sm:$0xff]
      %v2270 = vld [vmem:[%s2260 + $0x48] sm:$0xff]
      %v2271 = vld [vmem:[%s2260 + $0x50] sm:$0xf]
      %v2273 = vsel %vm1445, %v2271, 0
      %2275 = vmatprep.subr.mxu0 0.0
      %2276 = vmatpush1.msra.mxu0 0.0
      %2277 = vmatprep.subr.mxu0 0.0
      %2278 = vmatpush1.msra.mxu0 0.0
      %2279 = vmatprep.subr.mxu0 0.0
      %2280 = vmatpush1.msra.mxu0 0.0
      %2281 = vmatprep.subr.mxu0 0.0
      %2282 = vmatpush1.msra.mxu0 0.0
      %2283 = vmatprep.subr.mxu0 0.0
      %2284 = vmatpush1.msra.mxu0 0.0
      %2285 = vmatprep.subr.mxu0 0.0
      %2286 = vmatpush1.msra.mxu0 %v2273
      %2287 = vmatprep.subr.mxu0 0.0
      %2288 = vmatpush1.msra.mxu0 %v2270
      %2289 = vmatprep.subr.mxu0 0.0
      %2290 = vmatpush1.msra.mxu0 %v2269
      %2291 = vmatprep.subr.mxu0 0.0
      %2292 = vmatpush1.msra.mxu0 %v2268
      %2293 = vmatprep.subr.mxu0 0.0
      %2294 = vmatpush1.msra.mxu0 %v2267
      %2295 = vmatprep.subr.mxu0 0.0
      %2296 = vmatpush1.msra.mxu0 %v2266
      %2297 = vmatprep.subr.mxu0 0.0
      %2298 = vmatpush1.msra.mxu0 %v2265
      %2299 = vmatprep.subr.mxu0 0.0
      %2300 = vmatpush1.msra.mxu0 %v2264
      %2301 = vmatprep.subr.mxu0 0.0
      %2302 = vmatpush1.msra.mxu0 %v2263
      %2303 = vmatprep.subr.mxu0 0.0
      %2304 = vmatpush1.msra.mxu0 %v2262
      %2305 = vmatprep.subr.mxu0 0.0
      %2306 = vmatpush1.msra.mxu0 %v2261
      %2307 = vmatprep.subr.mxu0 0.0
      %2308 = vmatpush2.msra.mxu0 0.0
      %2309 = vmatprep.subr.mxu0 0.0
      %2310 = vmatpush2.msra.mxu0 0.0
      %2311 = vmatprep.subr.mxu0 0.0
      %2312 = vmatpush2.msra.mxu0 0.0
      %2313 = vmatprep.subr.mxu0 0.0
      %2314 = vmatpush2.msra.mxu0 0.0
      %2315 = vmatprep.subr.mxu0 0.0
      %2316 = vmatpush2.msra.mxu0 0.0
      %2317 = vmatprep.subr.mxu0 0.0
      %2318 = vmatpush2.msra.mxu0 0.0
      %2319 = vmatprep.subr.mxu0 0.0
      %2320 = vmatpush2.msra.mxu0 0.0
      %2321 = vmatprep.subr.mxu0 0.0
      %2322 = vmatpush2.msra.mxu0 0.0
      %2323 = vmatprep.subr.mxu0 0.0
      %2324 = vmatpush2.msra.mxu0 0.0
      %2325 = vmatprep.subr.mxu0 0.0
      %2326 = vmatpush2.msra.mxu0 0.0
      %2327 = vmatprep.subr.mxu0 0.0
      %2328 = vmatpush2.msra.mxu0 0.0
      %2329 = vmatprep.subr.mxu0 0.0
      %2330 = vmatpush2.msra.mxu0 0.0
      %2331 = vmatprep.subr.mxu0 0.0
      %2332 = vmatpush2.msra.mxu0 0.0
      %2333 = vmatprep.subr.mxu0 0.0
      %2334 = vmatpush2.msra.mxu0 0.0
      %2335 = vmatprep.subr.mxu0 0.0
      %2336 = vmatpush2.msra.mxu0 0.0
      %2337 = vmatprep.subr.mxu0 0.0
      %2338 = vmatpush2.msra.mxu0 0.0
      %2339 = vmatprep.mubr.f32.mxu0 0.0
      %2340 = vmatmul.mubr.f32.gmra.mxu0 %v2175
      %v2341 = vpop.f32.mrf.mxu0
      %v2342 = vadd.f32 0.0, %v2341
      %v2343 = vpop.f32.mrf.mxu0
      %2344 = vmatprep.mubr.f32.mxu0 0.0
      %2345 = vmatmul.mubr.f32.gmra.mxu0 %v2178
      %v2346 = vpop.f32.mrf.mxu0
      %v2347 = vadd.f32 0.0, %v2346
      %v2348 = vpop.f32.mrf.mxu0
      %2349 = vdwg.mxu0
      %v2350 = vadd.f32 %v2158, %v2342
      %v2351 = vadd.f32 %v2159, %v2347
      %v2352 = vld [vmem:[%s6] sm:$0x1]
      %v2354 = vlaneseq
      %v2355 = vshrl.u32 %v2354, 7
      %v2356 = vsub.s32 0, %v2355
      %v2357 = vrot.slane %v2352, %v2356
      %v2359 = vadd.f32 %v2258, %v2357
      %v2360 = vadd.f32 %v2259, %v2357
      %v2361 = vadd.f32 %v2350, %v2357
      %v2362 = vadd.f32 %v2351, %v2357
      %v2363 = vmax.f32 %v2359, %v2361
      %v2364 = vmax.f32 %v2360, %v2362
      %v2365 = vmax.f32 %v2363, 0.0
      %v2366 = vmax.f32 %v2364, 0.0
      %vm2367 = vcmask 654336
      %2368 = vst.msk [vmem:[#allocation4] sm:$0xff] %vm2367, %v2365
      %vm2369 = vcmask 648192
      %2370 = vst.msk [vmem:[#allocation4 + $0x8] sm:$0x3] %vm2369, %v2366
      %v2371 = vld [vmem:[#allocation4] ss:$2 sm:$0x1f]
      %s2372 = scalar_lea.vmem [#allocation4], 1
      %v2373 = vld [vmem:[%s2372] ss:$2 sm:$0x1f]
      %v2374 = vmax.f32 %v2371, %v2373
      %vm2375 = vcmask 651264
      %2376 = vst.msk [vmem:[%s276] sm:$0x1f] %vm2375, %v2374
      %p2377 = scmp.lt.s32.totalorder %s18, 1
      %s2378 = scalar_select %p2377, %s18, 1
      %s2379 = smul.addr %s2378, 8
      %s2380 = scalar_lea.vmem %s7, %s2379
      // Predicated region
      $region49: #{net_forward.2} parent=47 // pred_check
        %p2381 = pneg %p188
      $region50: #{net_forward.2} parent=47 // pred_check_branch
        %2383 = sbr.rel (%p2381) target = $region52
      $region51: #{net_forward.2} parent=47 // pred_region
        _
      $region52: #{net_forward.2} parent=47 // pred_fallthru
        _
    $region48: #{net_forward.2} parent=5 // pred_fallthru
      _
    %p2384 = scmp.le.s32.totalorder 2, %s13
    // Predicated region
    $region53: #{net_forward.2} parent=5 // pred_check
      %p2385 = pneg %p2384
    $region54: #{net_forward.2} parent=5 // pred_check_branch
      %2387 = sbr.rel (%p2385) target = $region56
    $region55: #{net_forward.2} parent=5 // pred_region
      %s2388 = ssub.s32 %s13, 2
      // Predicated region
      $region57: #{net_forward.2} parent=55 // pred_check
        %p2389 = pneg %p194
      $region58: #{net_forward.2} parent=55 // pred_check_branch
        %2391 = sbr.rel (%p2389) target = $region60
      $region59: #{net_forward.2} parent=55 // pred_region
        %p2392 = scmp.lt.s32.totalorder %s19, 1
        %s2393 = scalar_select %p2392, %s19, 1
        %s2394 = smul.addr %s2393, 8
        %s2395 = scalar_lea.vmem %s7, %s2394
      $region60: #{net_forward.2} parent=55 // pred_fallthru
        _
    $region56: #{net_forward.2} parent=5 // pred_fallthru
      _
  $region6: #{net_forward.2} parent=0 // loop_footer
    %s17 = sadd.s32 1, %s13
  $region7: #{net_forward.2} parent=0 // loop_footer_branch
    %12 = sbr.rel target = $region3
  $region8: #{net_forward.2} parent=0 // loop_exit
    _

</llo_original>
